<compile_context>
chip_gen: v7x
topology: tpu7x:2x2x1
jax: 0.10.0
libtpu: 0.0.40
codegen_flags: <defaults>
</compile_context>

<pallas_src>
import functools

import jax
import jax.numpy as jnp
from jax.experimental import pallas as pl
from jax.experimental.pallas import tpu as pltpu


def _rk4_kernel(dt_ref, x_ref, w_ref, b_ref, o_ref, *, nsub, compute_dtype):
    dt = dt_ref[0, 0]                       # f32 scalar from SMEM
    w = w_ref[...]                          # [D, D] bf16 (resident MXU weights)
    b = b_ref[...]                          # [1, D] f32 bias row (not broadcast)

    half_dt = (dt * 0.5).astype(compute_dtype)
    full_dt = dt.astype(compute_dtype)
    sixth_dt = dt * (1.0 / 6.0)             # f32, only touches the f32 accumulator

    def f(z):
        # inner model forward: tanh(z @ W + b)
        # bf16 MXU operands, f32 accumulation; tanh in `compute_dtype` (bf16 on
        # v6e/v7x -> 2x EUP rate and directly the next matmul's LHS dtype).
        zw = jnp.dot(z.astype(jnp.bfloat16), w,
                     preferred_element_type=jnp.float32)
        return jnp.tanh((zw + b).astype(compute_dtype))

    tb = x_ref.shape[0]
    sub = tb // nsub
    for i in range(nsub):                   # independent sub-tiles -> MXU/EUP overlap
        sl = slice(i * sub, (i + 1) * sub)
        x32 = x_ref[sl, :].astype(jnp.float32)   # exact identity part of the update
        xc = x32.astype(compute_dtype)           # stage-input base in compute dtype

        # Running-accumulator RK4: acc = x + dt/6*(f0 + 2*f1 + 2*f2 + f3).
        # Scaled stage values are reused for both the stage input and acc update.
        f_cur = f(xc)                            # f0
        scaled = half_dt * f_cur                 # (dt/2) * f0
        acc = x32 + (1.0 / 3.0) * scaled         # + dt/6 * f0
        f_cur = f(xc + scaled)                   # f1
        scaled = half_dt * f_cur                 # (dt/2) * f1
        acc = acc + (2.0 / 3.0) * scaled         # + dt/3 * f1
        f_cur = f(xc + scaled)                   # f2
        scaled = full_dt * f_cur                 # dt * f2
        acc = acc + (1.0 / 3.0) * scaled         # + dt/3 * f2
        f_cur = f(xc + scaled)                   # f3
        acc = acc + sixth_dt * f_cur             # + dt/6 * f3

        o_ref[sl, :] = acc.astype(o_ref.dtype)


def _chip_flags():
    """(elementwise_bf16, multi_tensorcore) from the local device kind."""
    try:
        kind = jax.devices()[0].device_kind.lower()
    except Exception:
        kind = ""
    elementwise_bf16 = "v5" not in kind          # v5e has no bf16 VPU/EUP
    multi_tc = ("v7" in kind) or ("7x" in kind)  # v7x: 2 TensorCores per chip
    return elementwise_bf16, multi_tc


def _pick_tb(batch, d, itemsize, *, multi_tc, budget=24 << 20):
    """Largest batch tile that divides B, is a multiple of 8 and fits VMEM.
    Only v7x (2 TensorCores) keeps the '>= 2 grid steps' constraint; on the
    single-TC chips the grid is a serial loop, so one big step is best."""
    def fits(t):
        tiles = 2 * 2 * t * d * itemsize          # double-buffered in + out tiles
        resident = 2 * (d * d * 2 + d * 4)        # bf16 W + f32 bias (2 bufs)
        return 2 * (tiles + resident) <= budget
    cands = [t for t in range(min(batch, 1024), 7, -8)
             if batch % t == 0 and fits(t)]
    if not cands:
        return batch                              # full-dim block is always legal
    if multi_tc:
        for t in cands:                           # descending
            if batch // t >= 2:
                return t
    return cands[0]


def _pick_nsub(tb):
    """Split the batch tile into <=128-row sub-tiles (>=2 when possible) so
    the serial MXU->EUP->VPU stage chains of different sub-tiles overlap."""
    for s in (128, 64, 32, 16, 8):
        if tb % s == 0 and tb // s >= 2:
            return tb // s
    return 1


def _build_call(B, D, tb, nsub, out_dtype, compute_dtype, vmem_limit, itemsize):
    kernel = functools.partial(_rk4_kernel, nsub=nsub, compute_dtype=compute_dtype)
    cost = pl.CostEstimate(
        flops=8 * B * D * D,                       # 4 matmuls of [B,D] x [D,D]
        transcendentals=4 * B * D,                 # 4 tanh evaluations
        bytes_accessed=2 * B * D * itemsize + D * D * 2 + D * 4)
    return pl.pallas_call(
        kernel,
        out_shape=jax.ShapeDtypeStruct((B, D), out_dtype),
        grid_spec=pltpu.PrefetchScalarGridSpec(
            num_scalar_prefetch=0,
            grid=(B // tb,),
            in_specs=[
                pl.BlockSpec((1, 1), lambda i: (0, 0),
                             memory_space=pltpu.SMEM),      # dt scalar
                pl.BlockSpec((tb, D), lambda i: (i, 0)),    # x batch tile
                pl.BlockSpec((D, D), lambda i: (0, 0)),     # W (resident)
                pl.BlockSpec((1, D), lambda i: (0, 0)),     # b (resident)
            ],
            out_specs=pl.BlockSpec((tb, D), lambda i: (i, 0)),
        ),
        compiler_params=pltpu.CompilerParams(
            dimension_semantics=("parallel",),
            vmem_limit_bytes=vmem_limit),
        cost_estimate=cost,
    )


def rk4_forward(x, t, dt, w, b):
    """One RK4 step of the dense-tanh vector field. `t` is unused (the PyTorch
    reference never reads it)."""
    del t
    B, D = x.shape
    elementwise_bf16, multi_tc = _chip_flags()
    compute_dtype = jnp.bfloat16 if elementwise_bf16 else jnp.float32

    tb = _pick_tb(B, D, x.dtype.itemsize, multi_tc=multi_tc)
    nsub = _pick_nsub(tb)

    # VMEM: double-buffered in/out tiles, double-buffered resident W/b, plus
    # headroom for live f32/bf16 stage values & spill scratch; no 32 MiB floor.
    need = 2 * 2 * tb * D * x.dtype.itemsize
    need += 2 * (D * D * 2 + D * 4)
    need += 6 * (tb // nsub) * D * 4
    vmem_limit = min(max(2 * need, 8 << 20), 64 << 20)

    dt_arr = jnp.asarray(dt, jnp.float32).reshape(1, 1)
    w_bf16 = w.astype(jnp.bfloat16)                 # cast once, outside the kernel
    b_f32 = b.astype(jnp.float32).reshape(1, D)

    call = _build_call(B, D, tb, nsub, x.dtype, compute_dtype, vmem_limit,
                       x.dtype.itemsize)
    return call(dt_arr, x, w_bf16, b_f32)


def rk4_reference(x, t, dt, w, b):
    del t
    x = x.astype(jnp.float32)

    def f(z):
        return jnp.tanh(z @ w.astype(jnp.float32) + b.astype(jnp.float32))

    f0 = f(x)
    f1 = f(x + dt / 2.0 * f0)
    f2 = f(x + dt / 2.0 * f1)
    f3 = f(x + dt * f2)
    return x + dt / 6.0 * (f0 + 2.0 * (f1 + f2) + f3)


if __name__ == "__main__":
    key = jax.random.PRNGKey(0)
    kx, kw, kb = jax.random.split(key, 3)

    # Enough rows to exercise the sub-tile interleave and (on v7x) a 2-step
    # parallel grid; still tiny (512x128 f32 = 256 KiB).
    B, D = 512, 128
    x = jax.random.normal(kx, (B, D), dtype=jnp.float32)
    # deterministic "model" parameters (synthetic init, not a checkpoint)
    w = 0.1 * jax.random.normal(kw, (D, D), dtype=jnp.float32)
    b = 0.1 * jax.random.normal(kb, (D,), dtype=jnp.float32)
    t = jnp.float32(0.0)              # unused, as in the PyTorch module
    dt = jnp.float32(0.05)

    out = rk4_forward(x, t, dt, w, b)
    out = jax.block_until_ready(out)

    ref = rk4_reference(x, t, dt, w, b)
    assert out.shape == x.shape and out.dtype == x.dtype
    # bf16 MXU operands / bf16 stage math (f32 accumulate & identity term)
    # -> relaxed tolerance vs the pure-f32 reference.
    assert jnp.allclose(out, ref, atol=1e-2, rtol=1e-2), (
        float(jnp.max(jnp.abs(out - ref))))

    print("KERNEL_OK")
</pallas_src>

<mosaic_0001>
module attributes {stable_mosaic.version = 11 : i64} {
  func.func @_rk4_kernel(%arg0: i32, %arg1: memref<1x1xf32, #tpu.memory_space<smem>>, %arg2: memref<512x128xf32, #tpu.memory_space<vmem>>, %arg3: memref<128x128xbf16, #tpu.memory_space<vmem>>, %arg4: memref<1x128xf32, #tpu.memory_space<vmem>>, %arg5: memref<512x128xf32, #tpu.memory_space<vmem>>) attributes {dimension_semantics = [#tpu.dimension_semantics<parallel>], iteration_bounds = array<i64: 1>, scalar_prefetch = 0 : i64, scratch_operands = 0 : i64, tpu.core_type = #tpu.core_type<tc>, window_params = [{transform_indices = @transform_0, window_bounds = array<i64: 1, 1>}, {transform_indices = @transform_1, window_bounds = array<i64: 512, 128>}, {pipeline_mode = #tpu.pipeline_mode<synchronous>, transform_indices = @transform_2, window_bounds = array<i64: 128, 128>}, {pipeline_mode = #tpu.pipeline_mode<synchronous>, transform_indices = @transform_3, window_bounds = array<i64: 1, 128>}, {transform_indices = @transform_4, window_bounds = array<i64: 512, 128>}]} {
    %c0 = arith.constant 0 : index
    %c0_0 = arith.constant 0 : index
    %0 = memref.load %arg1[%c0, %c0_0] : memref<1x1xf32, #tpu.memory_space<smem>>
    %c0_1 = arith.constant 0 : index
    %c0_2 = arith.constant 0 : index
    %1 = vector.load %arg3[%c0_1, %c0_2] : memref<128x128xbf16, #tpu.memory_space<vmem>>, vector<128x128xbf16>
    %c0_3 = arith.constant 0 : index
    %c0_4 = arith.constant 0 : index
    %2 = vector.load %arg4[%c0_3, %c0_4] : memref<1x128xf32, #tpu.memory_space<vmem>>, vector<1x128xf32>
    %cst = arith.constant 5.000000e-01 : f32
    %3 = arith.mulf %0, %cst : f32
    %4 = arith.truncf %3 : f32 to bf16
    %5 = arith.truncf %0 : f32 to bf16
    %cst_5 = arith.constant 0.166666672 : f32
    %6 = arith.mulf %0, %cst_5 : f32
    %c0_6 = arith.constant 0 : index
    %c0_7 = arith.constant 0 : index
    %7 = vector.load %arg2[%c0_6, %c0_7] : memref<512x128xf32, #tpu.memory_space<vmem>>, vector<128x128xf32>
    %8 = arith.truncf %7 : vector<128x128xf32> to vector<128x128xbf16>
    %cst_8 = arith.constant dense<0.000000e+00> : vector<128x128xf32>
    %9 = tpu.matmul %8, %1, %cst_8 {dimension_numbers = #tpu.dot_dimension_numbers<[1], [0], [0], [1], [0, 0, 1, 1], [], []>} : vector<128x128xbf16>, vector<128x128xbf16>, vector<128x128xf32> -> vector<128x128xf32>
    %10 = vector.broadcast %2 : vector<1x128xf32> to vector<128x128xf32>
    %11 = arith.addf %9, %10 : vector<128x128xf32>
    %12 = arith.truncf %11 : vector<128x128xf32> to vector<128x128xbf16>
    %13 = math.tanh %12 : vector<128x128xbf16>
    %14 = vector.broadcast %4 : bf16 to vector<128x128xbf16>
    %15 = arith.mulf %14, %13 : vector<128x128xbf16>
    %cst_9 = arith.constant 3.339840e-01 : bf16
    %16 = vector.broadcast %cst_9 : bf16 to vector<128x128xbf16>
    %17 = arith.mulf %16, %15 : vector<128x128xbf16>
    %18 = arith.extf %17 : vector<128x128xbf16> to vector<128x128xf32>
    %19 = arith.addf %7, %18 : vector<128x128xf32>
    %20 = arith.addf %8, %15 : vector<128x128xbf16>
    %cst_10 = arith.constant dense<0.000000e+00> : vector<128x128xf32>
    %21 = tpu.matmul %20, %1, %cst_10 {dimension_numbers = #tpu.dot_dimension_numbers<[1], [0], [0], [1], [0, 0, 1, 1], [], []>} : vector<128x128xbf16>, vector<128x128xbf16>, vector<128x128xf32> -> vector<128x128xf32>
    %22 = vector.broadcast %2 : vector<1x128xf32> to vector<128x128xf32>
    %23 = arith.addf %21, %22 : vector<128x128xf32>
    %24 = arith.truncf %23 : vector<128x128xf32> to vector<128x128xbf16>
    %25 = math.tanh %24 : vector<128x128xbf16>
    %26 = vector.broadcast %4 : bf16 to vector<128x128xbf16>
    %27 = arith.mulf %26, %25 : vector<128x128xbf16>
    %cst_11 = arith.constant 6.679690e-01 : bf16
    %28 = vector.broadcast %cst_11 : bf16 to vector<128x128xbf16>
    %29 = arith.mulf %28, %27 : vector<128x128xbf16>
    %30 = arith.extf %29 : vector<128x128xbf16> to vector<128x128xf32>
    %31 = arith.addf %19, %30 : vector<128x128xf32>
    %32 = arith.addf %8, %27 : vector<128x128xbf16>
    %cst_12 = arith.constant dense<0.000000e+00> : vector<128x128xf32>
    %33 = tpu.matmul %32, %1, %cst_12 {dimension_numbers = #tpu.dot_dimension_numbers<[1], [0], [0], [1], [0, 0, 1, 1], [], []>} : vector<128x128xbf16>, vector<128x128xbf16>, vector<128x128xf32> -> vector<128x128xf32>
    %34 = vector.broadcast %2 : vector<1x128xf32> to vector<128x128xf32>
    %35 = arith.addf %33, %34 : vector<128x128xf32>
    %36 = arith.truncf %35 : vector<128x128xf32> to vector<128x128xbf16>
    %37 = math.tanh %36 : vector<128x128xbf16>
    %38 = vector.broadcast %5 : bf16 to vector<128x128xbf16>
    %39 = arith.mulf %38, %37 : vector<128x128xbf16>
    %cst_13 = arith.constant 3.339840e-01 : bf16
    %40 = vector.broadcast %cst_13 : bf16 to vector<128x128xbf16>
    %41 = arith.mulf %40, %39 : vector<128x128xbf16>
    %42 = arith.extf %41 : vector<128x128xbf16> to vector<128x128xf32>
    %43 = arith.addf %31, %42 : vector<128x128xf32>
    %44 = arith.addf %8, %39 : vector<128x128xbf16>
    %cst_14 = arith.constant dense<0.000000e+00> : vector<128x128xf32>
    %45 = tpu.matmul %44, %1, %cst_14 {dimension_numbers = #tpu.dot_dimension_numbers<[1], [0], [0], [1], [0, 0, 1, 1], [], []>} : vector<128x128xbf16>, vector<128x128xbf16>, vector<128x128xf32> -> vector<128x128xf32>
    %46 = vector.broadcast %2 : vector<1x128xf32> to vector<128x128xf32>
    %47 = arith.addf %45, %46 : vector<128x128xf32>
    %48 = arith.truncf %47 : vector<128x128xf32> to vector<128x128xbf16>
    %49 = math.tanh %48 : vector<128x128xbf16>
    %50 = arith.extf %49 : vector<128x128xbf16> to vector<128x128xf32>
    %51 = vector.broadcast %6 : f32 to vector<128x128xf32>
    %52 = arith.mulf %51, %50 : vector<128x128xf32>
    %53 = arith.addf %43, %52 : vector<128x128xf32>
    %c0_15 = arith.constant 0 : index
    %c0_16 = arith.constant 0 : index
    %54 = vector.load %arg5[%c0_15, %c0_16] : memref<512x128xf32, #tpu.memory_space<vmem>>, vector<128x128xf32>
    tpu.vector_store %arg5[%c0_15, %c0_16], %53 {strides = array<i32>} : memref<512x128xf32, #tpu.memory_space<vmem>>, vector<128x128xf32>,
    %c128 = arith.constant 128 : index
    %c0_17 = arith.constant 0 : index
    %55 = vector.load %arg2[%c128, %c0_17] : memref<512x128xf32, #tpu.memory_space<vmem>>, vector<128x128xf32>
    %56 = arith.truncf %55 : vector<128x128xf32> to vector<128x128xbf16>
    %cst_18 = arith.constant dense<0.000000e+00> : vector<128x128xf32>
    %57 = tpu.matmul %56, %1, %cst_18 {dimension_numbers = #tpu.dot_dimension_numbers<[1], [0], [0], [1], [0, 0, 1, 1], [], []>} : vector<128x128xbf16>, vector<128x128xbf16>, vector<128x128xf32> -> vector<128x128xf32>
    %58 = vector.broadcast %2 : vector<1x128xf32> to vector<128x128xf32>
    %59 = arith.addf %57, %58 : vector<128x128xf32>
    %60 = arith.truncf %59 : vector<128x128xf32> to vector<128x128xbf16>
    %61 = math.tanh %60 : vector<128x128xbf16>
    %62 = vector.broadcast %4 : bf16 to vector<128x128xbf16>
    %63 = arith.mulf %62, %61 : vector<128x128xbf16>
    %cst_19 = arith.constant 3.339840e-01 : bf16
    %64 = vector.broadcast %cst_19 : bf16 to vector<128x128xbf16>
    %65 = arith.mulf %64, %63 : vector<128x128xbf16>
    %66 = arith.extf %65 : vector<128x128xbf16> to vector<128x128xf32>
    %67 = arith.addf %55, %66 : vector<128x128xf32>
    %68 = arith.addf %56, %63 : vector<128x128xbf16>
    %cst_20 = arith.constant dense<0.000000e+00> : vector<128x128xf32>
    %69 = tpu.matmul %68, %1, %cst_20 {dimension_numbers = #tpu.dot_dimension_numbers<[1], [0], [0], [1], [0, 0, 1, 1], [], []>} : vector<128x128xbf16>, vector<128x128xbf16>, vector<128x128xf32> -> vector<128x128xf32>
    %70 = vector.broadcast %2 : vector<1x128xf32> to vector<128x128xf32>
    %71 = arith.addf %69, %70 : vector<128x128xf32>
    %72 = arith.truncf %71 : vector<128x128xf32> to vector<128x128xbf16>
    %73 = math.tanh %72 : vector<128x128xbf16>
    %74 = vector.broadcast %4 : bf16 to vector<128x128xbf16>
    %75 = arith.mulf %74, %73 : vector<128x128xbf16>
    %cst_21 = arith.constant 6.679690e-01 : bf16
    %76 = vector.broadcast %cst_21 : bf16 to vector<128x128xbf16>
    %77 = arith.mulf %76, %75 : vector<128x128xbf16>
    %78 = arith.extf %77 : vector<128x128xbf16> to vector<128x128xf32>
    %79 = arith.addf %67, %78 : vector<128x128xf32>
    %80 = arith.addf %56, %75 : vector<128x128xbf16>
    %cst_22 = arith.constant dense<0.000000e+00> : vector<128x128xf32>
    %81 = tpu.matmul %80, %1, %cst_22 {dimension_numbers = #tpu.dot_dimension_numbers<[1], [0], [0], [1], [0, 0, 1, 1], [], []>} : vector<128x128xbf16>, vector<128x128xbf16>, vector<128x128xf32> -> vector<128x128xf32>
    %82 = vector.broadcast %2 : vector<1x128xf32> to vector<128x128xf32>
    %83 = arith.addf %81, %82 : vector<128x128xf32>
    %84 = arith.truncf %83 : vector<128x128xf32> to vector<128x128xbf16>
    %85 = math.tanh %84 : vector<128x128xbf16>
    %86 = vector.broadcast %5 : bf16 to vector<128x128xbf16>
    %87 = arith.mulf %86, %85 : vector<128x128xbf16>
    %cst_23 = arith.constant 3.339840e-01 : bf16
    %88 = vector.broadcast %cst_23 : bf16 to vector<128x128xbf16>
    %89 = arith.mulf %88, %87 : vector<128x128xbf16>
    %90 = arith.extf %89 : vector<128x128xbf16> to vector<128x128xf32>
    %91 = arith.addf %79, %90 : vector<128x128xf32>
    %92 = arith.addf %56, %87 : vector<128x128xbf16>
    %cst_24 = arith.constant dense<0.000000e+00> : vector<128x128xf32>
    %93 = tpu.matmul %92, %1, %cst_24 {dimension_numbers = #tpu.dot_dimension_numbers<[1], [0], [0], [1], [0, 0, 1, 1], [], []>} : vector<128x128xbf16>, vector<128x128xbf16>, vector<128x128xf32> -> vector<128x128xf32>
    %94 = vector.broadcast %2 : vector<1x128xf32> to vector<128x128xf32>
    %95 = arith.addf %93, %94 : vector<128x128xf32>
    %96 = arith.truncf %95 : vector<128x128xf32> to vector<128x128xbf16>
    %97 = math.tanh %96 : vector<128x128xbf16>
    %98 = arith.extf %97 : vector<128x128xbf16> to vector<128x128xf32>
    %99 = vector.broadcast %6 : f32 to vector<128x128xf32>
    %100 = arith.mulf %99, %98 : vector<128x128xf32>
    %101 = arith.addf %91, %100 : vector<128x128xf32>
    %c128_25 = arith.constant 128 : index
    %c0_26 = arith.constant 0 : index
    %102 = vector.load %arg5[%c128_25, %c0_26] : memref<512x128xf32, #tpu.memory_space<vmem>>, vector<128x128xf32>
    tpu.vector_store %arg5[%c128_25, %c0_26], %101 {strides = array<i32>} : memref<512x128xf32, #tpu.memory_space<vmem>>, vector<128x128xf32>,
    %c256 = arith.constant 256 : index
    %c0_27 = arith.constant 0 : index
    %103 = vector.load %arg2[%c256, %c0_27] : memref<512x128xf32, #tpu.memory_space<vmem>>, vector<128x128xf32>
    %104 = arith.truncf %103 : vector<128x128xf32> to vector<128x128xbf16>
    %cst_28 = arith.constant dense<0.000000e+00> : vector<128x128xf32>
    %105 = tpu.matmul %104, %1, %cst_28 {dimension_numbers = #tpu.dot_dimension_numbers<[1], [0], [0], [1], [0, 0, 1, 1], [], []>} : vector<128x128xbf16>, vector<128x128xbf16>, vector<128x128xf32> -> vector<128x128xf32>
    %106 = vector.broadcast %2 : vector<1x128xf32> to vector<128x128xf32>
    %107 = arith.addf %105, %106 : vector<128x128xf32>
    %108 = arith.truncf %107 : vector<128x128xf32> to vector<128x128xbf16>
    %109 = math.tanh %108 : vector<128x128xbf16>
    %110 = vector.broadcast %4 : bf16 to vector<128x128xbf16>
    %111 = arith.mulf %110, %109 : vector<128x128xbf16>
    %cst_29 = arith.constant 3.339840e-01 : bf16
    %112 = vector.broadcast %cst_29 : bf16 to vector<128x128xbf16>
    %113 = arith.mulf %112, %111 : vector<128x128xbf16>
    %114 = arith.extf %113 : vector<128x128xbf16> to vector<128x128xf32>
    %115 = arith.addf %103, %114 : vector<128x128xf32>
    %116 = arith.addf %104, %111 : vector<128x128xbf16>
    %cst_30 = arith.constant dense<0.000000e+00> : vector<128x128xf32>
    %117 = tpu.matmul %116, %1, %cst_30 {dimension_numbers = #tpu.dot_dimension_numbers<[1], [0], [0], [1], [0, 0, 1, 1], [], []>} : vector<128x128xbf16>, vector<128x128xbf16>, vector<128x128xf32> -> vector<128x128xf32>
    %118 = vector.broadcast %2 : vector<1x128xf32> to vector<128x128xf32>
    %119 = arith.addf %117, %118 : vector<128x128xf32>
    %120 = arith.truncf %119 : vector<128x128xf32> to vector<128x128xbf16>
    %121 = math.tanh %120 : vector<128x128xbf16>
    %122 = vector.broadcast %4 : bf16 to vector<128x128xbf16>
    %123 = arith.mulf %122, %121 : vector<128x128xbf16>
    %cst_31 = arith.constant 6.679690e-01 : bf16
    %124 = vector.broadcast %cst_31 : bf16 to vector<128x128xbf16>
    %125 = arith.mulf %124, %123 : vector<128x128xbf16>
    %126 = arith.extf %125 : vector<128x128xbf16> to vector<128x128xf32>
    %127 = arith.addf %115, %126 : vector<128x128xf32>
    %128 = arith.addf %104, %123 : vector<128x128xbf16>
    %cst_32 = arith.constant dense<0.000000e+00> : vector<128x128xf32>
    %129 = tpu.matmul %128, %1, %cst_32 {dimension_numbers = #tpu.dot_dimension_numbers<[1], [0], [0], [1], [0, 0, 1, 1], [], []>} : vector<128x128xbf16>, vector<128x128xbf16>, vector<128x128xf32> -> vector<128x128xf32>
    %130 = vector.broadcast %2 : vector<1x128xf32> to vector<128x128xf32>
    %131 = arith.addf %129, %130 : vector<128x128xf32>
    %132 = arith.truncf %131 : vector<128x128xf32> to vector<128x128xbf16>
    %133 = math.tanh %132 : vector<128x128xbf16>
    %134 = vector.broadcast %5 : bf16 to vector<128x128xbf16>
    %135 = arith.mulf %134, %133 : vector<128x128xbf16>
    %cst_33 = arith.constant 3.339840e-01 : bf16
    %136 = vector.broadcast %cst_33 : bf16 to vector<128x128xbf16>
    %137 = arith.mulf %136, %135 : vector<128x128xbf16>
    %138 = arith.extf %137 : vector<128x128xbf16> to vector<128x128xf32>
    %139 = arith.addf %127, %138 : vector<128x128xf32>
    %140 = arith.addf %104, %135 : vector<128x128xbf16>
    %cst_34 = arith.constant dense<0.000000e+00> : vector<128x128xf32>
    %141 = tpu.matmul %140, %1, %cst_34 {dimension_numbers = #tpu.dot_dimension_numbers<[1], [0], [0], [1], [0, 0, 1, 1], [], []>} : vector<128x128xbf16>, vector<128x128xbf16>, vector<128x128xf32> -> vector<128x128xf32>
    %142 = vector.broadcast %2 : vector<1x128xf32> to vector<128x128xf32>
    %143 = arith.addf %141, %142 : vector<128x128xf32>
    %144 = arith.truncf %143 : vector<128x128xf32> to vector<128x128xbf16>
    %145 = math.tanh %144 : vector<128x128xbf16>
    %146 = arith.extf %145 : vector<128x128xbf16> to vector<128x128xf32>
    %147 = vector.broadcast %6 : f32 to vector<128x128xf32>
    %148 = arith.mulf %147, %146 : vector<128x128xf32>
    %149 = arith.addf %139, %148 : vector<128x128xf32>
    %c256_35 = arith.constant 256 : index
    %c0_36 = arith.constant 0 : index
    %150 = vector.load %arg5[%c256_35, %c0_36] : memref<512x128xf32, #tpu.memory_space<vmem>>, vector<128x128xf32>
    tpu.vector_store %arg5[%c256_35, %c0_36], %149 {strides = array<i32>} : memref<512x128xf32, #tpu.memory_space<vmem>>, vector<128x128xf32>,
    %c384 = arith.constant 384 : index
    %c0_37 = arith.constant 0 : index
    %151 = vector.load %arg2[%c384, %c0_37] : memref<512x128xf32, #tpu.memory_space<vmem>>, vector<128x128xf32>
    %152 = arith.truncf %151 : vector<128x128xf32> to vector<128x128xbf16>
    %cst_38 = arith.constant dense<0.000000e+00> : vector<128x128xf32>
    %153 = tpu.matmul %152, %1, %cst_38 {dimension_numbers = #tpu.dot_dimension_numbers<[1], [0], [0], [1], [0, 0, 1, 1], [], []>} : vector<128x128xbf16>, vector<128x128xbf16>, vector<128x128xf32> -> vector<128x128xf32>
    %154 = vector.broadcast %2 : vector<1x128xf32> to vector<128x128xf32>
    %155 = arith.addf %153, %154 : vector<128x128xf32>
    %156 = arith.truncf %155 : vector<128x128xf32> to vector<128x128xbf16>
    %157 = math.tanh %156 : vector<128x128xbf16>
    %158 = vector.broadcast %4 : bf16 to vector<128x128xbf16>
    %159 = arith.mulf %158, %157 : vector<128x128xbf16>
    %cst_39 = arith.constant 3.339840e-01 : bf16
    %160 = vector.broadcast %cst_39 : bf16 to vector<128x128xbf16>
    %161 = arith.mulf %160, %159 : vector<128x128xbf16>
    %162 = arith.extf %161 : vector<128x128xbf16> to vector<128x128xf32>
    %163 = arith.addf %151, %162 : vector<128x128xf32>
    %164 = arith.addf %152, %159 : vector<128x128xbf16>
    %cst_40 = arith.constant dense<0.000000e+00> : vector<128x128xf32>
    %165 = tpu.matmul %164, %1, %cst_40 {dimension_numbers = #tpu.dot_dimension_numbers<[1], [0], [0], [1], [0, 0, 1, 1], [], []>} : vector<128x128xbf16>, vector<128x128xbf16>, vector<128x128xf32> -> vector<128x128xf32>
    %166 = vector.broadcast %2 : vector<1x128xf32> to vector<128x128xf32>
    %167 = arith.addf %165, %166 : vector<128x128xf32>
    %168 = arith.truncf %167 : vector<128x128xf32> to vector<128x128xbf16>
    %169 = math.tanh %168 : vector<128x128xbf16>
    %170 = vector.broadcast %4 : bf16 to vector<128x128xbf16>
    %171 = arith.mulf %170, %169 : vector<128x128xbf16>
    %cst_41 = arith.constant 6.679690e-01 : bf16
    %172 = vector.broadcast %cst_41 : bf16 to vector<128x128xbf16>
    %173 = arith.mulf %172, %171 : vector<128x128xbf16>
    %174 = arith.extf %173 : vector<128x128xbf16> to vector<128x128xf32>
    %175 = arith.addf %163, %174 : vector<128x128xf32>
    %176 = arith.addf %152, %171 : vector<128x128xbf16>
    %cst_42 = arith.constant dense<0.000000e+00> : vector<128x128xf32>
    %177 = tpu.matmul %176, %1, %cst_42 {dimension_numbers = #tpu.dot_dimension_numbers<[1], [0], [0], [1], [0, 0, 1, 1], [], []>} : vector<128x128xbf16>, vector<128x128xbf16>, vector<128x128xf32> -> vector<128x128xf32>
    %178 = vector.broadcast %2 : vector<1x128xf32> to vector<128x128xf32>
    %179 = arith.addf %177, %178 : vector<128x128xf32>
    %180 = arith.truncf %179 : vector<128x128xf32> to vector<128x128xbf16>
    %181 = math.tanh %180 : vector<128x128xbf16>
    %182 = vector.broadcast %5 : bf16 to vector<128x128xbf16>
    %183 = arith.mulf %182, %181 : vector<128x128xbf16>
    %cst_43 = arith.constant 3.339840e-01 : bf16
    %184 = vector.broadcast %cst_43 : bf16 to vector<128x128xbf16>
    %185 = arith.mulf %184, %183 : vector<128x128xbf16>
    %186 = arith.extf %185 : vector<128x128xbf16> to vector<128x128xf32>
    %187 = arith.addf %175, %186 : vector<128x128xf32>
    %188 = arith.addf %152, %183 : vector<128x128xbf16>
    %cst_44 = arith.constant dense<0.000000e+00> : vector<128x128xf32>
    %189 = tpu.matmul %188, %1, %cst_44 {dimension_numbers = #tpu.dot_dimension_numbers<[1], [0], [0], [1], [0, 0, 1, 1], [], []>} : vector<128x128xbf16>, vector<128x128xbf16>, vector<128x128xf32> -> vector<128x128xf32>
    %190 = vector.broadcast %2 : vector<1x128xf32> to vector<128x128xf32>
    %191 = arith.addf %189, %190 : vector<128x128xf32>
    %192 = arith.truncf %191 : vector<128x128xf32> to vector<128x128xbf16>
    %193 = math.tanh %192 : vector<128x128xbf16>
    %194 = arith.extf %193 : vector<128x128xbf16> to vector<128x128xf32>
    %195 = vector.broadcast %6 : f32 to vector<128x128xf32>
    %196 = arith.mulf %195, %194 : vector<128x128xf32>
    %197 = arith.addf %187, %196 : vector<128x128xf32>
    %c384_45 = arith.constant 384 : index
    %c0_46 = arith.constant 0 : index
    %198 = vector.load %arg5[%c384_45, %c0_46] : memref<512x128xf32, #tpu.memory_space<vmem>>, vector<128x128xf32>
    tpu.vector_store %arg5[%c384_45, %c0_46], %197 {strides = array<i32>} : memref<512x128xf32, #tpu.memory_space<vmem>>, vector<128x128xf32>,
    return
  }
  func.func @transform_0(%arg0: i32) -> (i32, i32) {
    %c0_i32 = arith.constant 0 : i32
    %c0_i32_0 = arith.constant 0 : i32
    %c0_i32_1 = arith.constant 0 : i32
    return %c0_i32, %c0_i32_0 : i32, i32
  }
  func.func @transform_1(%arg0: i32) -> (i32, i32) {
    %c0_i32 = arith.constant 0 : i32
    %c0_i32_0 = arith.constant 0 : i32
    return %arg0, %c0_i32 : i32, i32
  }
  func.func @transform_2(%arg0: i32) -> (i32, i32) {
    %c0_i32 = arith.constant 0 : i32
    %c0_i32_0 = arith.constant 0 : i32
    %c0_i32_1 = arith.constant 0 : i32
    return %c0_i32, %c0_i32_0 : i32, i32
  }
  func.func @transform_3(%arg0: i32) -> (i32, i32) {
    %c0_i32 = arith.constant 0 : i32
    %c0_i32_0 = arith.constant 0 : i32
    %c0_i32_1 = arith.constant 0 : i32
    return %c0_i32, %c0_i32_0 : i32, i32
  }
  func.func @transform_4(%arg0: i32) -> (i32, i32) {
    %c0_i32 = arith.constant 0 : i32
    %c0_i32_0 = arith.constant 0 : i32
    return %arg0, %c0_i32 : i32, i32
  }
}

</mosaic_0001>

<llo_original>
// kernel: tpu_custom_call.1
$region0: #{tpu_custom_call.1}
  #allocation0 [shape = 'u32[]', space=smem, size = 0x4, offset = 0x4, fixed_abs, tag = 'smem constant byte address 0x4 - core index']
  #allocation1 [shape = 'u32[144,128]{1,0:T(1,128)}', space=vmem, size = 0x12000, scoped, tag = 'internal scratch']
  #allocation2 [shape = 'f32[1,1]{1,0:T(1,128)S(6)}', space=smem, size = 0x200, scoped, tag = 'scoped memory for tpu_custom_call.1']
  %s0 = inlined_call_operand.<no memory space> [shape: f32[1,1], index: 0, kind: input, shape index: {}]
  %s1 = inlined_call_operand.hbm [shape: f32[512,128], index: 1, kind: input, shape index: {}]
  %s2 = inlined_call_operand.hbm [shape: bf16[128,128], index: 2, kind: input, shape index: {}]
  %s3 = inlined_call_operand.vmem [shape: f32[1,128], index: 3, kind: input, shape index: {}]
  %s4 = inlined_call_operand.hbm [shape: f32[512,128], index: 4, kind: output, shape index: {}]
  %s5 = sld [smem:[#allocation0]]
  $region34: #{tpu_custom_call.1} parent=0
    _
  %s7 = ssub.s32 1, %s5
  %s8 = scalar_select 0, %s7, %s5
  %9 = sst [smem:[#allocation2]] %s0
  $region1: #{tpu_custom_call.1} parent=0
    #allocation3 [shape = 'u8[262144]{0}', space=vmem, size = 0x40000, scoped, tag = 'input window, operand 1, single buffered']
    #allocation4 [shape = 's32[1]{0}', space=sflag, size = 0x4, scoped, tag = 'scoped memory for tpu_custom_call.1']
    #allocation5 [shape = 's32[1]{0}', space=sflag, size = 0x4, scoped, tag = 'scoped memory for tpu_custom_call.1']
    #allocation6 [shape = 'u8[32768]{0}', space=vmem, size = 0x8000, scoped, tag = 'input window, operand 2, single buffered']
    #allocation7 [shape = 's32[1]{0}', space=sflag, size = 0x4, scoped, tag = 'scoped memory for tpu_custom_call.1']
    #allocation8 [shape = 'u8[262144]{0}', space=vmem, size = 0x40000, scoped, tag = 'output window, operand 0, single buffered']
    %10 = vsyncpa [#allocation4], 0
    %11 = vsyncpa [#allocation7], 0
    %12 = vsyncpa [#allocation5], 0
    // Predicated region
    $region2: #{tpu_custom_call.1} parent=1 // pred_check
      _
    $region3: #{tpu_custom_call.1} parent=1 // pred_check_branch
      %14 = sbr.rel (0) target = $region5
    $region4: #{tpu_custom_call.1} parent=1 // pred_region
      _
    $region5: #{tpu_custom_call.1} parent=1 // pred_fallthru
      _
    // Predicated region
    $region6: #{tpu_custom_call.1} parent=1 // pred_check
      _
    $region7: #{tpu_custom_call.1} parent=1 // pred_check_branch
      %16 = sbr.rel (0) target = $region9
    $region8: #{tpu_custom_call.1} parent=1 // pred_region
      %s18 = ssub.s32 8192, 8192
      %19 = vsyncadd [#allocation4], %s18
      %s20 = sshll.u32 [#allocation3], 4
      %s21 = int_to_ptr.vmem [resolvable:$true] %s20
      %26 = dma.hbm_to_vmem [thread:$0]  %s1, 8192, %s21, [#allocation4], 128, 128, 8
    $region9: #{tpu_custom_call.1} parent=1 // pred_fallthru
      _
    // Predicated region
    $region10: #{tpu_custom_call.1} parent=1 // pred_check
      _
    $region11: #{tpu_custom_call.1} parent=1 // pred_check_branch
      %28 = sbr.rel (0) target = $region13
    $region12: #{tpu_custom_call.1} parent=1 // pred_region
      %s30 = ssub.s32 1024, 1024
      %31 = vsyncadd [#allocation7], %s30
      %s32 = sshll.u32 [#allocation6], 4
      %s33 = int_to_ptr.vmem [resolvable:$true] %s32
      %38 = dma.hbm_to_vmem [thread:$0]  %s2, 1024, %s33, [#allocation7], 64, 64, 4
    $region13: #{tpu_custom_call.1} parent=1 // pred_fallthru
      _
    // Predicated region
    $region14: #{tpu_custom_call.1} parent=1 // pred_check
      _
    $region15: #{tpu_custom_call.1} parent=1 // pred_check_branch
      %40 = sbr.rel (0) target = $region17
    $region16: #{tpu_custom_call.1} parent=1 // pred_region
      _
    $region17: #{tpu_custom_call.1} parent=1 // pred_fallthru
      _
    // Predicated region
    $region18: #{tpu_custom_call.1} parent=1 // pred_check
      _
    $region19: #{tpu_custom_call.1} parent=1 // pred_check_branch
      %42 = sbr.rel (0) target = $region21
    $region20: #{tpu_custom_call.1} parent=1 // pred_region
      %43 = dma.done [#allocation4], 8192
    $region21: #{tpu_custom_call.1} parent=1 // pred_fallthru
      _
    // Predicated region
    $region22: #{tpu_custom_call.1} parent=1 // pred_check
      _
    $region23: #{tpu_custom_call.1} parent=1 // pred_check_branch
      %45 = sbr.rel (0) target = $region25
    $region24: #{tpu_custom_call.1} parent=1 // pred_region
      %46 = dma.done [#allocation7], 1024
    $region25: #{tpu_custom_call.1} parent=1 // pred_fallthru
      _
    %s50 = sld [smem:[#allocation2]]
    %v51 = vld [vmem:[#allocation6] sm:$0xf]
    %v52 = vld [vmem:[#allocation6 + $0x4] sm:$0xf]
    %v53 = vld [vmem:[#allocation6 + $0x8] sm:$0xf]
    %v54 = vld [vmem:[#allocation6 + $0xc] sm:$0xf]
    %v55 = vld [vmem:[#allocation6 + $0x10] sm:$0xf]
    %v56 = vld [vmem:[#allocation6 + $0x14] sm:$0xf]
    %v57 = vld [vmem:[#allocation6 + $0x18] sm:$0xf]
    %v58 = vld [vmem:[#allocation6 + $0x1c] sm:$0xf]
    %v59 = vld [vmem:[#allocation6 + $0x20] sm:$0xf]
    %v60 = vld [vmem:[#allocation6 + $0x24] sm:$0xf]
    %v61 = vld [vmem:[#allocation6 + $0x28] sm:$0xf]
    %v62 = vld [vmem:[#allocation6 + $0x2c] sm:$0xf]
    %v63 = vld [vmem:[#allocation6 + $0x30] sm:$0xf]
    %v64 = vld [vmem:[#allocation6 + $0x34] sm:$0xf]
    %v65 = vld [vmem:[#allocation6 + $0x38] sm:$0xf]
    %v66 = vld [vmem:[#allocation6 + $0x3c] sm:$0xf]
    %v67 = vld [vmem:[%s3] sm:$0x1]
    %s68 = smul.f32 %s50, 0.5
    %p70 = scmp.ne.f32.partialorder %s68, %s68
    %s71 = sshrl.u32 %s68, 16
    %s72 = sand.u32 %s71, 1
    %s73 = sadd.s32 32767, %s72
    %s74 = sadd.s32 %s68, %s73
    %s75 = sand.u32 %s74, 4294901760
    %s76 = scalar_select %p70, 2143289344, %s75
    %s78 = sshrl.u32 %s76, 16
    %p80 = scmp.ne.f32.partialorder %s50, %s50
    %s81 = sshrl.u32 %s50, 16
    %s82 = sand.u32 %s81, 1
    %s83 = sadd.s32 32767, %s82
    %s84 = sadd.s32 %s50, %s83
    %s85 = sand.u32 %s84, 4294901760
    %s86 = scalar_select %p80, 2143289344, %s85
    %s88 = sshrl.u32 %s86, 16
    %s89 = smul.f32 %s50, 0.16666667
    %v90 = vld [vmem:[#allocation3] sm:$0xff]
    %v91 = vld [vmem:[#allocation3 + $0x8] sm:$0xff]
    %v92 = vld [vmem:[#allocation3 + $0x10] sm:$0xff]
    %v93 = vld [vmem:[#allocation3 + $0x18] sm:$0xff]
    %v94 = vld [vmem:[#allocation3 + $0x20] sm:$0xff]
    %v95 = vld [vmem:[#allocation3 + $0x28] sm:$0xff]
    %v96 = vld [vmem:[#allocation3 + $0x30] sm:$0xff]
    %v97 = vld [vmem:[#allocation3 + $0x38] sm:$0xff]
    %v98 = vld [vmem:[#allocation3 + $0x40] sm:$0xff]
    %v99 = vld [vmem:[#allocation3 + $0x48] sm:$0xff]
    %v100 = vld [vmem:[#allocation3 + $0x50] sm:$0xff]
    %v101 = vld [vmem:[#allocation3 + $0x58] sm:$0xff]
    %v102 = vld [vmem:[#allocation3 + $0x60] sm:$0xff]
    %v103 = vld [vmem:[#allocation3 + $0x68] sm:$0xff]
    %v104 = vld [vmem:[#allocation3 + $0x70] sm:$0xff]
    %v105 = vld [vmem:[#allocation3 + $0x78] sm:$0xff]
    %v106 = vpack.c.bf16 %v91, %v90
    %v107 = vpack.c.bf16 %v93, %v92
    %v108 = vpack.c.bf16 %v95, %v94
    %v109 = vpack.c.bf16 %v97, %v96
    %v110 = vpack.c.bf16 %v99, %v98
    %v111 = vpack.c.bf16 %v101, %v100
    %v112 = vpack.c.bf16 %v103, %v102
    %v113 = vpack.c.bf16 %v105, %v104
    %v115 = vlaneseq
    %v116 = vshrl.u32 %v115, 7
    %v117 = vsub.s32 0, %v116
    %v118 = vrot.slane %v67, %v117
    %v136 = vunpack.c.l.b16 %v51
    %v137 = vunpack.c.l.b16 %v52
    %v138 = vunpack.c.l.b16 %v53
    %v139 = vunpack.c.l.b16 %v54
    %v140 = vunpack.c.l.b16 %v55
    %v141 = vunpack.c.l.b16 %v56
    %v142 = vunpack.c.l.b16 %v57
    %v143 = vunpack.c.l.b16 %v58
    %v144 = vunpack.c.l.b16 %v59
    %v145 = vunpack.c.l.b16 %v60
    %v146 = vunpack.c.l.b16 %v61
    %v147 = vunpack.c.l.b16 %v62
    %v148 = vunpack.c.l.b16 %v63
    %v149 = vunpack.c.l.b16 %v64
    %v150 = vunpack.c.l.b16 %v65
    %v151 = vunpack.c.l.b16 %v66
    %v152 = vpack.c.b16 %v137, %v136
    %v153 = vpack.c.b16 %v139, %v138
    %v154 = vpack.c.b16 %v141, %v140
    %v155 = vpack.c.b16 %v143, %v142
    %v156 = vpack.c.b16 %v145, %v144
    %v157 = vpack.c.b16 %v147, %v146
    %v158 = vpack.c.b16 %v149, %v148
    %v159 = vpack.c.b16 %v151, %v150
    %168 = vmatprep.subr.bf16.mxu0 0
    %169 = vmatpush1.bf16.msra.mxu0 %v152
    %170 = vmatprep.subr.bf16.mxu0 0
    %171 = vmatpush1.bf16.msra.mxu0 %v153
    %172 = vmatprep.subr.bf16.mxu0 0
    %173 = vmatpush1.bf16.msra.mxu0 %v154
    %174 = vmatprep.subr.bf16.mxu0 0
    %175 = vmatpush1.bf16.msra.mxu0 %v155
    %176 = vmatprep.subr.bf16.mxu0 0
    %177 = vmatpush1.bf16.msra.mxu0 %v156
    %178 = vmatprep.subr.bf16.mxu0 0
    %179 = vmatpush1.bf16.msra.mxu0 %v157
    %180 = vmatprep.subr.bf16.mxu0 0
    %181 = vmatpush1.bf16.msra.mxu0 %v158
    %182 = vmatprep.subr.bf16.mxu0 0
    %183 = vmatpush1.bf16.msra.mxu0 %v159
    %184 = vmatprep.subr.bf16.mxu0 0
    %185 = vmatpush1.bf16.msra.mxu0 0
    %186 = vmatprep.subr.bf16.mxu0 0
    %187 = vmatpush1.bf16.msra.mxu0 0
    %188 = vmatprep.subr.bf16.mxu0 0
    %189 = vmatpush1.bf16.msra.mxu0 0
    %190 = vmatprep.subr.bf16.mxu0 0
    %191 = vmatpush1.bf16.msra.mxu0 0
    %192 = vmatprep.subr.bf16.mxu0 0
    %193 = vmatpush1.bf16.msra.mxu0 0
    %194 = vmatprep.subr.bf16.mxu0 0
    %195 = vmatpush1.bf16.msra.mxu0 0
    %196 = vmatprep.subr.bf16.mxu0 0
    %197 = vmatpush1.bf16.msra.mxu0 0
    %198 = vmatprep.subr.bf16.mxu0 0
    %199 = vmatpush1.bf16.msra.mxu0 0
    %200 = vmatprep.mubr.bf16.mxu0 0
    %201 = vmatmul.mubr.bf16.gmra.mrb[0].mxu0 %v106
    %v202 = vpop.f32.mrb[0].mxu0
    %v203 = vadd.f32 %v118, %v202
    %v204 = vpop.f32.mrb[0].mxu0
    %v205 = vpop.f32.mrb[0].mxu0
    %v206 = vadd.f32 %v118, %v205
    %v207 = vpop.f32.mrb[0].mxu0
    %208 = vmatprep.mubr.bf16.mxu0 0
    %209 = vmatmul.mubr.bf16.gmra.mrb[0].mxu0 %v107
    %v210 = vpop.f32.mrb[0].mxu0
    %v211 = vadd.f32 %v118, %v210
    %v212 = vpop.f32.mrb[0].mxu0
    %v213 = vpop.f32.mrb[0].mxu0
    %v214 = vadd.f32 %v118, %v213
    %v215 = vpop.f32.mrb[0].mxu0
    %216 = vmatprep.mubr.bf16.mxu0 0
    %217 = vmatmul.mubr.bf16.gmra.mrb[0].mxu0 %v108
    %v218 = vpop.f32.mrb[0].mxu0
    %v219 = vadd.f32 %v118, %v218
    %v220 = vpop.f32.mrb[0].mxu0
    %v221 = vpop.f32.mrb[0].mxu0
    %v222 = vadd.f32 %v118, %v221
    %v223 = vpop.f32.mrb[0].mxu0
    %224 = vmatprep.mubr.bf16.mxu0 0
    %225 = vmatmul.mubr.bf16.gmra.mrb[0].mxu0 %v109
    %v226 = vpop.f32.mrb[0].mxu0
    %v227 = vadd.f32 %v118, %v226
    %v228 = vpop.f32.mrb[0].mxu0
    %v229 = vpop.f32.mrb[0].mxu0
    %v230 = vadd.f32 %v118, %v229
    %v231 = vpop.f32.mrb[0].mxu0
    %232 = vmatprep.mubr.bf16.mxu0 0
    %233 = vmatmul.mubr.bf16.gmra.mrb[0].mxu0 %v110
    %v234 = vpop.f32.mrb[0].mxu0
    %v235 = vadd.f32 %v118, %v234
    %v236 = vpop.f32.mrb[0].mxu0
    %v237 = vpop.f32.mrb[0].mxu0
    %v238 = vadd.f32 %v118, %v237
    %v239 = vpop.f32.mrb[0].mxu0
    %240 = vmatprep.mubr.bf16.mxu0 0
    %241 = vmatmul.mubr.bf16.gmra.mrb[0].mxu0 %v111
    %v242 = vpop.f32.mrb[0].mxu0
    %v243 = vadd.f32 %v118, %v242
    %v244 = vpop.f32.mrb[0].mxu0
    %v245 = vpop.f32.mrb[0].mxu0
    %v246 = vadd.f32 %v118, %v245
    %v247 = vpop.f32.mrb[0].mxu0
    %248 = vmatprep.mubr.bf16.mxu0 0
    %249 = vmatmul.mubr.bf16.gmra.mrb[0].mxu0 %v112
    %v250 = vpop.f32.mrb[0].mxu0
    %v251 = vadd.f32 %v118, %v250
    %v252 = vpop.f32.mrb[0].mxu0
    %v253 = vpop.f32.mrb[0].mxu0
    %v254 = vadd.f32 %v118, %v253
    %v255 = vpop.f32.mrb[0].mxu0
    %256 = vmatprep.mubr.bf16.mxu0 0
    %257 = vmatmul.mubr.bf16.gmra.mrb[0].mxu0 %v113
    %v258 = vpop.f32.mrb[0].mxu0
    %v259 = vadd.f32 %v118, %v258
    %v260 = vpop.f32.mrb[0].mxu0
    %v261 = vpop.f32.mrb[0].mxu0
    %v262 = vadd.f32 %v118, %v261
    %v263 = vpop.f32.mrb[0].mxu0
    %264 = vdwg.mxu0
    %v265 = vpack.c.bf16 %v206, %v203
    %v266 = vpack.c.bf16 %v214, %v211
    %v267 = vpack.c.bf16 %v222, %v219
    %v268 = vpack.c.bf16 %v230, %v227
    %v269 = vpack.c.bf16 %v238, %v235
    %v270 = vpack.c.bf16 %v246, %v243
    %v271 = vpack.c.bf16 %v254, %v251
    %v272 = vpack.c.bf16 %v262, %v259
    %v273 = vtanh.bf16.pop %v265
    %v274 = vtanh.bf16.pop %v266
    %v275 = vtanh.bf16.pop %v267
    %v276 = vtanh.bf16.pop %v268
    %v277 = vtanh.bf16.pop %v269
    %v278 = vtanh.bf16.pop %v270
    %v279 = vtanh.bf16.pop %v271
    %v280 = vtanh.bf16.pop %v272
    %s281 = sshll.u32 %s78, 16
    %s282 = sor.u32 %s78, %s281
    %v283 = vstv %s282
    %v285 = vmul.bf16 %v283, %v273
    %v286 = vmul.bf16 %v283, %v274
    %v287 = vmul.bf16 %v283, %v275
    %v288 = vmul.bf16 %v283, %v276
    %v289 = vmul.bf16 %v283, %v277
    %v290 = vmul.bf16 %v283, %v278
    %v291 = vmul.bf16 %v283, %v279
    %v292 = vmul.bf16 %v283, %v280
    %v293 = vmul.bf16 %v285, 1051410091
    %v294 = vmul.bf16 %v286, 1051410091
    %v295 = vmul.bf16 %v287, 1051410091
    %v296 = vmul.bf16 %v288, 1051410091
    %v297 = vmul.bf16 %v289, 1051410091
    %v298 = vmul.bf16 %v290, 1051410091
    %v299 = vmul.bf16 %v291, 1051410091
    %v300 = vmul.bf16 %v292, 1051410091
    %v301 = vunpack.c.l.bf16 %v293
    %v302 = vunpack.c.h.bf16 %v293
    %v303 = vunpack.c.l.bf16 %v294
    %v304 = vunpack.c.h.bf16 %v294
    %v305 = vunpack.c.l.bf16 %v295
    %v306 = vunpack.c.h.bf16 %v295
    %v307 = vunpack.c.l.bf16 %v296
    %v308 = vunpack.c.h.bf16 %v296
    %v309 = vunpack.c.l.bf16 %v297
    %v310 = vunpack.c.h.bf16 %v297
    %v311 = vunpack.c.l.bf16 %v298
    %v312 = vunpack.c.h.bf16 %v298
    %v313 = vunpack.c.l.bf16 %v299
    %v314 = vunpack.c.h.bf16 %v299
    %v315 = vunpack.c.l.bf16 %v300
    %v316 = vunpack.c.h.bf16 %v300
    %v317 = vadd.f32 %v90, %v301
    %v318 = vadd.f32 %v91, %v302
    %v319 = vadd.f32 %v92, %v303
    %v320 = vadd.f32 %v93, %v304
    %v321 = vadd.f32 %v94, %v305
    %v322 = vadd.f32 %v95, %v306
    %v323 = vadd.f32 %v96, %v307
    %v324 = vadd.f32 %v97, %v308
    %v325 = vadd.f32 %v98, %v309
    %v326 = vadd.f32 %v99, %v310
    %v327 = vadd.f32 %v100, %v311
    %v328 = vadd.f32 %v101, %v312
    %v329 = vadd.f32 %v102, %v313
    %v330 = vadd.f32 %v103, %v314
    %v331 = vadd.f32 %v104, %v315
    %v332 = vadd.f32 %v105, %v316
    %v333 = vadd.bf16 %v106, %v285
    %v334 = vadd.bf16 %v107, %v286
    %v335 = vadd.bf16 %v108, %v287
    %v336 = vadd.bf16 %v109, %v288
    %v337 = vadd.bf16 %v110, %v289
    %v338 = vadd.bf16 %v111, %v290
    %v339 = vadd.bf16 %v112, %v291
    %v340 = vadd.bf16 %v113, %v292
    %341 = vmatprep.subr.bf16.mxu0 0
    %342 = vmatpush1.bf16.msra.mxu0 %v152
    %343 = vmatprep.subr.bf16.mxu0 0
    %344 = vmatpush1.bf16.msra.mxu0 %v153
    %345 = vmatprep.subr.bf16.mxu0 0
    %346 = vmatpush1.bf16.msra.mxu0 %v154
    %347 = vmatprep.subr.bf16.mxu0 0
    %348 = vmatpush1.bf16.msra.mxu0 %v155
    %349 = vmatprep.subr.bf16.mxu0 0
    %350 = vmatpush1.bf16.msra.mxu0 %v156
    %351 = vmatprep.subr.bf16.mxu0 0
    %352 = vmatpush1.bf16.msra.mxu0 %v157
    %353 = vmatprep.subr.bf16.mxu0 0
    %354 = vmatpush1.bf16.msra.mxu0 %v158
    %355 = vmatprep.subr.bf16.mxu0 0
    %356 = vmatpush1.bf16.msra.mxu0 %v159
    %357 = vmatprep.subr.bf16.mxu0 0
    %358 = vmatpush1.bf16.msra.mxu0 0
    %359 = vmatprep.subr.bf16.mxu0 0
    %360 = vmatpush1.bf16.msra.mxu0 0
    %361 = vmatprep.subr.bf16.mxu0 0
    %362 = vmatpush1.bf16.msra.mxu0 0
    %363 = vmatprep.subr.bf16.mxu0 0
    %364 = vmatpush1.bf16.msra.mxu0 0
    %365 = vmatprep.subr.bf16.mxu0 0
    %366 = vmatpush1.bf16.msra.mxu0 0
    %367 = vmatprep.subr.bf16.mxu0 0
    %368 = vmatpush1.bf16.msra.mxu0 0
    %369 = vmatprep.subr.bf16.mxu0 0
    %370 = vmatpush1.bf16.msra.mxu0 0
    %371 = vmatprep.subr.bf16.mxu0 0
    %372 = vmatpush1.bf16.msra.mxu0 0
    %373 = vmatprep.mubr.bf16.mxu0 0
    %374 = vmatmul.mubr.bf16.gmra.mrb[0].mxu0 %v333
    %v375 = vpop.f32.mrb[0].mxu0
    %v376 = vadd.f32 %v118, %v375
    %v377 = vpop.f32.mrb[0].mxu0
    %v378 = vpop.f32.mrb[0].mxu0
    %v379 = vadd.f32 %v118, %v378
    %v380 = vpop.f32.mrb[0].mxu0
    %381 = vmatprep.mubr.bf16.mxu0 0
    %382 = vmatmul.mubr.bf16.gmra.mrb[0].mxu0 %v334
    %v383 = vpop.f32.mrb[0].mxu0
    %v384 = vadd.f32 %v118, %v383
    %v385 = vpop.f32.mrb[0].mxu0
    %v386 = vpop.f32.mrb[0].mxu0
    %v387 = vadd.f32 %v118, %v386
    %v388 = vpop.f32.mrb[0].mxu0
    %389 = vmatprep.mubr.bf16.mxu0 0
    %390 = vmatmul.mubr.bf16.gmra.mrb[0].mxu0 %v335
    %v391 = vpop.f32.mrb[0].mxu0
    %v392 = vadd.f32 %v118, %v391
    %v393 = vpop.f32.mrb[0].mxu0
    %v394 = vpop.f32.mrb[0].mxu0
    %v395 = vadd.f32 %v118, %v394
    %v396 = vpop.f32.mrb[0].mxu0
    %397 = vmatprep.mubr.bf16.mxu0 0
    %398 = vmatmul.mubr.bf16.gmra.mrb[0].mxu0 %v336
    %v399 = vpop.f32.mrb[0].mxu0
    %v400 = vadd.f32 %v118, %v399
    %v401 = vpop.f32.mrb[0].mxu0
    %v402 = vpop.f32.mrb[0].mxu0
    %v403 = vadd.f32 %v118, %v402
    %v404 = vpop.f32.mrb[0].mxu0
    %405 = vmatprep.mubr.bf16.mxu0 0
    %406 = vmatmul.mubr.bf16.gmra.mrb[0].mxu0 %v337
    %v407 = vpop.f32.mrb[0].mxu0
    %v408 = vadd.f32 %v118, %v407
    %v409 = vpop.f32.mrb[0].mxu0
    %v410 = vpop.f32.mrb[0].mxu0
    %v411 = vadd.f32 %v118, %v410
    %v412 = vpop.f32.mrb[0].mxu0
    %413 = vmatprep.mubr.bf16.mxu0 0
    %414 = vmatmul.mubr.bf16.gmra.mrb[0].mxu0 %v338
    %v415 = vpop.f32.mrb[0].mxu0
    %v416 = vadd.f32 %v118, %v415
    %v417 = vpop.f32.mrb[0].mxu0
    %v418 = vpop.f32.mrb[0].mxu0
    %v419 = vadd.f32 %v118, %v418
    %v420 = vpop.f32.mrb[0].mxu0
    %421 = vmatprep.mubr.bf16.mxu0 0
    %422 = vmatmul.mubr.bf16.gmra.mrb[0].mxu0 %v339
    %v423 = vpop.f32.mrb[0].mxu0
    %v424 = vadd.f32 %v118, %v423
    %v425 = vpop.f32.mrb[0].mxu0
    %v426 = vpop.f32.mrb[0].mxu0
    %v427 = vadd.f32 %v118, %v426
    %v428 = vpop.f32.mrb[0].mxu0
    %429 = vmatprep.mubr.bf16.mxu0 0
    %430 = vmatmul.mubr.bf16.gmra.mrb[0].mxu0 %v340
    %v431 = vpop.f32.mrb[0].mxu0
    %v432 = vadd.f32 %v118, %v431
    %v433 = vpop.f32.mrb[0].mxu0
    %v434 = vpop.f32.mrb[0].mxu0
    %v435 = vadd.f32 %v118, %v434
    %v436 = vpop.f32.mrb[0].mxu0
    %437 = vdwg.mxu0
    %v438 = vpack.c.bf16 %v379, %v376
    %v439 = vpack.c.bf16 %v387, %v384
    %v440 = vpack.c.bf16 %v395, %v392
    %v441 = vpack.c.bf16 %v403, %v400
    %v442 = vpack.c.bf16 %v411, %v408
    %v443 = vpack.c.bf16 %v419, %v416
    %v444 = vpack.c.bf16 %v427, %v424
    %v445 = vpack.c.bf16 %v435, %v432
    %v446 = vtanh.bf16.pop %v438
    %v447 = vtanh.bf16.pop %v439
    %v448 = vtanh.bf16.pop %v440
    %v449 = vtanh.bf16.pop %v441
    %v450 = vtanh.bf16.pop %v442
    %v451 = vtanh.bf16.pop %v443
    %v452 = vtanh.bf16.pop %v444
    %v453 = vtanh.bf16.pop %v445
    %v454 = vmul.bf16 %v283, %v446
    %v455 = vmul.bf16 %v283, %v447
    %v456 = vmul.bf16 %v283, %v448
    %v457 = vmul.bf16 %v283, %v449
    %v458 = vmul.bf16 %v283, %v450
    %v459 = vmul.bf16 %v283, %v451
    %v460 = vmul.bf16 %v283, %v452
    %v461 = vmul.bf16 %v283, %v453
    %v462 = vmul.bf16 %v454, 1059798827
    %v463 = vmul.bf16 %v455, 1059798827
    %v464 = vmul.bf16 %v456, 1059798827
    %v465 = vmul.bf16 %v457, 1059798827
    %v466 = vmul.bf16 %v458, 1059798827
    %v467 = vmul.bf16 %v459, 1059798827
    %v468 = vmul.bf16 %v460, 1059798827
    %v469 = vmul.bf16 %v461, 1059798827
    %v470 = vunpack.c.l.bf16 %v462
    %v471 = vunpack.c.h.bf16 %v462
    %v472 = vunpack.c.l.bf16 %v463
    %v473 = vunpack.c.h.bf16 %v463
    %v474 = vunpack.c.l.bf16 %v464
    %v475 = vunpack.c.h.bf16 %v464
    %v476 = vunpack.c.l.bf16 %v465
    %v477 = vunpack.c.h.bf16 %v465
    %v478 = vunpack.c.l.bf16 %v466
    %v479 = vunpack.c.h.bf16 %v466
    %v480 = vunpack.c.l.bf16 %v467
    %v481 = vunpack.c.h.bf16 %v467
    %v482 = vunpack.c.l.bf16 %v468
    %v483 = vunpack.c.h.bf16 %v468
    %v484 = vunpack.c.l.bf16 %v469
    %v485 = vunpack.c.h.bf16 %v469
    %v486 = vadd.f32 %v317, %v470
    %v487 = vadd.f32 %v318, %v471
    %v488 = vadd.f32 %v319, %v472
    %v489 = vadd.f32 %v320, %v473
    %v490 = vadd.f32 %v321, %v474
    %v491 = vadd.f32 %v322, %v475
    %v492 = vadd.f32 %v323, %v476
    %v493 = vadd.f32 %v324, %v477
    %v494 = vadd.f32 %v325, %v478
    %v495 = vadd.f32 %v326, %v479
    %v496 = vadd.f32 %v327, %v480
    %v497 = vadd.f32 %v328, %v481
    %v498 = vadd.f32 %v329, %v482
    %v499 = vadd.f32 %v330, %v483
    %v500 = vadd.f32 %v331, %v484
    %v501 = vadd.f32 %v332, %v485
    %v502 = vadd.bf16 %v106, %v454
    %v503 = vadd.bf16 %v107, %v455
    %v504 = vadd.bf16 %v108, %v456
    %v505 = vadd.bf16 %v109, %v457
    %v506 = vadd.bf16 %v110, %v458
    %v507 = vadd.bf16 %v111, %v459
    %v508 = vadd.bf16 %v112, %v460
    %v509 = vadd.bf16 %v113, %v461
    %510 = vmatprep.subr.bf16.mxu0 0
    %511 = vmatpush1.bf16.msra.mxu0 %v152
    %512 = vmatprep.subr.bf16.mxu0 0
    %513 = vmatpush1.bf16.msra.mxu0 %v153
    %514 = vmatprep.subr.bf16.mxu0 0
    %515 = vmatpush1.bf16.msra.mxu0 %v154
    %516 = vmatprep.subr.bf16.mxu0 0
    %517 = vmatpush1.bf16.msra.mxu0 %v155
    %518 = vmatprep.subr.bf16.mxu0 0
    %519 = vmatpush1.bf16.msra.mxu0 %v156
    %520 = vmatprep.subr.bf16.mxu0 0
    %521 = vmatpush1.bf16.msra.mxu0 %v157
    %522 = vmatprep.subr.bf16.mxu0 0
    %523 = vmatpush1.bf16.msra.mxu0 %v158
    %524 = vmatprep.subr.bf16.mxu0 0
    %525 = vmatpush1.bf16.msra.mxu0 %v159
    %526 = vmatprep.subr.bf16.mxu0 0
    %527 = vmatpush1.bf16.msra.mxu0 0
    %528 = vmatprep.subr.bf16.mxu0 0
    %529 = vmatpush1.bf16.msra.mxu0 0
    %530 = vmatprep.subr.bf16.mxu0 0
    %531 = vmatpush1.bf16.msra.mxu0 0
    %532 = vmatprep.subr.bf16.mxu0 0
    %533 = vmatpush1.bf16.msra.mxu0 0
    %534 = vmatprep.subr.bf16.mxu0 0
    %535 = vmatpush1.bf16.msra.mxu0 0
    %536 = vmatprep.subr.bf16.mxu0 0
    %537 = vmatpush1.bf16.msra.mxu0 0
    %538 = vmatprep.subr.bf16.mxu0 0
    %539 = vmatpush1.bf16.msra.mxu0 0
    %540 = vmatprep.subr.bf16.mxu0 0
    %541 = vmatpush1.bf16.msra.mxu0 0
    %542 = vmatprep.mubr.bf16.mxu0 0
    %543 = vmatmul.mubr.bf16.gmra.mrb[0].mxu0 %v502
    %v544 = vpop.f32.mrb[0].mxu0
    %v545 = vadd.f32 %v118, %v544
    %v546 = vpop.f32.mrb[0].mxu0
    %v547 = vpop.f32.mrb[0].mxu0
    %v548 = vadd.f32 %v118, %v547
    %v549 = vpop.f32.mrb[0].mxu0
    %550 = vmatprep.mubr.bf16.mxu0 0
    %551 = vmatmul.mubr.bf16.gmra.mrb[0].mxu0 %v503
    %v552 = vpop.f32.mrb[0].mxu0
    %v553 = vadd.f32 %v118, %v552
    %v554 = vpop.f32.mrb[0].mxu0
    %v555 = vpop.f32.mrb[0].mxu0
    %v556 = vadd.f32 %v118, %v555
    %v557 = vpop.f32.mrb[0].mxu0
    %558 = vmatprep.mubr.bf16.mxu0 0
    %559 = vmatmul.mubr.bf16.gmra.mrb[0].mxu0 %v504
    %v560 = vpop.f32.mrb[0].mxu0
    %v561 = vadd.f32 %v118, %v560
    %v562 = vpop.f32.mrb[0].mxu0
    %v563 = vpop.f32.mrb[0].mxu0
    %v564 = vadd.f32 %v118, %v563
    %v565 = vpop.f32.mrb[0].mxu0
    %566 = vmatprep.mubr.bf16.mxu0 0
    %567 = vmatmul.mubr.bf16.gmra.mrb[0].mxu0 %v505
    %v568 = vpop.f32.mrb[0].mxu0
    %v569 = vadd.f32 %v118, %v568
    %v570 = vpop.f32.mrb[0].mxu0
    %v571 = vpop.f32.mrb[0].mxu0
    %v572 = vadd.f32 %v118, %v571
    %v573 = vpop.f32.mrb[0].mxu0
    %574 = vmatprep.mubr.bf16.mxu0 0
    %575 = vmatmul.mubr.bf16.gmra.mrb[0].mxu0 %v506
    %v576 = vpop.f32.mrb[0].mxu0
    %v577 = vadd.f32 %v118, %v576
    %v578 = vpop.f32.mrb[0].mxu0
    %v579 = vpop.f32.mrb[0].mxu0
    %v580 = vadd.f32 %v118, %v579
    %v581 = vpop.f32.mrb[0].mxu0
    %582 = vmatprep.mubr.bf16.mxu0 0
    %583 = vmatmul.mubr.bf16.gmra.mrb[0].mxu0 %v507
    %v584 = vpop.f32.mrb[0].mxu0
    %v585 = vadd.f32 %v118, %v584
    %v586 = vpop.f32.mrb[0].mxu0
    %v587 = vpop.f32.mrb[0].mxu0
    %v588 = vadd.f32 %v118, %v587
    %v589 = vpop.f32.mrb[0].mxu0
    %590 = vmatprep.mubr.bf16.mxu0 0
    %591 = vmatmul.mubr.bf16.gmra.mrb[0].mxu0 %v508
    %v592 = vpop.f32.mrb[0].mxu0
    %v593 = vadd.f32 %v118, %v592
    %v594 = vpop.f32.mrb[0].mxu0
    %v595 = vpop.f32.mrb[0].mxu0
    %v596 = vadd.f32 %v118, %v595
    %v597 = vpop.f32.mrb[0].mxu0
    %598 = vmatprep.mubr.bf16.mxu0 0
    %599 = vmatmul.mubr.bf16.gmra.mrb[0].mxu0 %v509
    %v600 = vpop.f32.mrb[0].mxu0
    %v601 = vadd.f32 %v118, %v600
    %v602 = vpop.f32.mrb[0].mxu0
    %v603 = vpop.f32.mrb[0].mxu0
    %v604 = vadd.f32 %v118, %v603
    %v605 = vpop.f32.mrb[0].mxu0
    %606 = vdwg.mxu0
    %v607 = vpack.c.bf16 %v548, %v545
    %v608 = vpack.c.bf16 %v556, %v553
    %v609 = vpack.c.bf16 %v564, %v561
    %v610 = vpack.c.bf16 %v572, %v569
    %v611 = vpack.c.bf16 %v580, %v577
    %v612 = vpack.c.bf16 %v588, %v585
    %v613 = vpack.c.bf16 %v596, %v593
    %v614 = vpack.c.bf16 %v604, %v601
    %v615 = vtanh.bf16.pop %v607
    %v616 = vtanh.bf16.pop %v608
    %v617 = vtanh.bf16.pop %v609
    %v618 = vtanh.bf16.pop %v610
    %v619 = vtanh.bf16.pop %v611
    %v620 = vtanh.bf16.pop %v612
    %v621 = vtanh.bf16.pop %v613
    %v622 = vtanh.bf16.pop %v614
    %s623 = sshll.u32 %s88, 16
    %s624 = sor.u32 %s88, %s623
    %v625 = vstv %s624
    %v627 = vmul.bf16 %v625, %v615
    %v628 = vmul.bf16 %v625, %v616
    %v629 = vmul.bf16 %v625, %v617
    %v630 = vmul.bf16 %v625, %v618
    %v631 = vmul.bf16 %v625, %v619
    %v632 = vmul.bf16 %v625, %v620
    %v633 = vmul.bf16 %v625, %v621
    %v634 = vmul.bf16 %v625, %v622
    %v635 = vmul.bf16 %v627, 1051410091
    %v636 = vmul.bf16 %v628, 1051410091
    %v637 = vmul.bf16 %v629, 1051410091
    %v638 = vmul.bf16 %v630, 1051410091
    %v639 = vmul.bf16 %v631, 1051410091
    %v640 = vmul.bf16 %v632, 1051410091
    %v641 = vmul.bf16 %v633, 1051410091
    %v642 = vmul.bf16 %v634, 1051410091
    %v643 = vunpack.c.l.bf16 %v635
    %v644 = vunpack.c.h.bf16 %v635
    %v645 = vunpack.c.l.bf16 %v636
    %v646 = vunpack.c.h.bf16 %v636
    %v647 = vunpack.c.l.bf16 %v637
    %v648 = vunpack.c.h.bf16 %v637
    %v649 = vunpack.c.l.bf16 %v638
    %v650 = vunpack.c.h.bf16 %v638
    %v651 = vunpack.c.l.bf16 %v639
    %v652 = vunpack.c.h.bf16 %v639
    %v653 = vunpack.c.l.bf16 %v640
    %v654 = vunpack.c.h.bf16 %v640
    %v655 = vunpack.c.l.bf16 %v641
    %v656 = vunpack.c.h.bf16 %v641
    %v657 = vunpack.c.l.bf16 %v642
    %v658 = vunpack.c.h.bf16 %v642
    %v659 = vadd.f32 %v486, %v643
    %v660 = vadd.f32 %v487, %v644
    %v661 = vadd.f32 %v488, %v645
    %v662 = vadd.f32 %v489, %v646
    %v663 = vadd.f32 %v490, %v647
    %v664 = vadd.f32 %v491, %v648
    %v665 = vadd.f32 %v492, %v649
    %v666 = vadd.f32 %v493, %v650
    %v667 = vadd.f32 %v494, %v651
    %v668 = vadd.f32 %v495, %v652
    %v669 = vadd.f32 %v496, %v653
    %v670 = vadd.f32 %v497, %v654
    %v671 = vadd.f32 %v498, %v655
    %v672 = vadd.f32 %v499, %v656
    %v673 = vadd.f32 %v500, %v657
    %v674 = vadd.f32 %v501, %v658
    %v675 = vadd.bf16 %v106, %v627
    %v676 = vadd.bf16 %v107, %v628
    %v677 = vadd.bf16 %v108, %v629
    %v678 = vadd.bf16 %v109, %v630
    %v679 = vadd.bf16 %v110, %v631
    %v680 = vadd.bf16 %v111, %v632
    %v681 = vadd.bf16 %v112, %v633
    %v682 = vadd.bf16 %v113, %v634
    %683 = vmatprep.subr.bf16.mxu0 0
    %684 = vmatpush1.bf16.msra.mxu0 %v152
    %685 = vmatprep.subr.bf16.mxu0 0
    %686 = vmatpush1.bf16.msra.mxu0 %v153
    %687 = vmatprep.subr.bf16.mxu0 0
    %688 = vmatpush1.bf16.msra.mxu0 %v154
    %689 = vmatprep.subr.bf16.mxu0 0
    %690 = vmatpush1.bf16.msra.mxu0 %v155
    %691 = vmatprep.subr.bf16.mxu0 0
    %692 = vmatpush1.bf16.msra.mxu0 %v156
    %693 = vmatprep.subr.bf16.mxu0 0
    %694 = vmatpush1.bf16.msra.mxu0 %v157
    %695 = vmatprep.subr.bf16.mxu0 0
    %696 = vmatpush1.bf16.msra.mxu0 %v158
    %697 = vmatprep.subr.bf16.mxu0 0
    %698 = vmatpush1.bf16.msra.mxu0 %v159
    %699 = vmatprep.subr.bf16.mxu0 0
    %700 = vmatpush1.bf16.msra.mxu0 0
    %701 = vmatprep.subr.bf16.mxu0 0
    %702 = vmatpush1.bf16.msra.mxu0 0
    %703 = vmatprep.subr.bf16.mxu0 0
    %704 = vmatpush1.bf16.msra.mxu0 0
    %705 = vmatprep.subr.bf16.mxu0 0
    %706 = vmatpush1.bf16.msra.mxu0 0
    %707 = vmatprep.subr.bf16.mxu0 0
    %708 = vmatpush1.bf16.msra.mxu0 0
    %709 = vmatprep.subr.bf16.mxu0 0
    %710 = vmatpush1.bf16.msra.mxu0 0
    %711 = vmatprep.subr.bf16.mxu0 0
    %712 = vmatpush1.bf16.msra.mxu0 0
    %713 = vmatprep.subr.bf16.mxu0 0
    %714 = vmatpush1.bf16.msra.mxu0 0
    %715 = vmatprep.mubr.bf16.mxu0 0
    %716 = vmatmul.mubr.bf16.gmra.mrb[0].mxu0 %v675
    %v717 = vpop.f32.mrb[0].mxu0
    %v718 = vadd.f32 %v118, %v717
    %v719 = vpop.f32.mrb[0].mxu0
    %v720 = vpop.f32.mrb[0].mxu0
    %v721 = vadd.f32 %v118, %v720
    %v722 = vpop.f32.mrb[0].mxu0
    %723 = vmatprep.mubr.bf16.mxu0 0
    %724 = vmatmul.mubr.bf16.gmra.mrb[0].mxu0 %v676
    %v725 = vpop.f32.mrb[0].mxu0
    %v726 = vadd.f32 %v118, %v725
    %v727 = vpop.f32.mrb[0].mxu0
    %v728 = vpop.f32.mrb[0].mxu0
    %v729 = vadd.f32 %v118, %v728
    %v730 = vpop.f32.mrb[0].mxu0
    %731 = vmatprep.mubr.bf16.mxu0 0
    %732 = vmatmul.mubr.bf16.gmra.mrb[0].mxu0 %v677
    %v733 = vpop.f32.mrb[0].mxu0
    %v734 = vadd.f32 %v118, %v733
    %v735 = vpop.f32.mrb[0].mxu0
    %v736 = vpop.f32.mrb[0].mxu0
    %v737 = vadd.f32 %v118, %v736
    %v738 = vpop.f32.mrb[0].mxu0
    %739 = vmatprep.mubr.bf16.mxu0 0
    %740 = vmatmul.mubr.bf16.gmra.mrb[0].mxu0 %v678
    %v741 = vpop.f32.mrb[0].mxu0
    %v742 = vadd.f32 %v118, %v741
    %v743 = vpop.f32.mrb[0].mxu0
    %v744 = vpop.f32.mrb[0].mxu0
    %v745 = vadd.f32 %v118, %v744
    %v746 = vpop.f32.mrb[0].mxu0
    %747 = vmatprep.mubr.bf16.mxu0 0
    %748 = vmatmul.mubr.bf16.gmra.mrb[0].mxu0 %v679
    %v749 = vpop.f32.mrb[0].mxu0
    %v750 = vadd.f32 %v118, %v749
    %v751 = vpop.f32.mrb[0].mxu0
    %v752 = vpop.f32.mrb[0].mxu0
    %v753 = vadd.f32 %v118, %v752
    %v754 = vpop.f32.mrb[0].mxu0
    %755 = vmatprep.mubr.bf16.mxu0 0
    %756 = vmatmul.mubr.bf16.gmra.mrb[0].mxu0 %v680
    %v757 = vpop.f32.mrb[0].mxu0
    %v758 = vadd.f32 %v118, %v757
    %v759 = vpop.f32.mrb[0].mxu0
    %v760 = vpop.f32.mrb[0].mxu0
    %v761 = vadd.f32 %v118, %v760
    %v762 = vpop.f32.mrb[0].mxu0
    %763 = vmatprep.mubr.bf16.mxu0 0
    %764 = vmatmul.mubr.bf16.gmra.mrb[0].mxu0 %v681
    %v765 = vpop.f32.mrb[0].mxu0
    %v766 = vadd.f32 %v118, %v765
    %v767 = vpop.f32.mrb[0].mxu0
    %v768 = vpop.f32.mrb[0].mxu0
    %v769 = vadd.f32 %v118, %v768
    %v770 = vpop.f32.mrb[0].mxu0
    %771 = vmatprep.mubr.bf16.mxu0 0
    %772 = vmatmul.mubr.bf16.gmra.mrb[0].mxu0 %v682
    %v773 = vpop.f32.mrb[0].mxu0
    %v774 = vadd.f32 %v118, %v773
    %v775 = vpop.f32.mrb[0].mxu0
    %v776 = vpop.f32.mrb[0].mxu0
    %v777 = vadd.f32 %v118, %v776
    %v778 = vpop.f32.mrb[0].mxu0
    %779 = vdwg.mxu0
    %v780 = vpack.c.bf16 %v721, %v718
    %v781 = vpack.c.bf16 %v729, %v726
    %v782 = vpack.c.bf16 %v737, %v734
    %v783 = vpack.c.bf16 %v745, %v742
    %v784 = vpack.c.bf16 %v753, %v750
    %v785 = vpack.c.bf16 %v761, %v758
    %v786 = vpack.c.bf16 %v769, %v766
    %v787 = vpack.c.bf16 %v777, %v774
    %v788 = vtanh.bf16.pop %v780
    %v789 = vtanh.bf16.pop %v781
    %v790 = vtanh.bf16.pop %v782
    %v791 = vtanh.bf16.pop %v783
    %v792 = vtanh.bf16.pop %v784
    %v793 = vtanh.bf16.pop %v785
    %v794 = vtanh.bf16.pop %v786
    %v795 = vtanh.bf16.pop %v787
    %v796 = vunpack.c.l.bf16 %v788
    %v797 = vunpack.c.h.bf16 %v788
    %v798 = vunpack.c.l.bf16 %v789
    %v799 = vunpack.c.h.bf16 %v789
    %v800 = vunpack.c.l.bf16 %v790
    %v801 = vunpack.c.h.bf16 %v790
    %v802 = vunpack.c.l.bf16 %v791
    %v803 = vunpack.c.h.bf16 %v791
    %v804 = vunpack.c.l.bf16 %v792
    %v805 = vunpack.c.h.bf16 %v792
    %v806 = vunpack.c.l.bf16 %v793
    %v807 = vunpack.c.h.bf16 %v793
    %v808 = vunpack.c.l.bf16 %v794
    %v809 = vunpack.c.h.bf16 %v794
    %v810 = vunpack.c.l.bf16 %v795
    %v811 = vunpack.c.h.bf16 %v795
    %v812 = vstv %s89
    %v813 = vmul.f32 %v812, %v796
    %v814 = vmul.f32 %v812, %v797
    %v815 = vmul.f32 %v812, %v798
    %v816 = vmul.f32 %v812, %v799
    %v817 = vmul.f32 %v812, %v800
    %v818 = vmul.f32 %v812, %v801
    %v819 = vmul.f32 %v812, %v802
    %v820 = vmul.f32 %v812, %v803
    %v821 = vmul.f32 %v812, %v804
    %v822 = vmul.f32 %v812, %v805
    %v823 = vmul.f32 %v812, %v806
    %v824 = vmul.f32 %v812, %v807
    %v825 = vmul.f32 %v812, %v808
    %v826 = vmul.f32 %v812, %v809
    %v827 = vmul.f32 %v812, %v810
    %v828 = vmul.f32 %v812, %v811
    %v829 = vadd.f32 %v659, %v813
    %v830 = vadd.f32 %v660, %v814
    %v831 = vadd.f32 %v661, %v815
    %v832 = vadd.f32 %v662, %v816
    %v833 = vadd.f32 %v663, %v817
    %v834 = vadd.f32 %v664, %v818
    %v835 = vadd.f32 %v665, %v819
    %v836 = vadd.f32 %v666, %v820
    %v837 = vadd.f32 %v667, %v821
    %v838 = vadd.f32 %v668, %v822
    %v839 = vadd.f32 %v669, %v823
    %v840 = vadd.f32 %v670, %v824
    %v841 = vadd.f32 %v671, %v825
    %v842 = vadd.f32 %v672, %v826
    %v843 = vadd.f32 %v673, %v827
    %v844 = vadd.f32 %v674, %v828
    %845 = vst [vmem:[#allocation8] sm:$0xff] %v829
    %846 = vst [vmem:[#allocation8 + $0x8] sm:$0xff] %v830
    %847 = vst [vmem:[#allocation8 + $0x10] sm:$0xff] %v831
    %848 = vst [vmem:[#allocation8 + $0x18] sm:$0xff] %v832
    %849 = vst [vmem:[#allocation8 + $0x20] sm:$0xff] %v833
    %850 = vst [vmem:[#allocation8 + $0x28] sm:$0xff] %v834
    %851 = vst [vmem:[#allocation8 + $0x30] sm:$0xff] %v835
    %852 = vst [vmem:[#allocation8 + $0x38] sm:$0xff] %v836
    %853 = vst [vmem:[#allocation8 + $0x40] sm:$0xff] %v837
    %854 = vst [vmem:[#allocation8 + $0x48] sm:$0xff] %v838
    %855 = vst [vmem:[#allocation8 + $0x50] sm:$0xff] %v839
    %856 = vst [vmem:[#allocation8 + $0x58] sm:$0xff] %v840
    %857 = vst [vmem:[#allocation8 + $0x60] sm:$0xff] %v841
    %858 = vst [vmem:[#allocation8 + $0x68] sm:$0xff] %v842
    %859 = vst [vmem:[#allocation8 + $0x70] sm:$0xff] %v843
    %860 = vst [vmem:[#allocation8 + $0x78] sm:$0xff] %v844
    %v861 = vld [vmem:[#allocation3 + $0x80] sm:$0xff]
    %v862 = vld [vmem:[#allocation3 + $0x88] sm:$0xff]
    %v863 = vld [vmem:[#allocation3 + $0x90] sm:$0xff]
    %v864 = vld [vmem:[#allocation3 + $0x98] sm:$0xff]
    %v865 = vld [vmem:[#allocation3 + $0xa0] sm:$0xff]
    %v866 = vld [vmem:[#allocation3 + $0xa8] sm:$0xff]
    %v867 = vld [vmem:[#allocation3 + $0xb0] sm:$0xff]
    %v868 = vld [vmem:[#allocation3 + $0xb8] sm:$0xff]
    %v869 = vld [vmem:[#allocation3 + $0xc0] sm:$0xff]
    %v870 = vld [vmem:[#allocation3 + $0xc8] sm:$0xff]
    %v871 = vld [vmem:[#allocation3 + $0xd0] sm:$0xff]
    %v872 = vld [vmem:[#allocation3 + $0xd8] sm:$0xff]
    %v873 = vld [vmem:[#allocation3 + $0xe0] sm:$0xff]
    %v874 = vld [vmem:[#allocation3 + $0xe8] sm:$0xff]
    %v875 = vld [vmem:[#allocation3 + $0xf0] sm:$0xff]
    %v876 = vld [vmem:[#allocation3 + $0xf8] sm:$0xff]
    %v877 = vpack.c.bf16 %v862, %v861
    %v878 = vpack.c.bf16 %v864, %v863
    %v879 = vpack.c.bf16 %v866, %v865
    %v880 = vpack.c.bf16 %v868, %v867
    %v881 = vpack.c.bf16 %v870, %v869
    %v882 = vpack.c.bf16 %v872, %v871
    %v883 = vpack.c.bf16 %v874, %v873
    %v884 = vpack.c.bf16 %v876, %v875
    %885 = vmatprep.subr.bf16.mxu0 0
    %886 = vmatpush1.bf16.msra.mxu0 %v152
    %887 = vmatprep.subr.bf16.mxu0 0
    %888 = vmatpush1.bf16.msra.mxu0 %v153
    %889 = vmatprep.subr.bf16.mxu0 0
    %890 = vmatpush1.bf16.msra.mxu0 %v154
    %891 = vmatprep.subr.bf16.mxu0 0
    %892 = vmatpush1.bf16.msra.mxu0 %v155
    %893 = vmatprep.subr.bf16.mxu0 0
    %894 = vmatpush1.bf16.msra.mxu0 %v156
    %895 = vmatprep.subr.bf16.mxu0 0
    %896 = vmatpush1.bf16.msra.mxu0 %v157
    %897 = vmatprep.subr.bf16.mxu0 0
    %898 = vmatpush1.bf16.msra.mxu0 %v158
    %899 = vmatprep.subr.bf16.mxu0 0
    %900 = vmatpush1.bf16.msra.mxu0 %v159
    %901 = vmatprep.subr.bf16.mxu0 0
    %902 = vmatpush1.bf16.msra.mxu0 0
    %903 = vmatprep.subr.bf16.mxu0 0
    %904 = vmatpush1.bf16.msra.mxu0 0
    %905 = vmatprep.subr.bf16.mxu0 0
    %906 = vmatpush1.bf16.msra.mxu0 0
    %907 = vmatprep.subr.bf16.mxu0 0
    %908 = vmatpush1.bf16.msra.mxu0 0
    %909 = vmatprep.subr.bf16.mxu0 0
    %910 = vmatpush1.bf16.msra.mxu0 0
    %911 = vmatprep.subr.bf16.mxu0 0
    %912 = vmatpush1.bf16.msra.mxu0 0
    %913 = vmatprep.subr.bf16.mxu0 0
    %914 = vmatpush1.bf16.msra.mxu0 0
    %915 = vmatprep.subr.bf16.mxu0 0
    %916 = vmatpush1.bf16.msra.mxu0 0
    %917 = vmatprep.mubr.bf16.mxu0 0
    %918 = vmatmul.mubr.bf16.gmra.mrb[0].mxu0 %v877
    %v919 = vpop.f32.mrb[0].mxu0
    %v920 = vadd.f32 %v118, %v919
    %v921 = vpop.f32.mrb[0].mxu0
    %v922 = vpop.f32.mrb[0].mxu0
    %v923 = vadd.f32 %v118, %v922
    %v924 = vpop.f32.mrb[0].mxu0
    %925 = vmatprep.mubr.bf16.mxu0 0
    %926 = vmatmul.mubr.bf16.gmra.mrb[0].mxu0 %v878
    %v927 = vpop.f32.mrb[0].mxu0
    %v928 = vadd.f32 %v118, %v927
    %v929 = vpop.f32.mrb[0].mxu0
    %v930 = vpop.f32.mrb[0].mxu0
    %v931 = vadd.f32 %v118, %v930
    %v932 = vpop.f32.mrb[0].mxu0
    %933 = vmatprep.mubr.bf16.mxu0 0
    %934 = vmatmul.mubr.bf16.gmra.mrb[0].mxu0 %v879
    %v935 = vpop.f32.mrb[0].mxu0
    %v936 = vadd.f32 %v118, %v935
    %v937 = vpop.f32.mrb[0].mxu0
    %v938 = vpop.f32.mrb[0].mxu0
    %v939 = vadd.f32 %v118, %v938
    %v940 = vpop.f32.mrb[0].mxu0
    %941 = vmatprep.mubr.bf16.mxu0 0
    %942 = vmatmul.mubr.bf16.gmra.mrb[0].mxu0 %v880
    %v943 = vpop.f32.mrb[0].mxu0
    %v944 = vadd.f32 %v118, %v943
    %v945 = vpop.f32.mrb[0].mxu0
    %v946 = vpop.f32.mrb[0].mxu0
    %v947 = vadd.f32 %v118, %v946
    %v948 = vpop.f32.mrb[0].mxu0
    %949 = vmatprep.mubr.bf16.mxu0 0
    %950 = vmatmul.mubr.bf16.gmra.mrb[0].mxu0 %v881
    %v951 = vpop.f32.mrb[0].mxu0
    %v952 = vadd.f32 %v118, %v951
    %v953 = vpop.f32.mrb[0].mxu0
    %v954 = vpop.f32.mrb[0].mxu0
    %v955 = vadd.f32 %v118, %v954
    %v956 = vpop.f32.mrb[0].mxu0
    %957 = vmatprep.mubr.bf16.mxu0 0
    %958 = vmatmul.mubr.bf16.gmra.mrb[0].mxu0 %v882
    %v959 = vpop.f32.mrb[0].mxu0
    %v960 = vadd.f32 %v118, %v959
    %v961 = vpop.f32.mrb[0].mxu0
    %v962 = vpop.f32.mrb[0].mxu0
    %v963 = vadd.f32 %v118, %v962
    %v964 = vpop.f32.mrb[0].mxu0
    %965 = vmatprep.mubr.bf16.mxu0 0
    %966 = vmatmul.mubr.bf16.gmra.mrb[0].mxu0 %v883
    %v967 = vpop.f32.mrb[0].mxu0
    %v968 = vadd.f32 %v118, %v967
    %v969 = vpop.f32.mrb[0].mxu0
    %v970 = vpop.f32.mrb[0].mxu0
    %v971 = vadd.f32 %v118, %v970
    %v972 = vpop.f32.mrb[0].mxu0
    %973 = vmatprep.mubr.bf16.mxu0 0
    %974 = vmatmul.mubr.bf16.gmra.mrb[0].mxu0 %v884
    %v975 = vpop.f32.mrb[0].mxu0
    %v976 = vadd.f32 %v118, %v975
    %v977 = vpop.f32.mrb[0].mxu0
    %v978 = vpop.f32.mrb[0].mxu0
    %v979 = vadd.f32 %v118, %v978
    %v980 = vpop.f32.mrb[0].mxu0
    %981 = vdwg.mxu0
    %v982 = vpack.c.bf16 %v923, %v920
    %v983 = vpack.c.bf16 %v931, %v928
    %v984 = vpack.c.bf16 %v939, %v936
    %v985 = vpack.c.bf16 %v947, %v944
    %v986 = vpack.c.bf16 %v955, %v952
    %v987 = vpack.c.bf16 %v963, %v960
    %v988 = vpack.c.bf16 %v971, %v968
    %v989 = vpack.c.bf16 %v979, %v976
    %v990 = vtanh.bf16.pop %v982
    %v991 = vtanh.bf16.pop %v983
    %v992 = vtanh.bf16.pop %v984
    %v993 = vtanh.bf16.pop %v985
    %v994 = vtanh.bf16.pop %v986
    %v995 = vtanh.bf16.pop %v987
    %v996 = vtanh.bf16.pop %v988
    %v997 = vtanh.bf16.pop %v989
    %v998 = vmul.bf16 %v283, %v990
    %v999 = vmul.bf16 %v283, %v991
    %v1000 = vmul.bf16 %v283, %v992
    %v1001 = vmul.bf16 %v283, %v993
    %v1002 = vmul.bf16 %v283, %v994
    %v1003 = vmul.bf16 %v283, %v995
    %v1004 = vmul.bf16 %v283, %v996
    %v1005 = vmul.bf16 %v283, %v997
    %v1006 = vmul.bf16 %v998, 1051410091
    %v1007 = vmul.bf16 %v999, 1051410091
    %v1008 = vmul.bf16 %v1000, 1051410091
    %v1009 = vmul.bf16 %v1001, 1051410091
    %v1010 = vmul.bf16 %v1002, 1051410091
    %v1011 = vmul.bf16 %v1003, 1051410091
    %v1012 = vmul.bf16 %v1004, 1051410091
    %v1013 = vmul.bf16 %v1005, 1051410091
    %v1014 = vunpack.c.l.bf16 %v1006
    %v1015 = vunpack.c.h.bf16 %v1006
    %v1016 = vunpack.c.l.bf16 %v1007
    %v1017 = vunpack.c.h.bf16 %v1007
    %v1018 = vunpack.c.l.bf16 %v1008
    %v1019 = vunpack.c.h.bf16 %v1008
    %v1020 = vunpack.c.l.bf16 %v1009
    %v1021 = vunpack.c.h.bf16 %v1009
    %v1022 = vunpack.c.l.bf16 %v1010
    %v1023 = vunpack.c.h.bf16 %v1010
    %v1024 = vunpack.c.l.bf16 %v1011
    %v1025 = vunpack.c.h.bf16 %v1011
    %v1026 = vunpack.c.l.bf16 %v1012
    %v1027 = vunpack.c.h.bf16 %v1012
    %v1028 = vunpack.c.l.bf16 %v1013
    %v1029 = vunpack.c.h.bf16 %v1013
    %v1030 = vadd.f32 %v861, %v1014
    %v1031 = vadd.f32 %v862, %v1015
    %v1032 = vadd.f32 %v863, %v1016
    %v1033 = vadd.f32 %v864, %v1017
    %v1034 = vadd.f32 %v865, %v1018
    %v1035 = vadd.f32 %v866, %v1019
    %v1036 = vadd.f32 %v867, %v1020
    %v1037 = vadd.f32 %v868, %v1021
    %v1038 = vadd.f32 %v869, %v1022
    %v1039 = vadd.f32 %v870, %v1023
    %v1040 = vadd.f32 %v871, %v1024
    %v1041 = vadd.f32 %v872, %v1025
    %v1042 = vadd.f32 %v873, %v1026
    %v1043 = vadd.f32 %v874, %v1027
    %v1044 = vadd.f32 %v875, %v1028
    %v1045 = vadd.f32 %v876, %v1029
    %v1046 = vadd.bf16 %v877, %v998
    %v1047 = vadd.bf16 %v878, %v999
    %v1048 = vadd.bf16 %v879, %v1000
    %v1049 = vadd.bf16 %v880, %v1001
    %v1050 = vadd.bf16 %v881, %v1002
    %v1051 = vadd.bf16 %v882, %v1003
    %v1052 = vadd.bf16 %v883, %v1004
    %v1053 = vadd.bf16 %v884, %v1005
    %1054 = vmatprep.subr.bf16.mxu0 0
    %1055 = vmatpush1.bf16.msra.mxu0 %v152
    %1056 = vmatprep.subr.bf16.mxu0 0
    %1057 = vmatpush1.bf16.msra.mxu0 %v153
    %1058 = vmatprep.subr.bf16.mxu0 0
    %1059 = vmatpush1.bf16.msra.mxu0 %v154
    %1060 = vmatprep.subr.bf16.mxu0 0
    %1061 = vmatpush1.bf16.msra.mxu0 %v155
    %1062 = vmatprep.subr.bf16.mxu0 0
    %1063 = vmatpush1.bf16.msra.mxu0 %v156
    %1064 = vmatprep.subr.bf16.mxu0 0
    %1065 = vmatpush1.bf16.msra.mxu0 %v157
    %1066 = vmatprep.subr.bf16.mxu0 0
    %1067 = vmatpush1.bf16.msra.mxu0 %v158
    %1068 = vmatprep.subr.bf16.mxu0 0
    %1069 = vmatpush1.bf16.msra.mxu0 %v159
    %1070 = vmatprep.subr.bf16.mxu0 0
    %1071 = vmatpush1.bf16.msra.mxu0 0
    %1072 = vmatprep.subr.bf16.mxu0 0
    %1073 = vmatpush1.bf16.msra.mxu0 0
    %1074 = vmatprep.subr.bf16.mxu0 0
    %1075 = vmatpush1.bf16.msra.mxu0 0
    %1076 = vmatprep.subr.bf16.mxu0 0
    %1077 = vmatpush1.bf16.msra.mxu0 0
    %1078 = vmatprep.subr.bf16.mxu0 0
    %1079 = vmatpush1.bf16.msra.mxu0 0
    %1080 = vmatprep.subr.bf16.mxu0 0
    %1081 = vmatpush1.bf16.msra.mxu0 0
    %1082 = vmatprep.subr.bf16.mxu0 0
    %1083 = vmatpush1.bf16.msra.mxu0 0
    %1084 = vmatprep.subr.bf16.mxu0 0
    %1085 = vmatpush1.bf16.msra.mxu0 0
    %1086 = vmatprep.mubr.bf16.mxu0 0
    %1087 = vmatmul.mubr.bf16.gmra.mrb[0].mxu0 %v1046
    %v1088 = vpop.f32.mrb[0].mxu0
    %v1089 = vadd.f32 %v118, %v1088
    %v1090 = vpop.f32.mrb[0].mxu0
    %v1091 = vpop.f32.mrb[0].mxu0
    %v1092 = vadd.f32 %v118, %v1091
    %v1093 = vpop.f32.mrb[0].mxu0
    %1094 = vmatprep.mubr.bf16.mxu0 0
    %1095 = vmatmul.mubr.bf16.gmra.mrb[0].mxu0 %v1047
    %v1096 = vpop.f32.mrb[0].mxu0
    %v1097 = vadd.f32 %v118, %v1096
    %v1098 = vpop.f32.mrb[0].mxu0
    %v1099 = vpop.f32.mrb[0].mxu0
    %v1100 = vadd.f32 %v118, %v1099
    %v1101 = vpop.f32.mrb[0].mxu0
    %1102 = vmatprep.mubr.bf16.mxu0 0
    %1103 = vmatmul.mubr.bf16.gmra.mrb[0].mxu0 %v1048
    %v1104 = vpop.f32.mrb[0].mxu0
    %v1105 = vadd.f32 %v118, %v1104
    %v1106 = vpop.f32.mrb[0].mxu0
    %v1107 = vpop.f32.mrb[0].mxu0
    %v1108 = vadd.f32 %v118, %v1107
    %v1109 = vpop.f32.mrb[0].mxu0
    %1110 = vmatprep.mubr.bf16.mxu0 0
    %1111 = vmatmul.mubr.bf16.gmra.mrb[0].mxu0 %v1049
    %v1112 = vpop.f32.mrb[0].mxu0
    %v1113 = vadd.f32 %v118, %v1112
    %v1114 = vpop.f32.mrb[0].mxu0
    %v1115 = vpop.f32.mrb[0].mxu0
    %v1116 = vadd.f32 %v118, %v1115
    %v1117 = vpop.f32.mrb[0].mxu0
    %1118 = vmatprep.mubr.bf16.mxu0 0
    %1119 = vmatmul.mubr.bf16.gmra.mrb[0].mxu0 %v1050
    %v1120 = vpop.f32.mrb[0].mxu0
    %v1121 = vadd.f32 %v118, %v1120
    %v1122 = vpop.f32.mrb[0].mxu0
    %v1123 = vpop.f32.mrb[0].mxu0
    %v1124 = vadd.f32 %v118, %v1123
    %v1125 = vpop.f32.mrb[0].mxu0
    %1126 = vmatprep.mubr.bf16.mxu0 0
    %1127 = vmatmul.mubr.bf16.gmra.mrb[0].mxu0 %v1051
    %v1128 = vpop.f32.mrb[0].mxu0
    %v1129 = vadd.f32 %v118, %v1128
    %v1130 = vpop.f32.mrb[0].mxu0
    %v1131 = vpop.f32.mrb[0].mxu0
    %v1132 = vadd.f32 %v118, %v1131
    %v1133 = vpop.f32.mrb[0].mxu0
    %1134 = vmatprep.mubr.bf16.mxu0 0
    %1135 = vmatmul.mubr.bf16.gmra.mrb[0].mxu0 %v1052
    %v1136 = vpop.f32.mrb[0].mxu0
    %v1137 = vadd.f32 %v118, %v1136
    %v1138 = vpop.f32.mrb[0].mxu0
    %v1139 = vpop.f32.mrb[0].mxu0
    %v1140 = vadd.f32 %v118, %v1139
    %v1141 = vpop.f32.mrb[0].mxu0
    %1142 = vmatprep.mubr.bf16.mxu0 0
    %1143 = vmatmul.mubr.bf16.gmra.mrb[0].mxu0 %v1053
    %v1144 = vpop.f32.mrb[0].mxu0
    %v1145 = vadd.f32 %v118, %v1144
    %v1146 = vpop.f32.mrb[0].mxu0
    %v1147 = vpop.f32.mrb[0].mxu0
    %v1148 = vadd.f32 %v118, %v1147
    %v1149 = vpop.f32.mrb[0].mxu0
    %1150 = vdwg.mxu0
    %v1151 = vpack.c.bf16 %v1092, %v1089
    %v1152 = vpack.c.bf16 %v1100, %v1097
    %v1153 = vpack.c.bf16 %v1108, %v1105
    %v1154 = vpack.c.bf16 %v1116, %v1113
    %v1155 = vpack.c.bf16 %v1124, %v1121
    %v1156 = vpack.c.bf16 %v1132, %v1129
    %v1157 = vpack.c.bf16 %v1140, %v1137
    %v1158 = vpack.c.bf16 %v1148, %v1145
    %v1159 = vtanh.bf16.pop %v1151
    %v1160 = vtanh.bf16.pop %v1152
    %v1161 = vtanh.bf16.pop %v1153
    %v1162 = vtanh.bf16.pop %v1154
    %v1163 = vtanh.bf16.pop %v1155
    %v1164 = vtanh.bf16.pop %v1156
    %v1165 = vtanh.bf16.pop %v1157
    %v1166 = vtanh.bf16.pop %v1158
    %v1167 = vmul.bf16 %v283, %v1159
    %v1168 = vmul.bf16 %v283, %v1160
    %v1169 = vmul.bf16 %v283, %v1161
    %v1170 = vmul.bf16 %v283, %v1162
    %v1171 = vmul.bf16 %v283, %v1163
    %v1172 = vmul.bf16 %v283, %v1164
    %v1173 = vmul.bf16 %v283, %v1165
    %v1174 = vmul.bf16 %v283, %v1166
    %v1175 = vmul.bf16 %v1167, 1059798827
    %v1176 = vmul.bf16 %v1168, 1059798827
    %v1177 = vmul.bf16 %v1169, 1059798827
    %v1178 = vmul.bf16 %v1170, 1059798827
    %v1179 = vmul.bf16 %v1171, 1059798827
    %v1180 = vmul.bf16 %v1172, 1059798827
    %v1181 = vmul.bf16 %v1173, 1059798827
    %v1182 = vmul.bf16 %v1174, 1059798827
    %v1183 = vunpack.c.l.bf16 %v1175
    %v1184 = vunpack.c.h.bf16 %v1175
    %v1185 = vunpack.c.l.bf16 %v1176
    %v1186 = vunpack.c.h.bf16 %v1176
    %v1187 = vunpack.c.l.bf16 %v1177
    %v1188 = vunpack.c.h.bf16 %v1177
    %v1189 = vunpack.c.l.bf16 %v1178
    %v1190 = vunpack.c.h.bf16 %v1178
    %v1191 = vunpack.c.l.bf16 %v1179
    %v1192 = vunpack.c.h.bf16 %v1179
    %v1193 = vunpack.c.l.bf16 %v1180
    %v1194 = vunpack.c.h.bf16 %v1180
    %v1195 = vunpack.c.l.bf16 %v1181
    %v1196 = vunpack.c.h.bf16 %v1181
    %v1197 = vunpack.c.l.bf16 %v1182
    %v1198 = vunpack.c.h.bf16 %v1182
    %v1199 = vadd.f32 %v1030, %v1183
    %v1200 = vadd.f32 %v1031, %v1184
    %v1201 = vadd.f32 %v1032, %v1185
    %v1202 = vadd.f32 %v1033, %v1186
    %v1203 = vadd.f32 %v1034, %v1187
    %v1204 = vadd.f32 %v1035, %v1188
    %v1205 = vadd.f32 %v1036, %v1189
    %v1206 = vadd.f32 %v1037, %v1190
    %v1207 = vadd.f32 %v1038, %v1191
    %v1208 = vadd.f32 %v1039, %v1192
    %v1209 = vadd.f32 %v1040, %v1193
    %v1210 = vadd.f32 %v1041, %v1194
    %v1211 = vadd.f32 %v1042, %v1195
    %v1212 = vadd.f32 %v1043, %v1196
    %v1213 = vadd.f32 %v1044, %v1197
    %v1214 = vadd.f32 %v1045, %v1198
    %v1215 = vadd.bf16 %v877, %v1167
    %v1216 = vadd.bf16 %v878, %v1168
    %v1217 = vadd.bf16 %v879, %v1169
    %v1218 = vadd.bf16 %v880, %v1170
    %v1219 = vadd.bf16 %v881, %v1171
    %v1220 = vadd.bf16 %v882, %v1172
    %v1221 = vadd.bf16 %v883, %v1173
    %v1222 = vadd.bf16 %v884, %v1174
    %1223 = vmatprep.subr.bf16.mxu0 0
    %1224 = vmatpush1.bf16.msra.mxu0 %v152
    %1225 = vmatprep.subr.bf16.mxu0 0
    %1226 = vmatpush1.bf16.msra.mxu0 %v153
    %1227 = vmatprep.subr.bf16.mxu0 0
    %1228 = vmatpush1.bf16.msra.mxu0 %v154
    %1229 = vmatprep.subr.bf16.mxu0 0
    %1230 = vmatpush1.bf16.msra.mxu0 %v155
    %1231 = vmatprep.subr.bf16.mxu0 0
    %1232 = vmatpush1.bf16.msra.mxu0 %v156
    %1233 = vmatprep.subr.bf16.mxu0 0
    %1234 = vmatpush1.bf16.msra.mxu0 %v157
    %1235 = vmatprep.subr.bf16.mxu0 0
    %1236 = vmatpush1.bf16.msra.mxu0 %v158
    %1237 = vmatprep.subr.bf16.mxu0 0
    %1238 = vmatpush1.bf16.msra.mxu0 %v159
    %1239 = vmatprep.subr.bf16.mxu0 0
    %1240 = vmatpush1.bf16.msra.mxu0 0
    %1241 = vmatprep.subr.bf16.mxu0 0
    %1242 = vmatpush1.bf16.msra.mxu0 0
    %1243 = vmatprep.subr.bf16.mxu0 0
    %1244 = vmatpush1.bf16.msra.mxu0 0
    %1245 = vmatprep.subr.bf16.mxu0 0
    %1246 = vmatpush1.bf16.msra.mxu0 0
    %1247 = vmatprep.subr.bf16.mxu0 0
    %1248 = vmatpush1.bf16.msra.mxu0 0
    %1249 = vmatprep.subr.bf16.mxu0 0
    %1250 = vmatpush1.bf16.msra.mxu0 0
    %1251 = vmatprep.subr.bf16.mxu0 0
    %1252 = vmatpush1.bf16.msra.mxu0 0
    %1253 = vmatprep.subr.bf16.mxu0 0
    %1254 = vmatpush1.bf16.msra.mxu0 0
    %1255 = vmatprep.mubr.bf16.mxu0 0
    %1256 = vmatmul.mubr.bf16.gmra.mrb[0].mxu0 %v1215
    %v1257 = vpop.f32.mrb[0].mxu0
    %v1258 = vadd.f32 %v118, %v1257
    %v1259 = vpop.f32.mrb[0].mxu0
    %v1260 = vpop.f32.mrb[0].mxu0
    %v1261 = vadd.f32 %v118, %v1260
    %v1262 = vpop.f32.mrb[0].mxu0
    %1263 = vmatprep.mubr.bf16.mxu0 0
    %1264 = vmatmul.mubr.bf16.gmra.mrb[0].mxu0 %v1216
    %v1265 = vpop.f32.mrb[0].mxu0
    %v1266 = vadd.f32 %v118, %v1265
    %v1267 = vpop.f32.mrb[0].mxu0
    %v1268 = vpop.f32.mrb[0].mxu0
    %v1269 = vadd.f32 %v118, %v1268
    %v1270 = vpop.f32.mrb[0].mxu0
    %1271 = vmatprep.mubr.bf16.mxu0 0
    %1272 = vmatmul.mubr.bf16.gmra.mrb[0].mxu0 %v1217
    %v1273 = vpop.f32.mrb[0].mxu0
    %v1274 = vadd.f32 %v118, %v1273
    %v1275 = vpop.f32.mrb[0].mxu0
    %v1276 = vpop.f32.mrb[0].mxu0
    %v1277 = vadd.f32 %v118, %v1276
    %v1278 = vpop.f32.mrb[0].mxu0
    %1279 = vmatprep.mubr.bf16.mxu0 0
    %1280 = vmatmul.mubr.bf16.gmra.mrb[0].mxu0 %v1218
    %v1281 = vpop.f32.mrb[0].mxu0
    %v1282 = vadd.f32 %v118, %v1281
    %v1283 = vpop.f32.mrb[0].mxu0
    %v1284 = vpop.f32.mrb[0].mxu0
    %v1285 = vadd.f32 %v118, %v1284
    %v1286 = vpop.f32.mrb[0].mxu0
    %1287 = vmatprep.mubr.bf16.mxu0 0
    %1288 = vmatmul.mubr.bf16.gmra.mrb[0].mxu0 %v1219
    %v1289 = vpop.f32.mrb[0].mxu0
    %v1290 = vadd.f32 %v118, %v1289
    %v1291 = vpop.f32.mrb[0].mxu0
    %v1292 = vpop.f32.mrb[0].mxu0
    %v1293 = vadd.f32 %v118, %v1292
    %v1294 = vpop.f32.mrb[0].mxu0
    %1295 = vmatprep.mubr.bf16.mxu0 0
    %1296 = vmatmul.mubr.bf16.gmra.mrb[0].mxu0 %v1220
    %v1297 = vpop.f32.mrb[0].mxu0
    %v1298 = vadd.f32 %v118, %v1297
    %v1299 = vpop.f32.mrb[0].mxu0
    %v1300 = vpop.f32.mrb[0].mxu0
    %v1301 = vadd.f32 %v118, %v1300
    %v1302 = vpop.f32.mrb[0].mxu0
    %1303 = vmatprep.mubr.bf16.mxu0 0
    %1304 = vmatmul.mubr.bf16.gmra.mrb[0].mxu0 %v1221
    %v1305 = vpop.f32.mrb[0].mxu0
    %v1306 = vadd.f32 %v118, %v1305
    %v1307 = vpop.f32.mrb[0].mxu0
    %v1308 = vpop.f32.mrb[0].mxu0
    %v1309 = vadd.f32 %v118, %v1308
    %v1310 = vpop.f32.mrb[0].mxu0
    %1311 = vmatprep.mubr.bf16.mxu0 0
    %1312 = vmatmul.mubr.bf16.gmra.mrb[0].mxu0 %v1222
    %v1313 = vpop.f32.mrb[0].mxu0
    %v1314 = vadd.f32 %v118, %v1313
    %v1315 = vpop.f32.mrb[0].mxu0
    %v1316 = vpop.f32.mrb[0].mxu0
    %v1317 = vadd.f32 %v118, %v1316
    %v1318 = vpop.f32.mrb[0].mxu0
    %1319 = vdwg.mxu0
    %v1320 = vpack.c.bf16 %v1261, %v1258
    %v1321 = vpack.c.bf16 %v1269, %v1266
    %v1322 = vpack.c.bf16 %v1277, %v1274
    %v1323 = vpack.c.bf16 %v1285, %v1282
    %v1324 = vpack.c.bf16 %v1293, %v1290
    %v1325 = vpack.c.bf16 %v1301, %v1298
    %v1326 = vpack.c.bf16 %v1309, %v1306
    %v1327 = vpack.c.bf16 %v1317, %v1314
    %v1328 = vtanh.bf16.pop %v1320
    %v1329 = vtanh.bf16.pop %v1321
    %v1330 = vtanh.bf16.pop %v1322
    %v1331 = vtanh.bf16.pop %v1323
    %v1332 = vtanh.bf16.pop %v1324
    %v1333 = vtanh.bf16.pop %v1325
    %v1334 = vtanh.bf16.pop %v1326
    %v1335 = vtanh.bf16.pop %v1327
    %v1336 = vmul.bf16 %v625, %v1328
    %v1337 = vmul.bf16 %v625, %v1329
    %v1338 = vmul.bf16 %v625, %v1330
    %v1339 = vmul.bf16 %v625, %v1331
    %v1340 = vmul.bf16 %v625, %v1332
    %v1341 = vmul.bf16 %v625, %v1333
    %v1342 = vmul.bf16 %v625, %v1334
    %v1343 = vmul.bf16 %v625, %v1335
    %v1344 = vmul.bf16 %v1336, 1051410091
    %v1345 = vmul.bf16 %v1337, 1051410091
    %v1346 = vmul.bf16 %v1338, 1051410091
    %v1347 = vmul.bf16 %v1339, 1051410091
    %v1348 = vmul.bf16 %v1340, 1051410091
    %v1349 = vmul.bf16 %v1341, 1051410091
    %v1350 = vmul.bf16 %v1342, 1051410091
    %v1351 = vmul.bf16 %v1343, 1051410091
    %v1352 = vunpack.c.l.bf16 %v1344
    %v1353 = vunpack.c.h.bf16 %v1344
    %v1354 = vunpack.c.l.bf16 %v1345
    %v1355 = vunpack.c.h.bf16 %v1345
    %v1356 = vunpack.c.l.bf16 %v1346
    %v1357 = vunpack.c.h.bf16 %v1346
    %v1358 = vunpack.c.l.bf16 %v1347
    %v1359 = vunpack.c.h.bf16 %v1347
    %v1360 = vunpack.c.l.bf16 %v1348
    %v1361 = vunpack.c.h.bf16 %v1348
    %v1362 = vunpack.c.l.bf16 %v1349
    %v1363 = vunpack.c.h.bf16 %v1349
    %v1364 = vunpack.c.l.bf16 %v1350
    %v1365 = vunpack.c.h.bf16 %v1350
    %v1366 = vunpack.c.l.bf16 %v1351
    %v1367 = vunpack.c.h.bf16 %v1351
    %v1368 = vadd.f32 %v1199, %v1352
    %v1369 = vadd.f32 %v1200, %v1353
    %v1370 = vadd.f32 %v1201, %v1354
    %v1371 = vadd.f32 %v1202, %v1355
    %v1372 = vadd.f32 %v1203, %v1356
    %v1373 = vadd.f32 %v1204, %v1357
    %v1374 = vadd.f32 %v1205, %v1358
    %v1375 = vadd.f32 %v1206, %v1359
    %v1376 = vadd.f32 %v1207, %v1360
    %v1377 = vadd.f32 %v1208, %v1361
    %v1378 = vadd.f32 %v1209, %v1362
    %v1379 = vadd.f32 %v1210, %v1363
    %v1380 = vadd.f32 %v1211, %v1364
    %v1381 = vadd.f32 %v1212, %v1365
    %v1382 = vadd.f32 %v1213, %v1366
    %v1383 = vadd.f32 %v1214, %v1367
    %v1384 = vadd.bf16 %v877, %v1336
    %v1385 = vadd.bf16 %v878, %v1337
    %v1386 = vadd.bf16 %v879, %v1338
    %v1387 = vadd.bf16 %v880, %v1339
    %v1388 = vadd.bf16 %v881, %v1340
    %v1389 = vadd.bf16 %v882, %v1341
    %v1390 = vadd.bf16 %v883, %v1342
    %v1391 = vadd.bf16 %v884, %v1343
    %1392 = vmatprep.subr.bf16.mxu0 0
    %1393 = vmatpush1.bf16.msra.mxu0 %v152
    %1394 = vmatprep.subr.bf16.mxu0 0
    %1395 = vmatpush1.bf16.msra.mxu0 %v153
    %1396 = vmatprep.subr.bf16.mxu0 0
    %1397 = vmatpush1.bf16.msra.mxu0 %v154
    %1398 = vmatprep.subr.bf16.mxu0 0
    %1399 = vmatpush1.bf16.msra.mxu0 %v155
    %1400 = vmatprep.subr.bf16.mxu0 0
    %1401 = vmatpush1.bf16.msra.mxu0 %v156
    %1402 = vmatprep.subr.bf16.mxu0 0
    %1403 = vmatpush1.bf16.msra.mxu0 %v157
    %1404 = vmatprep.subr.bf16.mxu0 0
    %1405 = vmatpush1.bf16.msra.mxu0 %v158
    %1406 = vmatprep.subr.bf16.mxu0 0
    %1407 = vmatpush1.bf16.msra.mxu0 %v159
    %1408 = vmatprep.subr.bf16.mxu0 0
    %1409 = vmatpush1.bf16.msra.mxu0 0
    %1410 = vmatprep.subr.bf16.mxu0 0
    %1411 = vmatpush1.bf16.msra.mxu0 0
    %1412 = vmatprep.subr.bf16.mxu0 0
    %1413 = vmatpush1.bf16.msra.mxu0 0
    %1414 = vmatprep.subr.bf16.mxu0 0
    %1415 = vmatpush1.bf16.msra.mxu0 0
    %1416 = vmatprep.subr.bf16.mxu0 0
    %1417 = vmatpush1.bf16.msra.mxu0 0
    %1418 = vmatprep.subr.bf16.mxu0 0
    %1419 = vmatpush1.bf16.msra.mxu0 0
    %1420 = vmatprep.subr.bf16.mxu0 0
    %1421 = vmatpush1.bf16.msra.mxu0 0
    %1422 = vmatprep.subr.bf16.mxu0 0
    %1423 = vmatpush1.bf16.msra.mxu0 0
    %1424 = vmatprep.mubr.bf16.mxu0 0
    %1425 = vmatmul.mubr.bf16.gmra.mrb[0].mxu0 %v1384
    %v1426 = vpop.f32.mrb[0].mxu0
    %v1427 = vadd.f32 %v118, %v1426
    %v1428 = vpop.f32.mrb[0].mxu0
    %v1429 = vpop.f32.mrb[0].mxu0
    %v1430 = vadd.f32 %v118, %v1429
    %v1431 = vpop.f32.mrb[0].mxu0
    %1432 = vmatprep.mubr.bf16.mxu0 0
    %1433 = vmatmul.mubr.bf16.gmra.mrb[0].mxu0 %v1385
    %v1434 = vpop.f32.mrb[0].mxu0
    %v1435 = vadd.f32 %v118, %v1434
    %v1436 = vpop.f32.mrb[0].mxu0
    %v1437 = vpop.f32.mrb[0].mxu0
    %v1438 = vadd.f32 %v118, %v1437
    %v1439 = vpop.f32.mrb[0].mxu0
    %1440 = vmatprep.mubr.bf16.mxu0 0
    %1441 = vmatmul.mubr.bf16.gmra.mrb[0].mxu0 %v1386
    %v1442 = vpop.f32.mrb[0].mxu0
    %v1443 = vadd.f32 %v118, %v1442
    %v1444 = vpop.f32.mrb[0].mxu0
    %v1445 = vpop.f32.mrb[0].mxu0
    %v1446 = vadd.f32 %v118, %v1445
    %v1447 = vpop.f32.mrb[0].mxu0
    %1448 = vmatprep.mubr.bf16.mxu0 0
    %1449 = vmatmul.mubr.bf16.gmra.mrb[0].mxu0 %v1387
    %v1450 = vpop.f32.mrb[0].mxu0
    %v1451 = vadd.f32 %v118, %v1450
    %v1452 = vpop.f32.mrb[0].mxu0
    %v1453 = vpop.f32.mrb[0].mxu0
    %v1454 = vadd.f32 %v118, %v1453
    %v1455 = vpop.f32.mrb[0].mxu0
    %1456 = vmatprep.mubr.bf16.mxu0 0
    %1457 = vmatmul.mubr.bf16.gmra.mrb[0].mxu0 %v1388
    %v1458 = vpop.f32.mrb[0].mxu0
    %v1459 = vadd.f32 %v118, %v1458
    %v1460 = vpop.f32.mrb[0].mxu0
    %v1461 = vpop.f32.mrb[0].mxu0
    %v1462 = vadd.f32 %v118, %v1461
    %v1463 = vpop.f32.mrb[0].mxu0
    %1464 = vmatprep.mubr.bf16.mxu0 0
    %1465 = vmatmul.mubr.bf16.gmra.mrb[0].mxu0 %v1389
    %v1466 = vpop.f32.mrb[0].mxu0
    %v1467 = vadd.f32 %v118, %v1466
    %v1468 = vpop.f32.mrb[0].mxu0
    %v1469 = vpop.f32.mrb[0].mxu0
    %v1470 = vadd.f32 %v118, %v1469
    %v1471 = vpop.f32.mrb[0].mxu0
    %1472 = vmatprep.mubr.bf16.mxu0 0
    %1473 = vmatmul.mubr.bf16.gmra.mrb[0].mxu0 %v1390
    %v1474 = vpop.f32.mrb[0].mxu0
    %v1475 = vadd.f32 %v118, %v1474
    %v1476 = vpop.f32.mrb[0].mxu0
    %v1477 = vpop.f32.mrb[0].mxu0
    %v1478 = vadd.f32 %v118, %v1477
    %v1479 = vpop.f32.mrb[0].mxu0
    %1480 = vmatprep.mubr.bf16.mxu0 0
    %1481 = vmatmul.mubr.bf16.gmra.mrb[0].mxu0 %v1391
    %v1482 = vpop.f32.mrb[0].mxu0
    %v1483 = vadd.f32 %v118, %v1482
    %v1484 = vpop.f32.mrb[0].mxu0
    %v1485 = vpop.f32.mrb[0].mxu0
    %v1486 = vadd.f32 %v118, %v1485
    %v1487 = vpop.f32.mrb[0].mxu0
    %1488 = vdwg.mxu0
    %v1489 = vpack.c.bf16 %v1430, %v1427
    %v1490 = vpack.c.bf16 %v1438, %v1435
    %v1491 = vpack.c.bf16 %v1446, %v1443
    %v1492 = vpack.c.bf16 %v1454, %v1451
    %v1493 = vpack.c.bf16 %v1462, %v1459
    %v1494 = vpack.c.bf16 %v1470, %v1467
    %v1495 = vpack.c.bf16 %v1478, %v1475
    %v1496 = vpack.c.bf16 %v1486, %v1483
    %v1497 = vtanh.bf16.pop %v1489
    %v1498 = vtanh.bf16.pop %v1490
    %v1499 = vtanh.bf16.pop %v1491
    %v1500 = vtanh.bf16.pop %v1492
    %v1501 = vtanh.bf16.pop %v1493
    %v1502 = vtanh.bf16.pop %v1494
    %v1503 = vtanh.bf16.pop %v1495
    %v1504 = vtanh.bf16.pop %v1496
    %v1505 = vunpack.c.l.bf16 %v1497
    %v1506 = vunpack.c.h.bf16 %v1497
    %v1507 = vunpack.c.l.bf16 %v1498
    %v1508 = vunpack.c.h.bf16 %v1498
    %v1509 = vunpack.c.l.bf16 %v1499
    %v1510 = vunpack.c.h.bf16 %v1499
    %v1511 = vunpack.c.l.bf16 %v1500
    %v1512 = vunpack.c.h.bf16 %v1500
    %v1513 = vunpack.c.l.bf16 %v1501
    %v1514 = vunpack.c.h.bf16 %v1501
    %v1515 = vunpack.c.l.bf16 %v1502
    %v1516 = vunpack.c.h.bf16 %v1502
    %v1517 = vunpack.c.l.bf16 %v1503
    %v1518 = vunpack.c.h.bf16 %v1503
    %v1519 = vunpack.c.l.bf16 %v1504
    %v1520 = vunpack.c.h.bf16 %v1504
    %v1521 = vmul.f32 %v812, %v1505
    %v1522 = vmul.f32 %v812, %v1506
    %v1523 = vmul.f32 %v812, %v1507
    %v1524 = vmul.f32 %v812, %v1508
    %v1525 = vmul.f32 %v812, %v1509
    %v1526 = vmul.f32 %v812, %v1510
    %v1527 = vmul.f32 %v812, %v1511
    %v1528 = vmul.f32 %v812, %v1512
    %v1529 = vmul.f32 %v812, %v1513
    %v1530 = vmul.f32 %v812, %v1514
    %v1531 = vmul.f32 %v812, %v1515
    %v1532 = vmul.f32 %v812, %v1516
    %v1533 = vmul.f32 %v812, %v1517
    %v1534 = vmul.f32 %v812, %v1518
    %v1535 = vmul.f32 %v812, %v1519
    %v1536 = vmul.f32 %v812, %v1520
    %v1537 = vadd.f32 %v1368, %v1521
    %v1538 = vadd.f32 %v1369, %v1522
    %v1539 = vadd.f32 %v1370, %v1523
    %v1540 = vadd.f32 %v1371, %v1524
    %v1541 = vadd.f32 %v1372, %v1525
    %v1542 = vadd.f32 %v1373, %v1526
    %v1543 = vadd.f32 %v1374, %v1527
    %v1544 = vadd.f32 %v1375, %v1528
    %v1545 = vadd.f32 %v1376, %v1529
    %v1546 = vadd.f32 %v1377, %v1530
    %v1547 = vadd.f32 %v1378, %v1531
    %v1548 = vadd.f32 %v1379, %v1532
    %v1549 = vadd.f32 %v1380, %v1533
    %v1550 = vadd.f32 %v1381, %v1534
    %v1551 = vadd.f32 %v1382, %v1535
    %v1552 = vadd.f32 %v1383, %v1536
    %1553 = vst [vmem:[#allocation8 + $0x80] sm:$0xff] %v1537
    %1554 = vst [vmem:[#allocation8 + $0x88] sm:$0xff] %v1538
    %1555 = vst [vmem:[#allocation8 + $0x90] sm:$0xff] %v1539
    %1556 = vst [vmem:[#allocation8 + $0x98] sm:$0xff] %v1540
    %1557 = vst [vmem:[#allocation8 + $0xa0] sm:$0xff] %v1541
    %1558 = vst [vmem:[#allocation8 + $0xa8] sm:$0xff] %v1542
    %1559 = vst [vmem:[#allocation8 + $0xb0] sm:$0xff] %v1543
    %1560 = vst [vmem:[#allocation8 + $0xb8] sm:$0xff] %v1544
    %1561 = vst [vmem:[#allocation8 + $0xc0] sm:$0xff] %v1545
    %1562 = vst [vmem:[#allocation8 + $0xc8] sm:$0xff] %v1546
    %1563 = vst [vmem:[#allocation8 + $0xd0] sm:$0xff] %v1547
    %1564 = vst [vmem:[#allocation8 + $0xd8] sm:$0xff] %v1548
    %1565 = vst [vmem:[#allocation8 + $0xe0] sm:$0xff] %v1549
    %1566 = vst [vmem:[#allocation8 + $0xe8] sm:$0xff] %v1550
    %1567 = vst [vmem:[#allocation8 + $0xf0] sm:$0xff] %v1551
    %1568 = vst [vmem:[#allocation8 + $0xf8] sm:$0xff] %v1552
    %v1569 = vld [vmem:[#allocation3 + $0x100] sm:$0xff]
    %v1570 = vld [vmem:[#allocation3 + $0x108] sm:$0xff]
    %v1571 = vld [vmem:[#allocation3 + $0x110] sm:$0xff]
    %v1572 = vld [vmem:[#allocation3 + $0x118] sm:$0xff]
    %v1573 = vld [vmem:[#allocation3 + $0x120] sm:$0xff]
    %v1574 = vld [vmem:[#allocation3 + $0x128] sm:$0xff]
    %v1575 = vld [vmem:[#allocation3 + $0x130] sm:$0xff]
    %v1576 = vld [vmem:[#allocation3 + $0x138] sm:$0xff]
    %v1577 = vld [vmem:[#allocation3 + $0x140] sm:$0xff]
    %v1578 = vld [vmem:[#allocation3 + $0x148] sm:$0xff]
    %v1579 = vld [vmem:[#allocation3 + $0x150] sm:$0xff]
    %v1580 = vld [vmem:[#allocation3 + $0x158] sm:$0xff]
    %v1581 = vld [vmem:[#allocation3 + $0x160] sm:$0xff]
    %v1582 = vld [vmem:[#allocation3 + $0x168] sm:$0xff]
    %v1583 = vld [vmem:[#allocation3 + $0x170] sm:$0xff]
    %v1584 = vld [vmem:[#allocation3 + $0x178] sm:$0xff]
    %v1585 = vpack.c.bf16 %v1570, %v1569
    %v1586 = vpack.c.bf16 %v1572, %v1571
    %v1587 = vpack.c.bf16 %v1574, %v1573
    %v1588 = vpack.c.bf16 %v1576, %v1575
    %v1589 = vpack.c.bf16 %v1578, %v1577
    %v1590 = vpack.c.bf16 %v1580, %v1579
    %v1591 = vpack.c.bf16 %v1582, %v1581
    %v1592 = vpack.c.bf16 %v1584, %v1583
    %1593 = vmatprep.subr.bf16.mxu0 0
    %1594 = vmatpush1.bf16.msra.mxu0 %v152
    %1595 = vmatprep.subr.bf16.mxu0 0
    %1596 = vmatpush1.bf16.msra.mxu0 %v153
    %1597 = vmatprep.subr.bf16.mxu0 0
    %1598 = vmatpush1.bf16.msra.mxu0 %v154
    %1599 = vmatprep.subr.bf16.mxu0 0
    %1600 = vmatpush1.bf16.msra.mxu0 %v155
    %1601 = vmatprep.subr.bf16.mxu0 0
    %1602 = vmatpush1.bf16.msra.mxu0 %v156
    %1603 = vmatprep.subr.bf16.mxu0 0
    %1604 = vmatpush1.bf16.msra.mxu0 %v157
    %1605 = vmatprep.subr.bf16.mxu0 0
    %1606 = vmatpush1.bf16.msra.mxu0 %v158
    %1607 = vmatprep.subr.bf16.mxu0 0
    %1608 = vmatpush1.bf16.msra.mxu0 %v159
    %1609 = vmatprep.subr.bf16.mxu0 0
    %1610 = vmatpush1.bf16.msra.mxu0 0
    %1611 = vmatprep.subr.bf16.mxu0 0
    %1612 = vmatpush1.bf16.msra.mxu0 0
    %1613 = vmatprep.subr.bf16.mxu0 0
    %1614 = vmatpush1.bf16.msra.mxu0 0
    %1615 = vmatprep.subr.bf16.mxu0 0
    %1616 = vmatpush1.bf16.msra.mxu0 0
    %1617 = vmatprep.subr.bf16.mxu0 0
    %1618 = vmatpush1.bf16.msra.mxu0 0
    %1619 = vmatprep.subr.bf16.mxu0 0
    %1620 = vmatpush1.bf16.msra.mxu0 0
    %1621 = vmatprep.subr.bf16.mxu0 0
    %1622 = vmatpush1.bf16.msra.mxu0 0
    %1623 = vmatprep.subr.bf16.mxu0 0
    %1624 = vmatpush1.bf16.msra.mxu0 0
    %1625 = vmatprep.mubr.bf16.mxu0 0
    %1626 = vmatmul.mubr.bf16.gmra.mrb[0].mxu0 %v1585
    %v1627 = vpop.f32.mrb[0].mxu0
    %v1628 = vadd.f32 %v118, %v1627
    %v1629 = vpop.f32.mrb[0].mxu0
    %v1630 = vpop.f32.mrb[0].mxu0
    %v1631 = vadd.f32 %v118, %v1630
    %v1632 = vpop.f32.mrb[0].mxu0
    %1633 = vmatprep.mubr.bf16.mxu0 0
    %1634 = vmatmul.mubr.bf16.gmra.mrb[0].mxu0 %v1586
    %v1635 = vpop.f32.mrb[0].mxu0
    %v1636 = vadd.f32 %v118, %v1635
    %v1637 = vpop.f32.mrb[0].mxu0
    %v1638 = vpop.f32.mrb[0].mxu0
    %v1639 = vadd.f32 %v118, %v1638
    %v1640 = vpop.f32.mrb[0].mxu0
    %1641 = vmatprep.mubr.bf16.mxu0 0
    %1642 = vmatmul.mubr.bf16.gmra.mrb[0].mxu0 %v1587
    %v1643 = vpop.f32.mrb[0].mxu0
    %v1644 = vadd.f32 %v118, %v1643
    %v1645 = vpop.f32.mrb[0].mxu0
    %v1646 = vpop.f32.mrb[0].mxu0
    %v1647 = vadd.f32 %v118, %v1646
    %v1648 = vpop.f32.mrb[0].mxu0
    %1649 = vmatprep.mubr.bf16.mxu0 0
    %1650 = vmatmul.mubr.bf16.gmra.mrb[0].mxu0 %v1588
    %v1651 = vpop.f32.mrb[0].mxu0
    %v1652 = vadd.f32 %v118, %v1651
    %v1653 = vpop.f32.mrb[0].mxu0
    %v1654 = vpop.f32.mrb[0].mxu0
    %v1655 = vadd.f32 %v118, %v1654
    %v1656 = vpop.f32.mrb[0].mxu0
    %1657 = vmatprep.mubr.bf16.mxu0 0
    %1658 = vmatmul.mubr.bf16.gmra.mrb[0].mxu0 %v1589
    %v1659 = vpop.f32.mrb[0].mxu0
    %v1660 = vadd.f32 %v118, %v1659
    %v1661 = vpop.f32.mrb[0].mxu0
    %v1662 = vpop.f32.mrb[0].mxu0
    %v1663 = vadd.f32 %v118, %v1662
    %v1664 = vpop.f32.mrb[0].mxu0
    %1665 = vmatprep.mubr.bf16.mxu0 0
    %1666 = vmatmul.mubr.bf16.gmra.mrb[0].mxu0 %v1590
    %v1667 = vpop.f32.mrb[0].mxu0
    %v1668 = vadd.f32 %v118, %v1667
    %v1669 = vpop.f32.mrb[0].mxu0
    %v1670 = vpop.f32.mrb[0].mxu0
    %v1671 = vadd.f32 %v118, %v1670
    %v1672 = vpop.f32.mrb[0].mxu0
    %1673 = vmatprep.mubr.bf16.mxu0 0
    %1674 = vmatmul.mubr.bf16.gmra.mrb[0].mxu0 %v1591
    %v1675 = vpop.f32.mrb[0].mxu0
    %v1676 = vadd.f32 %v118, %v1675
    %v1677 = vpop.f32.mrb[0].mxu0
    %v1678 = vpop.f32.mrb[0].mxu0
    %v1679 = vadd.f32 %v118, %v1678
    %v1680 = vpop.f32.mrb[0].mxu0
    %1681 = vmatprep.mubr.bf16.mxu0 0
    %1682 = vmatmul.mubr.bf16.gmra.mrb[0].mxu0 %v1592
    %v1683 = vpop.f32.mrb[0].mxu0
    %v1684 = vadd.f32 %v118, %v1683
    %v1685 = vpop.f32.mrb[0].mxu0
    %v1686 = vpop.f32.mrb[0].mxu0
    %v1687 = vadd.f32 %v118, %v1686
    %v1688 = vpop.f32.mrb[0].mxu0
    %1689 = vdwg.mxu0
    %v1690 = vpack.c.bf16 %v1631, %v1628
    %v1691 = vpack.c.bf16 %v1639, %v1636
    %v1692 = vpack.c.bf16 %v1647, %v1644
    %v1693 = vpack.c.bf16 %v1655, %v1652
    %v1694 = vpack.c.bf16 %v1663, %v1660
    %v1695 = vpack.c.bf16 %v1671, %v1668
    %v1696 = vpack.c.bf16 %v1679, %v1676
    %v1697 = vpack.c.bf16 %v1687, %v1684
    %v1698 = vtanh.bf16.pop %v1690
    %v1699 = vtanh.bf16.pop %v1691
    %v1700 = vtanh.bf16.pop %v1692
    %v1701 = vtanh.bf16.pop %v1693
    %v1702 = vtanh.bf16.pop %v1694
    %v1703 = vtanh.bf16.pop %v1695
    %v1704 = vtanh.bf16.pop %v1696
    %v1705 = vtanh.bf16.pop %v1697
    %v1706 = vmul.bf16 %v283, %v1698
    %v1707 = vmul.bf16 %v283, %v1699
    %v1708 = vmul.bf16 %v283, %v1700
    %v1709 = vmul.bf16 %v283, %v1701
    %v1710 = vmul.bf16 %v283, %v1702
    %v1711 = vmul.bf16 %v283, %v1703
    %v1712 = vmul.bf16 %v283, %v1704
    %v1713 = vmul.bf16 %v283, %v1705
    %v1714 = vmul.bf16 %v1706, 1051410091
    %v1715 = vmul.bf16 %v1707, 1051410091
    %v1716 = vmul.bf16 %v1708, 1051410091
    %v1717 = vmul.bf16 %v1709, 1051410091
    %v1718 = vmul.bf16 %v1710, 1051410091
    %v1719 = vmul.bf16 %v1711, 1051410091
    %v1720 = vmul.bf16 %v1712, 1051410091
    %v1721 = vmul.bf16 %v1713, 1051410091
    %v1722 = vunpack.c.l.bf16 %v1714
    %v1723 = vunpack.c.h.bf16 %v1714
    %v1724 = vunpack.c.l.bf16 %v1715
    %v1725 = vunpack.c.h.bf16 %v1715
    %v1726 = vunpack.c.l.bf16 %v1716
    %v1727 = vunpack.c.h.bf16 %v1716
    %v1728 = vunpack.c.l.bf16 %v1717
    %v1729 = vunpack.c.h.bf16 %v1717
    %v1730 = vunpack.c.l.bf16 %v1718
    %v1731 = vunpack.c.h.bf16 %v1718
    %v1732 = vunpack.c.l.bf16 %v1719
    %v1733 = vunpack.c.h.bf16 %v1719
    %v1734 = vunpack.c.l.bf16 %v1720
    %v1735 = vunpack.c.h.bf16 %v1720
    %v1736 = vunpack.c.l.bf16 %v1721
    %v1737 = vunpack.c.h.bf16 %v1721
    %v1738 = vadd.f32 %v1569, %v1722
    %v1739 = vadd.f32 %v1570, %v1723
    %v1740 = vadd.f32 %v1571, %v1724
    %v1741 = vadd.f32 %v1572, %v1725
    %v1742 = vadd.f32 %v1573, %v1726
    %v1743 = vadd.f32 %v1574, %v1727
    %v1744 = vadd.f32 %v1575, %v1728
    %v1745 = vadd.f32 %v1576, %v1729
    %v1746 = vadd.f32 %v1577, %v1730
    %v1747 = vadd.f32 %v1578, %v1731
    %v1748 = vadd.f32 %v1579, %v1732
    %v1749 = vadd.f32 %v1580, %v1733
    %v1750 = vadd.f32 %v1581, %v1734
    %v1751 = vadd.f32 %v1582, %v1735
    %v1752 = vadd.f32 %v1583, %v1736
    %v1753 = vadd.f32 %v1584, %v1737
    %v1754 = vadd.bf16 %v1585, %v1706
    %v1755 = vadd.bf16 %v1586, %v1707
    %v1756 = vadd.bf16 %v1587, %v1708
    %v1757 = vadd.bf16 %v1588, %v1709
    %v1758 = vadd.bf16 %v1589, %v1710
    %v1759 = vadd.bf16 %v1590, %v1711
    %v1760 = vadd.bf16 %v1591, %v1712
    %v1761 = vadd.bf16 %v1592, %v1713
    %1762 = vmatprep.subr.bf16.mxu0 0
    %1763 = vmatpush1.bf16.msra.mxu0 %v152
    %1764 = vmatprep.subr.bf16.mxu0 0
    %1765 = vmatpush1.bf16.msra.mxu0 %v153
    %1766 = vmatprep.subr.bf16.mxu0 0
    %1767 = vmatpush1.bf16.msra.mxu0 %v154
    %1768 = vmatprep.subr.bf16.mxu0 0
    %1769 = vmatpush1.bf16.msra.mxu0 %v155
    %1770 = vmatprep.subr.bf16.mxu0 0
    %1771 = vmatpush1.bf16.msra.mxu0 %v156
    %1772 = vmatprep.subr.bf16.mxu0 0
    %1773 = vmatpush1.bf16.msra.mxu0 %v157
    %1774 = vmatprep.subr.bf16.mxu0 0
    %1775 = vmatpush1.bf16.msra.mxu0 %v158
    %1776 = vmatprep.subr.bf16.mxu0 0
    %1777 = vmatpush1.bf16.msra.mxu0 %v159
    %1778 = vmatprep.subr.bf16.mxu0 0
    %1779 = vmatpush1.bf16.msra.mxu0 0
    %1780 = vmatprep.subr.bf16.mxu0 0
    %1781 = vmatpush1.bf16.msra.mxu0 0
    %1782 = vmatprep.subr.bf16.mxu0 0
    %1783 = vmatpush1.bf16.msra.mxu0 0
    %1784 = vmatprep.subr.bf16.mxu0 0
    %1785 = vmatpush1.bf16.msra.mxu0 0
    %1786 = vmatprep.subr.bf16.mxu0 0
    %1787 = vmatpush1.bf16.msra.mxu0 0
    %1788 = vmatprep.subr.bf16.mxu0 0
    %1789 = vmatpush1.bf16.msra.mxu0 0
    %1790 = vmatprep.subr.bf16.mxu0 0
    %1791 = vmatpush1.bf16.msra.mxu0 0
    %1792 = vmatprep.subr.bf16.mxu0 0
    %1793 = vmatpush1.bf16.msra.mxu0 0
    %1794 = vmatprep.mubr.bf16.mxu0 0
    %1795 = vmatmul.mubr.bf16.gmra.mrb[0].mxu0 %v1754
    %v1796 = vpop.f32.mrb[0].mxu0
    %v1797 = vadd.f32 %v118, %v1796
    %v1798 = vpop.f32.mrb[0].mxu0
    %v1799 = vpop.f32.mrb[0].mxu0
    %v1800 = vadd.f32 %v118, %v1799
    %v1801 = vpop.f32.mrb[0].mxu0
    %1802 = vmatprep.mubr.bf16.mxu0 0
    %1803 = vmatmul.mubr.bf16.gmra.mrb[0].mxu0 %v1755
    %v1804 = vpop.f32.mrb[0].mxu0
    %v1805 = vadd.f32 %v118, %v1804
    %v1806 = vpop.f32.mrb[0].mxu0
    %v1807 = vpop.f32.mrb[0].mxu0
    %v1808 = vadd.f32 %v118, %v1807
    %v1809 = vpop.f32.mrb[0].mxu0
    %1810 = vmatprep.mubr.bf16.mxu0 0
    %1811 = vmatmul.mubr.bf16.gmra.mrb[0].mxu0 %v1756
    %v1812 = vpop.f32.mrb[0].mxu0
    %v1813 = vadd.f32 %v118, %v1812
    %v1814 = vpop.f32.mrb[0].mxu0
    %v1815 = vpop.f32.mrb[0].mxu0
    %v1816 = vadd.f32 %v118, %v1815
    %v1817 = vpop.f32.mrb[0].mxu0
    %1818 = vmatprep.mubr.bf16.mxu0 0
    %1819 = vmatmul.mubr.bf16.gmra.mrb[0].mxu0 %v1757
    %v1820 = vpop.f32.mrb[0].mxu0
    %v1821 = vadd.f32 %v118, %v1820
    %v1822 = vpop.f32.mrb[0].mxu0
    %v1823 = vpop.f32.mrb[0].mxu0
    %v1824 = vadd.f32 %v118, %v1823
    %v1825 = vpop.f32.mrb[0].mxu0
    %1826 = vmatprep.mubr.bf16.mxu0 0
    %1827 = vmatmul.mubr.bf16.gmra.mrb[0].mxu0 %v1758
    %v1828 = vpop.f32.mrb[0].mxu0
    %v1829 = vadd.f32 %v118, %v1828
    %v1830 = vpop.f32.mrb[0].mxu0
    %v1831 = vpop.f32.mrb[0].mxu0
    %v1832 = vadd.f32 %v118, %v1831
    %v1833 = vpop.f32.mrb[0].mxu0
    %1834 = vmatprep.mubr.bf16.mxu0 0
    %1835 = vmatmul.mubr.bf16.gmra.mrb[0].mxu0 %v1759
    %v1836 = vpop.f32.mrb[0].mxu0
    %v1837 = vadd.f32 %v118, %v1836
    %v1838 = vpop.f32.mrb[0].mxu0
    %v1839 = vpop.f32.mrb[0].mxu0
    %v1840 = vadd.f32 %v118, %v1839
    %v1841 = vpop.f32.mrb[0].mxu0
    %1842 = vmatprep.mubr.bf16.mxu0 0
    %1843 = vmatmul.mubr.bf16.gmra.mrb[0].mxu0 %v1760
    %v1844 = vpop.f32.mrb[0].mxu0
    %v1845 = vadd.f32 %v118, %v1844
    %v1846 = vpop.f32.mrb[0].mxu0
    %v1847 = vpop.f32.mrb[0].mxu0
    %v1848 = vadd.f32 %v118, %v1847
    %v1849 = vpop.f32.mrb[0].mxu0
    %1850 = vmatprep.mubr.bf16.mxu0 0
    %1851 = vmatmul.mubr.bf16.gmra.mrb[0].mxu0 %v1761
    %v1852 = vpop.f32.mrb[0].mxu0
    %v1853 = vadd.f32 %v118, %v1852
    %v1854 = vpop.f32.mrb[0].mxu0
    %v1855 = vpop.f32.mrb[0].mxu0
    %v1856 = vadd.f32 %v118, %v1855
    %v1857 = vpop.f32.mrb[0].mxu0
    %1858 = vdwg.mxu0
    %v1859 = vpack.c.bf16 %v1800, %v1797
    %v1860 = vpack.c.bf16 %v1808, %v1805
    %v1861 = vpack.c.bf16 %v1816, %v1813
    %v1862 = vpack.c.bf16 %v1824, %v1821
    %v1863 = vpack.c.bf16 %v1832, %v1829
    %v1864 = vpack.c.bf16 %v1840, %v1837
    %v1865 = vpack.c.bf16 %v1848, %v1845
    %v1866 = vpack.c.bf16 %v1856, %v1853
    %v1867 = vtanh.bf16.pop %v1859
    %v1868 = vtanh.bf16.pop %v1860
    %v1869 = vtanh.bf16.pop %v1861
    %v1870 = vtanh.bf16.pop %v1862
    %v1871 = vtanh.bf16.pop %v1863
    %v1872 = vtanh.bf16.pop %v1864
    %v1873 = vtanh.bf16.pop %v1865
    %v1874 = vtanh.bf16.pop %v1866
    %v1875 = vmul.bf16 %v283, %v1867
    %v1876 = vmul.bf16 %v283, %v1868
    %v1877 = vmul.bf16 %v283, %v1869
    %v1878 = vmul.bf16 %v283, %v1870
    %v1879 = vmul.bf16 %v283, %v1871
    %v1880 = vmul.bf16 %v283, %v1872
    %v1881 = vmul.bf16 %v283, %v1873
    %v1882 = vmul.bf16 %v283, %v1874
    %v1883 = vmul.bf16 %v1875, 1059798827
    %v1884 = vmul.bf16 %v1876, 1059798827
    %v1885 = vmul.bf16 %v1877, 1059798827
    %v1886 = vmul.bf16 %v1878, 1059798827
    %v1887 = vmul.bf16 %v1879, 1059798827
    %v1888 = vmul.bf16 %v1880, 1059798827
    %v1889 = vmul.bf16 %v1881, 1059798827
    %v1890 = vmul.bf16 %v1882, 1059798827
    %v1891 = vunpack.c.l.bf16 %v1883
    %v1892 = vunpack.c.h.bf16 %v1883
    %v1893 = vunpack.c.l.bf16 %v1884
    %v1894 = vunpack.c.h.bf16 %v1884
    %v1895 = vunpack.c.l.bf16 %v1885
    %v1896 = vunpack.c.h.bf16 %v1885
    %v1897 = vunpack.c.l.bf16 %v1886
    %v1898 = vunpack.c.h.bf16 %v1886
    %v1899 = vunpack.c.l.bf16 %v1887
    %v1900 = vunpack.c.h.bf16 %v1887
    %v1901 = vunpack.c.l.bf16 %v1888
    %v1902 = vunpack.c.h.bf16 %v1888
    %v1903 = vunpack.c.l.bf16 %v1889
    %v1904 = vunpack.c.h.bf16 %v1889
    %v1905 = vunpack.c.l.bf16 %v1890
    %v1906 = vunpack.c.h.bf16 %v1890
    %v1907 = vadd.f32 %v1738, %v1891
    %v1908 = vadd.f32 %v1739, %v1892
    %v1909 = vadd.f32 %v1740, %v1893
    %v1910 = vadd.f32 %v1741, %v1894
    %v1911 = vadd.f32 %v1742, %v1895
    %v1912 = vadd.f32 %v1743, %v1896
    %v1913 = vadd.f32 %v1744, %v1897
    %v1914 = vadd.f32 %v1745, %v1898
    %v1915 = vadd.f32 %v1746, %v1899
    %v1916 = vadd.f32 %v1747, %v1900
    %v1917 = vadd.f32 %v1748, %v1901
    %v1918 = vadd.f32 %v1749, %v1902
    %v1919 = vadd.f32 %v1750, %v1903
    %v1920 = vadd.f32 %v1751, %v1904
    %v1921 = vadd.f32 %v1752, %v1905
    %v1922 = vadd.f32 %v1753, %v1906
    %v1923 = vadd.bf16 %v1585, %v1875
    %v1924 = vadd.bf16 %v1586, %v1876
    %v1925 = vadd.bf16 %v1587, %v1877
    %v1926 = vadd.bf16 %v1588, %v1878
    %v1927 = vadd.bf16 %v1589, %v1879
    %v1928 = vadd.bf16 %v1590, %v1880
    %v1929 = vadd.bf16 %v1591, %v1881
    %v1930 = vadd.bf16 %v1592, %v1882
    %1931 = vmatprep.subr.bf16.mxu0 0
    %1932 = vmatpush1.bf16.msra.mxu0 %v152
    %1933 = vmatprep.subr.bf16.mxu0 0
    %1934 = vmatpush1.bf16.msra.mxu0 %v153
    %1935 = vmatprep.subr.bf16.mxu0 0
    %1936 = vmatpush1.bf16.msra.mxu0 %v154
    %1937 = vmatprep.subr.bf16.mxu0 0
    %1938 = vmatpush1.bf16.msra.mxu0 %v155
    %1939 = vmatprep.subr.bf16.mxu0 0
    %1940 = vmatpush1.bf16.msra.mxu0 %v156
    %1941 = vmatprep.subr.bf16.mxu0 0
    %1942 = vmatpush1.bf16.msra.mxu0 %v157
    %1943 = vmatprep.subr.bf16.mxu0 0
    %1944 = vmatpush1.bf16.msra.mxu0 %v158
    %1945 = vmatprep.subr.bf16.mxu0 0
    %1946 = vmatpush1.bf16.msra.mxu0 %v159
    %1947 = vmatprep.subr.bf16.mxu0 0
    %1948 = vmatpush1.bf16.msra.mxu0 0
    %1949 = vmatprep.subr.bf16.mxu0 0
    %1950 = vmatpush1.bf16.msra.mxu0 0
    %1951 = vmatprep.subr.bf16.mxu0 0
    %1952 = vmatpush1.bf16.msra.mxu0 0
    %1953 = vmatprep.subr.bf16.mxu0 0
    %1954 = vmatpush1.bf16.msra.mxu0 0
    %1955 = vmatprep.subr.bf16.mxu0 0
    %1956 = vmatpush1.bf16.msra.mxu0 0
    %1957 = vmatprep.subr.bf16.mxu0 0
    %1958 = vmatpush1.bf16.msra.mxu0 0
    %1959 = vmatprep.subr.bf16.mxu0 0
    %1960 = vmatpush1.bf16.msra.mxu0 0
    %1961 = vmatprep.subr.bf16.mxu0 0
    %1962 = vmatpush1.bf16.msra.mxu0 0
    %1963 = vmatprep.mubr.bf16.mxu0 0
    %1964 = vmatmul.mubr.bf16.gmra.mrb[0].mxu0 %v1923
    %v1965 = vpop.f32.mrb[0].mxu0
    %v1966 = vadd.f32 %v118, %v1965
    %v1967 = vpop.f32.mrb[0].mxu0
    %v1968 = vpop.f32.mrb[0].mxu0
    %v1969 = vadd.f32 %v118, %v1968
    %v1970 = vpop.f32.mrb[0].mxu0
    %1971 = vmatprep.mubr.bf16.mxu0 0
    %1972 = vmatmul.mubr.bf16.gmra.mrb[0].mxu0 %v1924
    %v1973 = vpop.f32.mrb[0].mxu0
    %v1974 = vadd.f32 %v118, %v1973
    %v1975 = vpop.f32.mrb[0].mxu0
    %v1976 = vpop.f32.mrb[0].mxu0
    %v1977 = vadd.f32 %v118, %v1976
    %v1978 = vpop.f32.mrb[0].mxu0
    %1979 = vmatprep.mubr.bf16.mxu0 0
    %1980 = vmatmul.mubr.bf16.gmra.mrb[0].mxu0 %v1925
    %v1981 = vpop.f32.mrb[0].mxu0
    %v1982 = vadd.f32 %v118, %v1981
    %v1983 = vpop.f32.mrb[0].mxu0
    %v1984 = vpop.f32.mrb[0].mxu0
    %v1985 = vadd.f32 %v118, %v1984
    %v1986 = vpop.f32.mrb[0].mxu0
    %1987 = vmatprep.mubr.bf16.mxu0 0
    %1988 = vmatmul.mubr.bf16.gmra.mrb[0].mxu0 %v1926
    %v1989 = vpop.f32.mrb[0].mxu0
    %v1990 = vadd.f32 %v118, %v1989
    %v1991 = vpop.f32.mrb[0].mxu0
    %v1992 = vpop.f32.mrb[0].mxu0
    %v1993 = vadd.f32 %v118, %v1992
    %v1994 = vpop.f32.mrb[0].mxu0
    %1995 = vmatprep.mubr.bf16.mxu0 0
    %1996 = vmatmul.mubr.bf16.gmra.mrb[0].mxu0 %v1927
    %v1997 = vpop.f32.mrb[0].mxu0
    %v1998 = vadd.f32 %v118, %v1997
    %v1999 = vpop.f32.mrb[0].mxu0
    %v2000 = vpop.f32.mrb[0].mxu0
    %v2001 = vadd.f32 %v118, %v2000
    %v2002 = vpop.f32.mrb[0].mxu0
    %2003 = vmatprep.mubr.bf16.mxu0 0
    %2004 = vmatmul.mubr.bf16.gmra.mrb[0].mxu0 %v1928
    %v2005 = vpop.f32.mrb[0].mxu0
    %v2006 = vadd.f32 %v118, %v2005
    %v2007 = vpop.f32.mrb[0].mxu0
    %v2008 = vpop.f32.mrb[0].mxu0
    %v2009 = vadd.f32 %v118, %v2008
    %v2010 = vpop.f32.mrb[0].mxu0
    %2011 = vmatprep.mubr.bf16.mxu0 0
    %2012 = vmatmul.mubr.bf16.gmra.mrb[0].mxu0 %v1929
    %v2013 = vpop.f32.mrb[0].mxu0
    %v2014 = vadd.f32 %v118, %v2013
    %v2015 = vpop.f32.mrb[0].mxu0
    %v2016 = vpop.f32.mrb[0].mxu0
    %v2017 = vadd.f32 %v118, %v2016
    %v2018 = vpop.f32.mrb[0].mxu0
    %2019 = vmatprep.mubr.bf16.mxu0 0
    %2020 = vmatmul.mubr.bf16.gmra.mrb[0].mxu0 %v1930
    %v2021 = vpop.f32.mrb[0].mxu0
    %v2022 = vadd.f32 %v118, %v2021
    %v2023 = vpop.f32.mrb[0].mxu0
    %v2024 = vpop.f32.mrb[0].mxu0
    %v2025 = vadd.f32 %v118, %v2024
    %v2026 = vpop.f32.mrb[0].mxu0
    %2027 = vdwg.mxu0
    %v2028 = vpack.c.bf16 %v1969, %v1966
    %v2029 = vpack.c.bf16 %v1977, %v1974
    %v2030 = vpack.c.bf16 %v1985, %v1982
    %v2031 = vpack.c.bf16 %v1993, %v1990
    %v2032 = vpack.c.bf16 %v2001, %v1998
    %v2033 = vpack.c.bf16 %v2009, %v2006
    %v2034 = vpack.c.bf16 %v2017, %v2014
    %v2035 = vpack.c.bf16 %v2025, %v2022
    %v2036 = vtanh.bf16.pop %v2028
    %v2037 = vtanh.bf16.pop %v2029
    %v2038 = vtanh.bf16.pop %v2030
    %v2039 = vtanh.bf16.pop %v2031
    %v2040 = vtanh.bf16.pop %v2032
    %v2041 = vtanh.bf16.pop %v2033
    %v2042 = vtanh.bf16.pop %v2034
    %v2043 = vtanh.bf16.pop %v2035
    %v2044 = vmul.bf16 %v625, %v2036
    %v2045 = vmul.bf16 %v625, %v2037
    %v2046 = vmul.bf16 %v625, %v2038
    %v2047 = vmul.bf16 %v625, %v2039
    %v2048 = vmul.bf16 %v625, %v2040
    %v2049 = vmul.bf16 %v625, %v2041
    %v2050 = vmul.bf16 %v625, %v2042
    %v2051 = vmul.bf16 %v625, %v2043
    %v2052 = vmul.bf16 %v2044, 1051410091
    %v2053 = vmul.bf16 %v2045, 1051410091
    %v2054 = vmul.bf16 %v2046, 1051410091
    %v2055 = vmul.bf16 %v2047, 1051410091
    %v2056 = vmul.bf16 %v2048, 1051410091
    %v2057 = vmul.bf16 %v2049, 1051410091
    %v2058 = vmul.bf16 %v2050, 1051410091
    %v2059 = vmul.bf16 %v2051, 1051410091
    %v2060 = vunpack.c.l.bf16 %v2052
    %v2061 = vunpack.c.h.bf16 %v2052
    %v2062 = vunpack.c.l.bf16 %v2053
    %v2063 = vunpack.c.h.bf16 %v2053
    %v2064 = vunpack.c.l.bf16 %v2054
    %v2065 = vunpack.c.h.bf16 %v2054
    %v2066 = vunpack.c.l.bf16 %v2055
    %v2067 = vunpack.c.h.bf16 %v2055
    %v2068 = vunpack.c.l.bf16 %v2056
    %v2069 = vunpack.c.h.bf16 %v2056
    %v2070 = vunpack.c.l.bf16 %v2057
    %v2071 = vunpack.c.h.bf16 %v2057
    %v2072 = vunpack.c.l.bf16 %v2058
    %v2073 = vunpack.c.h.bf16 %v2058
    %v2074 = vunpack.c.l.bf16 %v2059
    %v2075 = vunpack.c.h.bf16 %v2059
    %v2076 = vadd.f32 %v1907, %v2060
    %v2077 = vadd.f32 %v1908, %v2061
    %v2078 = vadd.f32 %v1909, %v2062
    %v2079 = vadd.f32 %v1910, %v2063
    %v2080 = vadd.f32 %v1911, %v2064
    %v2081 = vadd.f32 %v1912, %v2065
    %v2082 = vadd.f32 %v1913, %v2066
    %v2083 = vadd.f32 %v1914, %v2067
    %v2084 = vadd.f32 %v1915, %v2068
    %v2085 = vadd.f32 %v1916, %v2069
    %v2086 = vadd.f32 %v1917, %v2070
    %v2087 = vadd.f32 %v1918, %v2071
    %v2088 = vadd.f32 %v1919, %v2072
    %v2089 = vadd.f32 %v1920, %v2073
    %v2090 = vadd.f32 %v1921, %v2074
    %v2091 = vadd.f32 %v1922, %v2075
    %v2092 = vadd.bf16 %v1585, %v2044
    %v2093 = vadd.bf16 %v1586, %v2045
    %v2094 = vadd.bf16 %v1587, %v2046
    %v2095 = vadd.bf16 %v1588, %v2047
    %v2096 = vadd.bf16 %v1589, %v2048
    %v2097 = vadd.bf16 %v1590, %v2049
    %v2098 = vadd.bf16 %v1591, %v2050
    %v2099 = vadd.bf16 %v1592, %v2051
    %2100 = vmatprep.subr.bf16.mxu0 0
    %2101 = vmatpush1.bf16.msra.mxu0 %v152
    %2102 = vmatprep.subr.bf16.mxu0 0
    %2103 = vmatpush1.bf16.msra.mxu0 %v153
    %2104 = vmatprep.subr.bf16.mxu0 0
    %2105 = vmatpush1.bf16.msra.mxu0 %v154
    %2106 = vmatprep.subr.bf16.mxu0 0
    %2107 = vmatpush1.bf16.msra.mxu0 %v155
    %2108 = vmatprep.subr.bf16.mxu0 0
    %2109 = vmatpush1.bf16.msra.mxu0 %v156
    %2110 = vmatprep.subr.bf16.mxu0 0
    %2111 = vmatpush1.bf16.msra.mxu0 %v157
    %2112 = vmatprep.subr.bf16.mxu0 0
    %2113 = vmatpush1.bf16.msra.mxu0 %v158
    %2114 = vmatprep.subr.bf16.mxu0 0
    %2115 = vmatpush1.bf16.msra.mxu0 %v159
    %2116 = vmatprep.subr.bf16.mxu0 0
    %2117 = vmatpush1.bf16.msra.mxu0 0
    %2118 = vmatprep.subr.bf16.mxu0 0
    %2119 = vmatpush1.bf16.msra.mxu0 0
    %2120 = vmatprep.subr.bf16.mxu0 0
    %2121 = vmatpush1.bf16.msra.mxu0 0
    %2122 = vmatprep.subr.bf16.mxu0 0
    %2123 = vmatpush1.bf16.msra.mxu0 0
    %2124 = vmatprep.subr.bf16.mxu0 0
    %2125 = vmatpush1.bf16.msra.mxu0 0
    %2126 = vmatprep.subr.bf16.mxu0 0
    %2127 = vmatpush1.bf16.msra.mxu0 0
    %2128 = vmatprep.subr.bf16.mxu0 0
    %2129 = vmatpush1.bf16.msra.mxu0 0
    %2130 = vmatprep.subr.bf16.mxu0 0
    %2131 = vmatpush1.bf16.msra.mxu0 0
    %2132 = vmatprep.mubr.bf16.mxu0 0
    %2133 = vmatmul.mubr.bf16.gmra.mrb[0].mxu0 %v2092
    %v2134 = vpop.f32.mrb[0].mxu0
    %v2135 = vadd.f32 %v118, %v2134
    %v2136 = vpop.f32.mrb[0].mxu0
    %v2137 = vpop.f32.mrb[0].mxu0
    %v2138 = vadd.f32 %v118, %v2137
    %v2139 = vpop.f32.mrb[0].mxu0
    %2140 = vmatprep.mubr.bf16.mxu0 0
    %2141 = vmatmul.mubr.bf16.gmra.mrb[0].mxu0 %v2093
    %v2142 = vpop.f32.mrb[0].mxu0
    %v2143 = vadd.f32 %v118, %v2142
    %v2144 = vpop.f32.mrb[0].mxu0
    %v2145 = vpop.f32.mrb[0].mxu0
    %v2146 = vadd.f32 %v118, %v2145
    %v2147 = vpop.f32.mrb[0].mxu0
    %2148 = vmatprep.mubr.bf16.mxu0 0
    %2149 = vmatmul.mubr.bf16.gmra.mrb[0].mxu0 %v2094
    %v2150 = vpop.f32.mrb[0].mxu0
    %v2151 = vadd.f32 %v118, %v2150
    %v2152 = vpop.f32.mrb[0].mxu0
    %v2153 = vpop.f32.mrb[0].mxu0
    %v2154 = vadd.f32 %v118, %v2153
    %v2155 = vpop.f32.mrb[0].mxu0
    %2156 = vmatprep.mubr.bf16.mxu0 0
    %2157 = vmatmul.mubr.bf16.gmra.mrb[0].mxu0 %v2095
    %v2158 = vpop.f32.mrb[0].mxu0
    %v2159 = vadd.f32 %v118, %v2158
    %v2160 = vpop.f32.mrb[0].mxu0
    %v2161 = vpop.f32.mrb[0].mxu0
    %v2162 = vadd.f32 %v118, %v2161
    %v2163 = vpop.f32.mrb[0].mxu0
    %2164 = vmatprep.mubr.bf16.mxu0 0
    %2165 = vmatmul.mubr.bf16.gmra.mrb[0].mxu0 %v2096
    %v2166 = vpop.f32.mrb[0].mxu0
    %v2167 = vadd.f32 %v118, %v2166
    %v2168 = vpop.f32.mrb[0].mxu0
    %v2169 = vpop.f32.mrb[0].mxu0
    %v2170 = vadd.f32 %v118, %v2169
    %v2171 = vpop.f32.mrb[0].mxu0
    %2172 = vmatprep.mubr.bf16.mxu0 0
    %2173 = vmatmul.mubr.bf16.gmra.mrb[0].mxu0 %v2097
    %v2174 = vpop.f32.mrb[0].mxu0
    %v2175 = vadd.f32 %v118, %v2174
    %v2176 = vpop.f32.mrb[0].mxu0
    %v2177 = vpop.f32.mrb[0].mxu0
    %v2178 = vadd.f32 %v118, %v2177
    %v2179 = vpop.f32.mrb[0].mxu0
    %2180 = vmatprep.mubr.bf16.mxu0 0
    %2181 = vmatmul.mubr.bf16.gmra.mrb[0].mxu0 %v2098
    %v2182 = vpop.f32.mrb[0].mxu0
    %v2183 = vadd.f32 %v118, %v2182
    %v2184 = vpop.f32.mrb[0].mxu0
    %v2185 = vpop.f32.mrb[0].mxu0
    %v2186 = vadd.f32 %v118, %v2185
    %v2187 = vpop.f32.mrb[0].mxu0
    %2188 = vmatprep.mubr.bf16.mxu0 0
    %2189 = vmatmul.mubr.bf16.gmra.mrb[0].mxu0 %v2099
    %v2190 = vpop.f32.mrb[0].mxu0
    %v2191 = vadd.f32 %v118, %v2190
    %v2192 = vpop.f32.mrb[0].mxu0
    %v2193 = vpop.f32.mrb[0].mxu0
    %v2194 = vadd.f32 %v118, %v2193
    %v2195 = vpop.f32.mrb[0].mxu0
    %2196 = vdwg.mxu0
    %v2197 = vpack.c.bf16 %v2138, %v2135
    %v2198 = vpack.c.bf16 %v2146, %v2143
    %v2199 = vpack.c.bf16 %v2154, %v2151
    %v2200 = vpack.c.bf16 %v2162, %v2159
    %v2201 = vpack.c.bf16 %v2170, %v2167
    %v2202 = vpack.c.bf16 %v2178, %v2175
    %v2203 = vpack.c.bf16 %v2186, %v2183
    %v2204 = vpack.c.bf16 %v2194, %v2191
    %v2205 = vtanh.bf16.pop %v2197
    %v2206 = vtanh.bf16.pop %v2198
    %v2207 = vtanh.bf16.pop %v2199
    %v2208 = vtanh.bf16.pop %v2200
    %v2209 = vtanh.bf16.pop %v2201
    %v2210 = vtanh.bf16.pop %v2202
    %v2211 = vtanh.bf16.pop %v2203
    %v2212 = vtanh.bf16.pop %v2204
    %v2213 = vunpack.c.l.bf16 %v2205
    %v2214 = vunpack.c.h.bf16 %v2205
    %v2215 = vunpack.c.l.bf16 %v2206
    %v2216 = vunpack.c.h.bf16 %v2206
    %v2217 = vunpack.c.l.bf16 %v2207
    %v2218 = vunpack.c.h.bf16 %v2207
    %v2219 = vunpack.c.l.bf16 %v2208
    %v2220 = vunpack.c.h.bf16 %v2208
    %v2221 = vunpack.c.l.bf16 %v2209
    %v2222 = vunpack.c.h.bf16 %v2209
    %v2223 = vunpack.c.l.bf16 %v2210
    %v2224 = vunpack.c.h.bf16 %v2210
    %v2225 = vunpack.c.l.bf16 %v2211
    %v2226 = vunpack.c.h.bf16 %v2211
    %v2227 = vunpack.c.l.bf16 %v2212
    %v2228 = vunpack.c.h.bf16 %v2212
    %v2229 = vmul.f32 %v812, %v2213
    %v2230 = vmul.f32 %v812, %v2214
    %v2231 = vmul.f32 %v812, %v2215
    %v2232 = vmul.f32 %v812, %v2216
    %v2233 = vmul.f32 %v812, %v2217
    %v2234 = vmul.f32 %v812, %v2218
    %v2235 = vmul.f32 %v812, %v2219
    %v2236 = vmul.f32 %v812, %v2220
    %v2237 = vmul.f32 %v812, %v2221
    %v2238 = vmul.f32 %v812, %v2222
    %v2239 = vmul.f32 %v812, %v2223
    %v2240 = vmul.f32 %v812, %v2224
    %v2241 = vmul.f32 %v812, %v2225
    %v2242 = vmul.f32 %v812, %v2226
    %v2243 = vmul.f32 %v812, %v2227
    %v2244 = vmul.f32 %v812, %v2228
    %v2245 = vadd.f32 %v2076, %v2229
    %v2246 = vadd.f32 %v2077, %v2230
    %v2247 = vadd.f32 %v2078, %v2231
    %v2248 = vadd.f32 %v2079, %v2232
    %v2249 = vadd.f32 %v2080, %v2233
    %v2250 = vadd.f32 %v2081, %v2234
    %v2251 = vadd.f32 %v2082, %v2235
    %v2252 = vadd.f32 %v2083, %v2236
    %v2253 = vadd.f32 %v2084, %v2237
    %v2254 = vadd.f32 %v2085, %v2238
    %v2255 = vadd.f32 %v2086, %v2239
    %v2256 = vadd.f32 %v2087, %v2240
    %v2257 = vadd.f32 %v2088, %v2241
    %v2258 = vadd.f32 %v2089, %v2242
    %v2259 = vadd.f32 %v2090, %v2243
    %v2260 = vadd.f32 %v2091, %v2244
    %2261 = vst [vmem:[#allocation8 + $0x100] sm:$0xff] %v2245
    %2262 = vst [vmem:[#allocation8 + $0x108] sm:$0xff] %v2246
    %2263 = vst [vmem:[#allocation8 + $0x110] sm:$0xff] %v2247
    %2264 = vst [vmem:[#allocation8 + $0x118] sm:$0xff] %v2248
    %2265 = vst [vmem:[#allocation8 + $0x120] sm:$0xff] %v2249
    %2266 = vst [vmem:[#allocation8 + $0x128] sm:$0xff] %v2250
    %2267 = vst [vmem:[#allocation8 + $0x130] sm:$0xff] %v2251
    %2268 = vst [vmem:[#allocation8 + $0x138] sm:$0xff] %v2252
    %2269 = vst [vmem:[#allocation8 + $0x140] sm:$0xff] %v2253
    %2270 = vst [vmem:[#allocation8 + $0x148] sm:$0xff] %v2254
    %2271 = vst [vmem:[#allocation8 + $0x150] sm:$0xff] %v2255
    %2272 = vst [vmem:[#allocation8 + $0x158] sm:$0xff] %v2256
    %2273 = vst [vmem:[#allocation8 + $0x160] sm:$0xff] %v2257
    %2274 = vst [vmem:[#allocation8 + $0x168] sm:$0xff] %v2258
    %2275 = vst [vmem:[#allocation8 + $0x170] sm:$0xff] %v2259
    %2276 = vst [vmem:[#allocation8 + $0x178] sm:$0xff] %v2260
    %v2277 = vld [vmem:[#allocation3 + $0x180] sm:$0xff]
    %v2278 = vld [vmem:[#allocation3 + $0x188] sm:$0xff]
    %v2279 = vld [vmem:[#allocation3 + $0x190] sm:$0xff]
    %v2280 = vld [vmem:[#allocation3 + $0x198] sm:$0xff]
    %v2281 = vld [vmem:[#allocation3 + $0x1a0] sm:$0xff]
    %v2282 = vld [vmem:[#allocation3 + $0x1a8] sm:$0xff]
    %v2283 = vld [vmem:[#allocation3 + $0x1b0] sm:$0xff]
    %v2284 = vld [vmem:[#allocation3 + $0x1b8] sm:$0xff]
    %v2285 = vld [vmem:[#allocation3 + $0x1c0] sm:$0xff]
    %v2286 = vld [vmem:[#allocation3 + $0x1c8] sm:$0xff]
    %v2287 = vld [vmem:[#allocation3 + $0x1d0] sm:$0xff]
    %v2288 = vld [vmem:[#allocation3 + $0x1d8] sm:$0xff]
    %v2289 = vld [vmem:[#allocation3 + $0x1e0] sm:$0xff]
    %v2290 = vld [vmem:[#allocation3 + $0x1e8] sm:$0xff]
    %v2291 = vld [vmem:[#allocation3 + $0x1f0] sm:$0xff]
    %v2292 = vld [vmem:[#allocation3 + $0x1f8] sm:$0xff]
    %v2293 = vpack.c.bf16 %v2278, %v2277
    %v2294 = vpack.c.bf16 %v2280, %v2279
    %v2295 = vpack.c.bf16 %v2282, %v2281
    %v2296 = vpack.c.bf16 %v2284, %v2283
    %v2297 = vpack.c.bf16 %v2286, %v2285
    %v2298 = vpack.c.bf16 %v2288, %v2287
    %v2299 = vpack.c.bf16 %v2290, %v2289
    %v2300 = vpack.c.bf16 %v2292, %v2291
    %2301 = vmatprep.subr.bf16.mxu0 0
    %2302 = vmatpush1.bf16.msra.mxu0 %v152
    %2303 = vmatprep.subr.bf16.mxu0 0
    %2304 = vmatpush1.bf16.msra.mxu0 %v153
    %2305 = vmatprep.subr.bf16.mxu0 0
    %2306 = vmatpush1.bf16.msra.mxu0 %v154
    %2307 = vmatprep.subr.bf16.mxu0 0
    %2308 = vmatpush1.bf16.msra.mxu0 %v155
    %2309 = vmatprep.subr.bf16.mxu0 0
    %2310 = vmatpush1.bf16.msra.mxu0 %v156
    %2311 = vmatprep.subr.bf16.mxu0 0
    %2312 = vmatpush1.bf16.msra.mxu0 %v157
    %2313 = vmatprep.subr.bf16.mxu0 0
    %2314 = vmatpush1.bf16.msra.mxu0 %v158
    %2315 = vmatprep.subr.bf16.mxu0 0
    %2316 = vmatpush1.bf16.msra.mxu0 %v159
    %2317 = vmatprep.subr.bf16.mxu0 0
    %2318 = vmatpush1.bf16.msra.mxu0 0
    %2319 = vmatprep.subr.bf16.mxu0 0
    %2320 = vmatpush1.bf16.msra.mxu0 0
    %2321 = vmatprep.subr.bf16.mxu0 0
    %2322 = vmatpush1.bf16.msra.mxu0 0
    %2323 = vmatprep.subr.bf16.mxu0 0
    %2324 = vmatpush1.bf16.msra.mxu0 0
    %2325 = vmatprep.subr.bf16.mxu0 0
    %2326 = vmatpush1.bf16.msra.mxu0 0
    %2327 = vmatprep.subr.bf16.mxu0 0
    %2328 = vmatpush1.bf16.msra.mxu0 0
    %2329 = vmatprep.subr.bf16.mxu0 0
    %2330 = vmatpush1.bf16.msra.mxu0 0
    %2331 = vmatprep.subr.bf16.mxu0 0
    %2332 = vmatpush1.bf16.msra.mxu0 0
    %2333 = vmatprep.mubr.bf16.mxu0 0
    %2334 = vmatmul.mubr.bf16.gmra.mrb[0].mxu0 %v2293
    %v2335 = vpop.f32.mrb[0].mxu0
    %v2336 = vadd.f32 %v118, %v2335
    %v2337 = vpop.f32.mrb[0].mxu0
    %v2338 = vpop.f32.mrb[0].mxu0
    %v2339 = vadd.f32 %v118, %v2338
    %v2340 = vpop.f32.mrb[0].mxu0
    %2341 = vmatprep.mubr.bf16.mxu0 0
    %2342 = vmatmul.mubr.bf16.gmra.mrb[0].mxu0 %v2294
    %v2343 = vpop.f32.mrb[0].mxu0
    %v2344 = vadd.f32 %v118, %v2343
    %v2345 = vpop.f32.mrb[0].mxu0
    %v2346 = vpop.f32.mrb[0].mxu0
    %v2347 = vadd.f32 %v118, %v2346
    %v2348 = vpop.f32.mrb[0].mxu0
    %2349 = vmatprep.mubr.bf16.mxu0 0
    %2350 = vmatmul.mubr.bf16.gmra.mrb[0].mxu0 %v2295
    %v2351 = vpop.f32.mrb[0].mxu0
    %v2352 = vadd.f32 %v118, %v2351
    %v2353 = vpop.f32.mrb[0].mxu0
    %v2354 = vpop.f32.mrb[0].mxu0
    %v2355 = vadd.f32 %v118, %v2354
    %v2356 = vpop.f32.mrb[0].mxu0
    %2357 = vmatprep.mubr.bf16.mxu0 0
    %2358 = vmatmul.mubr.bf16.gmra.mrb[0].mxu0 %v2296
    %v2359 = vpop.f32.mrb[0].mxu0
    %v2360 = vadd.f32 %v118, %v2359
    %v2361 = vpop.f32.mrb[0].mxu0
    %v2362 = vpop.f32.mrb[0].mxu0
    %v2363 = vadd.f32 %v118, %v2362
    %v2364 = vpop.f32.mrb[0].mxu0
    %2365 = vmatprep.mubr.bf16.mxu0 0
    %2366 = vmatmul.mubr.bf16.gmra.mrb[0].mxu0 %v2297
    %v2367 = vpop.f32.mrb[0].mxu0
    %v2368 = vadd.f32 %v118, %v2367
    %v2369 = vpop.f32.mrb[0].mxu0
    %v2370 = vpop.f32.mrb[0].mxu0
    %v2371 = vadd.f32 %v118, %v2370
    %v2372 = vpop.f32.mrb[0].mxu0
    %2373 = vmatprep.mubr.bf16.mxu0 0
    %2374 = vmatmul.mubr.bf16.gmra.mrb[0].mxu0 %v2298
    %v2375 = vpop.f32.mrb[0].mxu0
    %v2376 = vadd.f32 %v118, %v2375
    %v2377 = vpop.f32.mrb[0].mxu0
    %v2378 = vpop.f32.mrb[0].mxu0
    %v2379 = vadd.f32 %v118, %v2378
    %v2380 = vpop.f32.mrb[0].mxu0
    %2381 = vmatprep.mubr.bf16.mxu0 0
    %2382 = vmatmul.mubr.bf16.gmra.mrb[0].mxu0 %v2299
    %v2383 = vpop.f32.mrb[0].mxu0
    %v2384 = vadd.f32 %v118, %v2383
    %v2385 = vpop.f32.mrb[0].mxu0
    %v2386 = vpop.f32.mrb[0].mxu0
    %v2387 = vadd.f32 %v118, %v2386
    %v2388 = vpop.f32.mrb[0].mxu0
    %2389 = vmatprep.mubr.bf16.mxu0 0
    %2390 = vmatmul.mubr.bf16.gmra.mrb[0].mxu0 %v2300
    %v2391 = vpop.f32.mrb[0].mxu0
    %v2392 = vadd.f32 %v118, %v2391
    %v2393 = vpop.f32.mrb[0].mxu0
    %v2394 = vpop.f32.mrb[0].mxu0
    %v2395 = vadd.f32 %v118, %v2394
    %v2396 = vpop.f32.mrb[0].mxu0
    %2397 = vdwg.mxu0
    %v2398 = vpack.c.bf16 %v2339, %v2336
    %v2399 = vpack.c.bf16 %v2347, %v2344
    %v2400 = vpack.c.bf16 %v2355, %v2352
    %v2401 = vpack.c.bf16 %v2363, %v2360
    %v2402 = vpack.c.bf16 %v2371, %v2368
    %v2403 = vpack.c.bf16 %v2379, %v2376
    %v2404 = vpack.c.bf16 %v2387, %v2384
    %v2405 = vpack.c.bf16 %v2395, %v2392
    %v2406 = vtanh.bf16.pop %v2398
    %v2407 = vtanh.bf16.pop %v2399
    %v2408 = vtanh.bf16.pop %v2400
    %v2409 = vtanh.bf16.pop %v2401
    %v2410 = vtanh.bf16.pop %v2402
    %v2411 = vtanh.bf16.pop %v2403
    %v2412 = vtanh.bf16.pop %v2404
    %v2413 = vtanh.bf16.pop %v2405
    %v2414 = vmul.bf16 %v283, %v2406
    %v2415 = vmul.bf16 %v283, %v2407
    %v2416 = vmul.bf16 %v283, %v2408
    %v2417 = vmul.bf16 %v283, %v2409
    %v2418 = vmul.bf16 %v283, %v2410
    %v2419 = vmul.bf16 %v283, %v2411
    %v2420 = vmul.bf16 %v283, %v2412
    %v2421 = vmul.bf16 %v283, %v2413
    %v2422 = vmul.bf16 %v2414, 1051410091
    %v2423 = vmul.bf16 %v2415, 1051410091
    %v2424 = vmul.bf16 %v2416, 1051410091
    %v2425 = vmul.bf16 %v2417, 1051410091
    %v2426 = vmul.bf16 %v2418, 1051410091
    %v2427 = vmul.bf16 %v2419, 1051410091
    %v2428 = vmul.bf16 %v2420, 1051410091
    %v2429 = vmul.bf16 %v2421, 1051410091
    %v2430 = vunpack.c.l.bf16 %v2422
    %v2431 = vunpack.c.h.bf16 %v2422
    %v2432 = vunpack.c.l.bf16 %v2423
    %v2433 = vunpack.c.h.bf16 %v2423
    %v2434 = vunpack.c.l.bf16 %v2424
    %v2435 = vunpack.c.h.bf16 %v2424
    %v2436 = vunpack.c.l.bf16 %v2425
    %v2437 = vunpack.c.h.bf16 %v2425
    %v2438 = vunpack.c.l.bf16 %v2426
    %v2439 = vunpack.c.h.bf16 %v2426
    %v2440 = vunpack.c.l.bf16 %v2427
    %v2441 = vunpack.c.h.bf16 %v2427
    %v2442 = vunpack.c.l.bf16 %v2428
    %v2443 = vunpack.c.h.bf16 %v2428
    %v2444 = vunpack.c.l.bf16 %v2429
    %v2445 = vunpack.c.h.bf16 %v2429
    %v2446 = vadd.f32 %v2277, %v2430
    %v2447 = vadd.f32 %v2278, %v2431
    %v2448 = vadd.f32 %v2279, %v2432
    %v2449 = vadd.f32 %v2280, %v2433
    %v2450 = vadd.f32 %v2281, %v2434
    %v2451 = vadd.f32 %v2282, %v2435
    %v2452 = vadd.f32 %v2283, %v2436
    %v2453 = vadd.f32 %v2284, %v2437
    %v2454 = vadd.f32 %v2285, %v2438
    %v2455 = vadd.f32 %v2286, %v2439
    %v2456 = vadd.f32 %v2287, %v2440
    %v2457 = vadd.f32 %v2288, %v2441
    %v2458 = vadd.f32 %v2289, %v2442
    %v2459 = vadd.f32 %v2290, %v2443
    %v2460 = vadd.f32 %v2291, %v2444
    %v2461 = vadd.f32 %v2292, %v2445
    %v2462 = vadd.bf16 %v2293, %v2414
    %v2463 = vadd.bf16 %v2294, %v2415
    %v2464 = vadd.bf16 %v2295, %v2416
    %v2465 = vadd.bf16 %v2296, %v2417
    %v2466 = vadd.bf16 %v2297, %v2418
    %v2467 = vadd.bf16 %v2298, %v2419
    %v2468 = vadd.bf16 %v2299, %v2420
    %v2469 = vadd.bf16 %v2300, %v2421
    %2470 = vmatprep.subr.bf16.mxu0 0
    %2471 = vmatpush1.bf16.msra.mxu0 %v152
    %2472 = vmatprep.subr.bf16.mxu0 0
    %2473 = vmatpush1.bf16.msra.mxu0 %v153
    %2474 = vmatprep.subr.bf16.mxu0 0
    %2475 = vmatpush1.bf16.msra.mxu0 %v154
    %2476 = vmatprep.subr.bf16.mxu0 0
    %2477 = vmatpush1.bf16.msra.mxu0 %v155
    %2478 = vmatprep.subr.bf16.mxu0 0
    %2479 = vmatpush1.bf16.msra.mxu0 %v156
    %2480 = vmatprep.subr.bf16.mxu0 0
    %2481 = vmatpush1.bf16.msra.mxu0 %v157
    %2482 = vmatprep.subr.bf16.mxu0 0
    %2483 = vmatpush1.bf16.msra.mxu0 %v158
    %2484 = vmatprep.subr.bf16.mxu0 0
    %2485 = vmatpush1.bf16.msra.mxu0 %v159
    %2486 = vmatprep.subr.bf16.mxu0 0
    %2487 = vmatpush1.bf16.msra.mxu0 0
    %2488 = vmatprep.subr.bf16.mxu0 0
    %2489 = vmatpush1.bf16.msra.mxu0 0
    %2490 = vmatprep.subr.bf16.mxu0 0
    %2491 = vmatpush1.bf16.msra.mxu0 0
    %2492 = vmatprep.subr.bf16.mxu0 0
    %2493 = vmatpush1.bf16.msra.mxu0 0
    %2494 = vmatprep.subr.bf16.mxu0 0
    %2495 = vmatpush1.bf16.msra.mxu0 0
    %2496 = vmatprep.subr.bf16.mxu0 0
    %2497 = vmatpush1.bf16.msra.mxu0 0
    %2498 = vmatprep.subr.bf16.mxu0 0
    %2499 = vmatpush1.bf16.msra.mxu0 0
    %2500 = vmatprep.subr.bf16.mxu0 0
    %2501 = vmatpush1.bf16.msra.mxu0 0
    %2502 = vmatprep.mubr.bf16.mxu0 0
    %2503 = vmatmul.mubr.bf16.gmra.mrb[0].mxu0 %v2462
    %v2504 = vpop.f32.mrb[0].mxu0
    %v2505 = vadd.f32 %v118, %v2504
    %v2506 = vpop.f32.mrb[0].mxu0
    %v2507 = vpop.f32.mrb[0].mxu0
    %v2508 = vadd.f32 %v118, %v2507
    %v2509 = vpop.f32.mrb[0].mxu0
    %2510 = vmatprep.mubr.bf16.mxu0 0
    %2511 = vmatmul.mubr.bf16.gmra.mrb[0].mxu0 %v2463
    %v2512 = vpop.f32.mrb[0].mxu0
    %v2513 = vadd.f32 %v118, %v2512
    %v2514 = vpop.f32.mrb[0].mxu0
    %v2515 = vpop.f32.mrb[0].mxu0
    %v2516 = vadd.f32 %v118, %v2515
    %v2517 = vpop.f32.mrb[0].mxu0
    %2518 = vmatprep.mubr.bf16.mxu0 0
    %2519 = vmatmul.mubr.bf16.gmra.mrb[0].mxu0 %v2464
    %v2520 = vpop.f32.mrb[0].mxu0
    %v2521 = vadd.f32 %v118, %v2520
    %v2522 = vpop.f32.mrb[0].mxu0
    %v2523 = vpop.f32.mrb[0].mxu0
    %v2524 = vadd.f32 %v118, %v2523
    %v2525 = vpop.f32.mrb[0].mxu0
    %2526 = vmatprep.mubr.bf16.mxu0 0
    %2527 = vmatmul.mubr.bf16.gmra.mrb[0].mxu0 %v2465
    %v2528 = vpop.f32.mrb[0].mxu0
    %v2529 = vadd.f32 %v118, %v2528
    %v2530 = vpop.f32.mrb[0].mxu0
    %v2531 = vpop.f32.mrb[0].mxu0
    %v2532 = vadd.f32 %v118, %v2531
    %v2533 = vpop.f32.mrb[0].mxu0
    %2534 = vmatprep.mubr.bf16.mxu0 0
    %2535 = vmatmul.mubr.bf16.gmra.mrb[0].mxu0 %v2466
    %v2536 = vpop.f32.mrb[0].mxu0
    %v2537 = vadd.f32 %v118, %v2536
    %v2538 = vpop.f32.mrb[0].mxu0
    %v2539 = vpop.f32.mrb[0].mxu0
    %v2540 = vadd.f32 %v118, %v2539
    %v2541 = vpop.f32.mrb[0].mxu0
    %2542 = vmatprep.mubr.bf16.mxu0 0
    %2543 = vmatmul.mubr.bf16.gmra.mrb[0].mxu0 %v2467
    %v2544 = vpop.f32.mrb[0].mxu0
    %v2545 = vadd.f32 %v118, %v2544
    %v2546 = vpop.f32.mrb[0].mxu0
    %v2547 = vpop.f32.mrb[0].mxu0
    %v2548 = vadd.f32 %v118, %v2547
    %v2549 = vpop.f32.mrb[0].mxu0
    %2550 = vmatprep.mubr.bf16.mxu0 0
    %2551 = vmatmul.mubr.bf16.gmra.mrb[0].mxu0 %v2468
    %v2552 = vpop.f32.mrb[0].mxu0
    %v2553 = vadd.f32 %v118, %v2552
    %v2554 = vpop.f32.mrb[0].mxu0
    %v2555 = vpop.f32.mrb[0].mxu0
    %v2556 = vadd.f32 %v118, %v2555
    %v2557 = vpop.f32.mrb[0].mxu0
    %2558 = vmatprep.mubr.bf16.mxu0 0
    %2559 = vmatmul.mubr.bf16.gmra.mrb[0].mxu0 %v2469
    %v2560 = vpop.f32.mrb[0].mxu0
    %v2561 = vadd.f32 %v118, %v2560
    %v2562 = vpop.f32.mrb[0].mxu0
    %v2563 = vpop.f32.mrb[0].mxu0
    %v2564 = vadd.f32 %v118, %v2563
    %v2565 = vpop.f32.mrb[0].mxu0
    %2566 = vdwg.mxu0
    %v2567 = vpack.c.bf16 %v2508, %v2505
    %v2568 = vpack.c.bf16 %v2516, %v2513
    %v2569 = vpack.c.bf16 %v2524, %v2521
    %v2570 = vpack.c.bf16 %v2532, %v2529
    %v2571 = vpack.c.bf16 %v2540, %v2537
    %v2572 = vpack.c.bf16 %v2548, %v2545
    %v2573 = vpack.c.bf16 %v2556, %v2553
    %v2574 = vpack.c.bf16 %v2564, %v2561
    %v2575 = vtanh.bf16.pop %v2567
    %v2576 = vtanh.bf16.pop %v2568
    %v2577 = vtanh.bf16.pop %v2569
    %v2578 = vtanh.bf16.pop %v2570
    %v2579 = vtanh.bf16.pop %v2571
    %v2580 = vtanh.bf16.pop %v2572
    %v2581 = vtanh.bf16.pop %v2573
    %v2582 = vtanh.bf16.pop %v2574
    %v2583 = vmul.bf16 %v283, %v2575
    %v2584 = vmul.bf16 %v283, %v2576
    %v2585 = vmul.bf16 %v283, %v2577
    %v2586 = vmul.bf16 %v283, %v2578
    %v2587 = vmul.bf16 %v283, %v2579
    %v2588 = vmul.bf16 %v283, %v2580
    %v2589 = vmul.bf16 %v283, %v2581
    %v2590 = vmul.bf16 %v283, %v2582
    %v2591 = vmul.bf16 %v2583, 1059798827
    %v2592 = vmul.bf16 %v2584, 1059798827
    %v2593 = vmul.bf16 %v2585, 1059798827
    %v2594 = vmul.bf16 %v2586, 1059798827
    %v2595 = vmul.bf16 %v2587, 1059798827
    %v2596 = vmul.bf16 %v2588, 1059798827
    %v2597 = vmul.bf16 %v2589, 1059798827
    %v2598 = vmul.bf16 %v2590, 1059798827
    %v2599 = vunpack.c.l.bf16 %v2591
    %v2600 = vunpack.c.h.bf16 %v2591
    %v2601 = vunpack.c.l.bf16 %v2592
    %v2602 = vunpack.c.h.bf16 %v2592
    %v2603 = vunpack.c.l.bf16 %v2593
    %v2604 = vunpack.c.h.bf16 %v2593
    %v2605 = vunpack.c.l.bf16 %v2594
    %v2606 = vunpack.c.h.bf16 %v2594
    %v2607 = vunpack.c.l.bf16 %v2595
    %v2608 = vunpack.c.h.bf16 %v2595
    %v2609 = vunpack.c.l.bf16 %v2596
    %v2610 = vunpack.c.h.bf16 %v2596
    %v2611 = vunpack.c.l.bf16 %v2597
    %v2612 = vunpack.c.h.bf16 %v2597
    %v2613 = vunpack.c.l.bf16 %v2598
    %v2614 = vunpack.c.h.bf16 %v2598
    %v2615 = vadd.f32 %v2446, %v2599
    %v2616 = vadd.f32 %v2447, %v2600
    %v2617 = vadd.f32 %v2448, %v2601
    %v2618 = vadd.f32 %v2449, %v2602
    %v2619 = vadd.f32 %v2450, %v2603
    %v2620 = vadd.f32 %v2451, %v2604
    %v2621 = vadd.f32 %v2452, %v2605
    %v2622 = vadd.f32 %v2453, %v2606
    %v2623 = vadd.f32 %v2454, %v2607
    %v2624 = vadd.f32 %v2455, %v2608
    %v2625 = vadd.f32 %v2456, %v2609
    %v2626 = vadd.f32 %v2457, %v2610
    %v2627 = vadd.f32 %v2458, %v2611
    %v2628 = vadd.f32 %v2459, %v2612
    %v2629 = vadd.f32 %v2460, %v2613
    %v2630 = vadd.f32 %v2461, %v2614
    %v2631 = vadd.bf16 %v2293, %v2583
    %v2632 = vadd.bf16 %v2294, %v2584
    %v2633 = vadd.bf16 %v2295, %v2585
    %v2634 = vadd.bf16 %v2296, %v2586
    %v2635 = vadd.bf16 %v2297, %v2587
    %v2636 = vadd.bf16 %v2298, %v2588
    %v2637 = vadd.bf16 %v2299, %v2589
    %v2638 = vadd.bf16 %v2300, %v2590
    %2639 = vmatprep.subr.bf16.mxu0 0
    %2640 = vmatpush1.bf16.msra.mxu0 %v152
    %2641 = vmatprep.subr.bf16.mxu0 0
    %2642 = vmatpush1.bf16.msra.mxu0 %v153
    %2643 = vmatprep.subr.bf16.mxu0 0
    %2644 = vmatpush1.bf16.msra.mxu0 %v154
    %2645 = vmatprep.subr.bf16.mxu0 0
    %2646 = vmatpush1.bf16.msra.mxu0 %v155
    %2647 = vmatprep.subr.bf16.mxu0 0
    %2648 = vmatpush1.bf16.msra.mxu0 %v156
    %2649 = vmatprep.subr.bf16.mxu0 0
    %2650 = vmatpush1.bf16.msra.mxu0 %v157
    %2651 = vmatprep.subr.bf16.mxu0 0
    %2652 = vmatpush1.bf16.msra.mxu0 %v158
    %2653 = vmatprep.subr.bf16.mxu0 0
    %2654 = vmatpush1.bf16.msra.mxu0 %v159
    %2655 = vmatprep.subr.bf16.mxu0 0
    %2656 = vmatpush1.bf16.msra.mxu0 0
    %2657 = vmatprep.subr.bf16.mxu0 0
    %2658 = vmatpush1.bf16.msra.mxu0 0
    %2659 = vmatprep.subr.bf16.mxu0 0
    %2660 = vmatpush1.bf16.msra.mxu0 0
    %2661 = vmatprep.subr.bf16.mxu0 0
    %2662 = vmatpush1.bf16.msra.mxu0 0
    %2663 = vmatprep.subr.bf16.mxu0 0
    %2664 = vmatpush1.bf16.msra.mxu0 0
    %2665 = vmatprep.subr.bf16.mxu0 0
    %2666 = vmatpush1.bf16.msra.mxu0 0
    %2667 = vmatprep.subr.bf16.mxu0 0
    %2668 = vmatpush1.bf16.msra.mxu0 0
    %2669 = vmatprep.subr.bf16.mxu0 0
    %2670 = vmatpush1.bf16.msra.mxu0 0
    %2671 = vmatprep.mubr.bf16.mxu0 0
    %2672 = vmatmul.mubr.bf16.gmra.mrb[0].mxu0 %v2631
    %v2673 = vpop.f32.mrb[0].mxu0
    %v2674 = vadd.f32 %v118, %v2673
    %v2675 = vpop.f32.mrb[0].mxu0
    %v2676 = vpop.f32.mrb[0].mxu0
    %v2677 = vadd.f32 %v118, %v2676
    %v2678 = vpop.f32.mrb[0].mxu0
    %2679 = vmatprep.mubr.bf16.mxu0 0
    %2680 = vmatmul.mubr.bf16.gmra.mrb[0].mxu0 %v2632
    %v2681 = vpop.f32.mrb[0].mxu0
    %v2682 = vadd.f32 %v118, %v2681
    %v2683 = vpop.f32.mrb[0].mxu0
    %v2684 = vpop.f32.mrb[0].mxu0
    %v2685 = vadd.f32 %v118, %v2684
    %v2686 = vpop.f32.mrb[0].mxu0
    %2687 = vmatprep.mubr.bf16.mxu0 0
    %2688 = vmatmul.mubr.bf16.gmra.mrb[0].mxu0 %v2633
    %v2689 = vpop.f32.mrb[0].mxu0
    %v2690 = vadd.f32 %v118, %v2689
    %v2691 = vpop.f32.mrb[0].mxu0
    %v2692 = vpop.f32.mrb[0].mxu0
    %v2693 = vadd.f32 %v118, %v2692
    %v2694 = vpop.f32.mrb[0].mxu0
    %2695 = vmatprep.mubr.bf16.mxu0 0
    %2696 = vmatmul.mubr.bf16.gmra.mrb[0].mxu0 %v2634
    %v2697 = vpop.f32.mrb[0].mxu0
    %v2698 = vadd.f32 %v118, %v2697
    %v2699 = vpop.f32.mrb[0].mxu0
    %v2700 = vpop.f32.mrb[0].mxu0
    %v2701 = vadd.f32 %v118, %v2700
    %v2702 = vpop.f32.mrb[0].mxu0
    %2703 = vmatprep.mubr.bf16.mxu0 0
    %2704 = vmatmul.mubr.bf16.gmra.mrb[0].mxu0 %v2635
    %v2705 = vpop.f32.mrb[0].mxu0
    %v2706 = vadd.f32 %v118, %v2705
    %v2707 = vpop.f32.mrb[0].mxu0
    %v2708 = vpop.f32.mrb[0].mxu0
    %v2709 = vadd.f32 %v118, %v2708
    %v2710 = vpop.f32.mrb[0].mxu0
    %2711 = vmatprep.mubr.bf16.mxu0 0
    %2712 = vmatmul.mubr.bf16.gmra.mrb[0].mxu0 %v2636
    %v2713 = vpop.f32.mrb[0].mxu0
    %v2714 = vadd.f32 %v118, %v2713
    %v2715 = vpop.f32.mrb[0].mxu0
    %v2716 = vpop.f32.mrb[0].mxu0
    %v2717 = vadd.f32 %v118, %v2716
    %v2718 = vpop.f32.mrb[0].mxu0
    %2719 = vmatprep.mubr.bf16.mxu0 0
    %2720 = vmatmul.mubr.bf16.gmra.mrb[0].mxu0 %v2637
    %v2721 = vpop.f32.mrb[0].mxu0
    %v2722 = vadd.f32 %v118, %v2721
    %v2723 = vpop.f32.mrb[0].mxu0
    %v2724 = vpop.f32.mrb[0].mxu0
    %v2725 = vadd.f32 %v118, %v2724
    %v2726 = vpop.f32.mrb[0].mxu0
    %2727 = vmatprep.mubr.bf16.mxu0 0
    %2728 = vmatmul.mubr.bf16.gmra.mrb[0].mxu0 %v2638
    %v2729 = vpop.f32.mrb[0].mxu0
    %v2730 = vadd.f32 %v118, %v2729
    %v2731 = vpop.f32.mrb[0].mxu0
    %v2732 = vpop.f32.mrb[0].mxu0
    %v2733 = vadd.f32 %v118, %v2732
    %v2734 = vpop.f32.mrb[0].mxu0
    %2735 = vdwg.mxu0
    %v2736 = vpack.c.bf16 %v2677, %v2674
    %v2737 = vpack.c.bf16 %v2685, %v2682
    %v2738 = vpack.c.bf16 %v2693, %v2690
    %v2739 = vpack.c.bf16 %v2701, %v2698
    %v2740 = vpack.c.bf16 %v2709, %v2706
    %v2741 = vpack.c.bf16 %v2717, %v2714
    %v2742 = vpack.c.bf16 %v2725, %v2722
    %v2743 = vpack.c.bf16 %v2733, %v2730
    %v2744 = vtanh.bf16.pop %v2736
    %v2745 = vtanh.bf16.pop %v2737
    %v2746 = vtanh.bf16.pop %v2738
    %v2747 = vtanh.bf16.pop %v2739
    %v2748 = vtanh.bf16.pop %v2740
    %v2749 = vtanh.bf16.pop %v2741
    %v2750 = vtanh.bf16.pop %v2742
    %v2751 = vtanh.bf16.pop %v2743
    %v2752 = vmul.bf16 %v625, %v2744
    %v2753 = vmul.bf16 %v625, %v2745
    %v2754 = vmul.bf16 %v625, %v2746
    %v2755 = vmul.bf16 %v625, %v2747
    %v2756 = vmul.bf16 %v625, %v2748
    %v2757 = vmul.bf16 %v625, %v2749
    %v2758 = vmul.bf16 %v625, %v2750
    %v2759 = vmul.bf16 %v625, %v2751
    %v2760 = vmul.bf16 %v2752, 1051410091
    %v2761 = vmul.bf16 %v2753, 1051410091
    %v2762 = vmul.bf16 %v2754, 1051410091
    %v2763 = vmul.bf16 %v2755, 1051410091
    %v2764 = vmul.bf16 %v2756, 1051410091
    %v2765 = vmul.bf16 %v2757, 1051410091
    %v2766 = vmul.bf16 %v2758, 1051410091
    %v2767 = vmul.bf16 %v2759, 1051410091
    %v2768 = vunpack.c.l.bf16 %v2760
    %v2769 = vunpack.c.h.bf16 %v2760
    %v2770 = vunpack.c.l.bf16 %v2761
    %v2771 = vunpack.c.h.bf16 %v2761
    %v2772 = vunpack.c.l.bf16 %v2762
    %v2773 = vunpack.c.h.bf16 %v2762
    %v2774 = vunpack.c.l.bf16 %v2763
    %v2775 = vunpack.c.h.bf16 %v2763
    %v2776 = vunpack.c.l.bf16 %v2764
    %v2777 = vunpack.c.h.bf16 %v2764
    %v2778 = vunpack.c.l.bf16 %v2765
    %v2779 = vunpack.c.h.bf16 %v2765
    %v2780 = vunpack.c.l.bf16 %v2766
    %v2781 = vunpack.c.h.bf16 %v2766
    %v2782 = vunpack.c.l.bf16 %v2767
    %v2783 = vunpack.c.h.bf16 %v2767
    %v2784 = vadd.f32 %v2615, %v2768
    %v2785 = vadd.f32 %v2616, %v2769
    %v2786 = vadd.f32 %v2617, %v2770
    %v2787 = vadd.f32 %v2618, %v2771
    %v2788 = vadd.f32 %v2619, %v2772
    %v2789 = vadd.f32 %v2620, %v2773
    %v2790 = vadd.f32 %v2621, %v2774
    %v2791 = vadd.f32 %v2622, %v2775
    %v2792 = vadd.f32 %v2623, %v2776
    %v2793 = vadd.f32 %v2624, %v2777
    %v2794 = vadd.f32 %v2625, %v2778
    %v2795 = vadd.f32 %v2626, %v2779
    %v2796 = vadd.f32 %v2627, %v2780
    %v2797 = vadd.f32 %v2628, %v2781
    %v2798 = vadd.f32 %v2629, %v2782
    %v2799 = vadd.f32 %v2630, %v2783
    %v2800 = vadd.bf16 %v2293, %v2752
    %v2801 = vadd.bf16 %v2294, %v2753
    %v2802 = vadd.bf16 %v2295, %v2754
    %v2803 = vadd.bf16 %v2296, %v2755
    %v2804 = vadd.bf16 %v2297, %v2756
    %v2805 = vadd.bf16 %v2298, %v2757
    %v2806 = vadd.bf16 %v2299, %v2758
    %v2807 = vadd.bf16 %v2300, %v2759
    %2808 = vmatprep.subr.bf16.mxu0 0
    %2809 = vmatpush1.bf16.msra.mxu0 %v152
    %2810 = vmatprep.subr.bf16.mxu0 0
    %2811 = vmatpush1.bf16.msra.mxu0 %v153
    %2812 = vmatprep.subr.bf16.mxu0 0
    %2813 = vmatpush1.bf16.msra.mxu0 %v154
    %2814 = vmatprep.subr.bf16.mxu0 0
    %2815 = vmatpush1.bf16.msra.mxu0 %v155
    %2816 = vmatprep.subr.bf16.mxu0 0
    %2817 = vmatpush1.bf16.msra.mxu0 %v156
    %2818 = vmatprep.subr.bf16.mxu0 0
    %2819 = vmatpush1.bf16.msra.mxu0 %v157
    %2820 = vmatprep.subr.bf16.mxu0 0
    %2821 = vmatpush1.bf16.msra.mxu0 %v158
    %2822 = vmatprep.subr.bf16.mxu0 0
    %2823 = vmatpush1.bf16.msra.mxu0 %v159
    %2824 = vmatprep.subr.bf16.mxu0 0
    %2825 = vmatpush1.bf16.msra.mxu0 0
    %2826 = vmatprep.subr.bf16.mxu0 0
    %2827 = vmatpush1.bf16.msra.mxu0 0
    %2828 = vmatprep.subr.bf16.mxu0 0
    %2829 = vmatpush1.bf16.msra.mxu0 0
    %2830 = vmatprep.subr.bf16.mxu0 0
    %2831 = vmatpush1.bf16.msra.mxu0 0
    %2832 = vmatprep.subr.bf16.mxu0 0
    %2833 = vmatpush1.bf16.msra.mxu0 0
    %2834 = vmatprep.subr.bf16.mxu0 0
    %2835 = vmatpush1.bf16.msra.mxu0 0
    %2836 = vmatprep.subr.bf16.mxu0 0
    %2837 = vmatpush1.bf16.msra.mxu0 0
    %2838 = vmatprep.subr.bf16.mxu0 0
    %2839 = vmatpush1.bf16.msra.mxu0 0
    %2840 = vmatprep.mubr.bf16.mxu0 0
    %2841 = vmatmul.mubr.bf16.gmra.mrb[0].mxu0 %v2800
    %v2842 = vpop.f32.mrb[0].mxu0
    %v2843 = vadd.f32 %v118, %v2842
    %v2844 = vpop.f32.mrb[0].mxu0
    %v2845 = vpop.f32.mrb[0].mxu0
    %v2846 = vadd.f32 %v118, %v2845
    %v2847 = vpop.f32.mrb[0].mxu0
    %2848 = vmatprep.mubr.bf16.mxu0 0
    %2849 = vmatmul.mubr.bf16.gmra.mrb[0].mxu0 %v2801
    %v2850 = vpop.f32.mrb[0].mxu0
    %v2851 = vadd.f32 %v118, %v2850
    %v2852 = vpop.f32.mrb[0].mxu0
    %v2853 = vpop.f32.mrb[0].mxu0
    %v2854 = vadd.f32 %v118, %v2853
    %v2855 = vpop.f32.mrb[0].mxu0
    %2856 = vmatprep.mubr.bf16.mxu0 0
    %2857 = vmatmul.mubr.bf16.gmra.mrb[0].mxu0 %v2802
    %v2858 = vpop.f32.mrb[0].mxu0
    %v2859 = vadd.f32 %v118, %v2858
    %v2860 = vpop.f32.mrb[0].mxu0
    %v2861 = vpop.f32.mrb[0].mxu0
    %v2862 = vadd.f32 %v118, %v2861
    %v2863 = vpop.f32.mrb[0].mxu0
    %2864 = vmatprep.mubr.bf16.mxu0 0
    %2865 = vmatmul.mubr.bf16.gmra.mrb[0].mxu0 %v2803
    %v2866 = vpop.f32.mrb[0].mxu0
    %v2867 = vadd.f32 %v118, %v2866
    %v2868 = vpop.f32.mrb[0].mxu0
    %v2869 = vpop.f32.mrb[0].mxu0
    %v2870 = vadd.f32 %v118, %v2869
    %v2871 = vpop.f32.mrb[0].mxu0
    %2872 = vmatprep.mubr.bf16.mxu0 0
    %2873 = vmatmul.mubr.bf16.gmra.mrb[0].mxu0 %v2804
    %v2874 = vpop.f32.mrb[0].mxu0
    %v2875 = vadd.f32 %v118, %v2874
    %v2876 = vpop.f32.mrb[0].mxu0
    %v2877 = vpop.f32.mrb[0].mxu0
    %v2878 = vadd.f32 %v118, %v2877
    %v2879 = vpop.f32.mrb[0].mxu0
    %2880 = vmatprep.mubr.bf16.mxu0 0
    %2881 = vmatmul.mubr.bf16.gmra.mrb[0].mxu0 %v2805
    %v2882 = vpop.f32.mrb[0].mxu0
    %v2883 = vadd.f32 %v118, %v2882
    %v2884 = vpop.f32.mrb[0].mxu0
    %v2885 = vpop.f32.mrb[0].mxu0
    %v2886 = vadd.f32 %v118, %v2885
    %v2887 = vpop.f32.mrb[0].mxu0
    %2888 = vmatprep.mubr.bf16.mxu0 0
    %2889 = vmatmul.mubr.bf16.gmra.mrb[0].mxu0 %v2806
    %v2890 = vpop.f32.mrb[0].mxu0
    %v2891 = vadd.f32 %v118, %v2890
    %v2892 = vpop.f32.mrb[0].mxu0
    %v2893 = vpop.f32.mrb[0].mxu0
    %v2894 = vadd.f32 %v118, %v2893
    %v2895 = vpop.f32.mrb[0].mxu0
    %2896 = vmatprep.mubr.bf16.mxu0 0
    %2897 = vmatmul.mubr.bf16.gmra.mrb[0].mxu0 %v2807
    %v2898 = vpop.f32.mrb[0].mxu0
    %v2899 = vadd.f32 %v118, %v2898
    %v2900 = vpop.f32.mrb[0].mxu0
    %v2901 = vpop.f32.mrb[0].mxu0
    %v2902 = vadd.f32 %v118, %v2901
    %v2903 = vpop.f32.mrb[0].mxu0
    %2904 = vdwg.mxu0
    %v2905 = vpack.c.bf16 %v2846, %v2843
    %v2906 = vpack.c.bf16 %v2854, %v2851
    %v2907 = vpack.c.bf16 %v2862, %v2859
    %v2908 = vpack.c.bf16 %v2870, %v2867
    %v2909 = vpack.c.bf16 %v2878, %v2875
    %v2910 = vpack.c.bf16 %v2886, %v2883
    %v2911 = vpack.c.bf16 %v2894, %v2891
    %v2912 = vpack.c.bf16 %v2902, %v2899
    %v2913 = vtanh.bf16.pop %v2905
    %v2914 = vtanh.bf16.pop %v2906
    %v2915 = vtanh.bf16.pop %v2907
    %v2916 = vtanh.bf16.pop %v2908
    %v2917 = vtanh.bf16.pop %v2909
    %v2918 = vtanh.bf16.pop %v2910
    %v2919 = vtanh.bf16.pop %v2911
    %v2920 = vtanh.bf16.pop %v2912
    %v2921 = vunpack.c.l.bf16 %v2913
    %v2922 = vunpack.c.h.bf16 %v2913
    %v2923 = vunpack.c.l.bf16 %v2914
    %v2924 = vunpack.c.h.bf16 %v2914
    %v2925 = vunpack.c.l.bf16 %v2915
    %v2926 = vunpack.c.h.bf16 %v2915
    %v2927 = vunpack.c.l.bf16 %v2916
    %v2928 = vunpack.c.h.bf16 %v2916
    %v2929 = vunpack.c.l.bf16 %v2917
    %v2930 = vunpack.c.h.bf16 %v2917
    %v2931 = vunpack.c.l.bf16 %v2918
    %v2932 = vunpack.c.h.bf16 %v2918
    %v2933 = vunpack.c.l.bf16 %v2919
    %v2934 = vunpack.c.h.bf16 %v2919
    %v2935 = vunpack.c.l.bf16 %v2920
    %v2936 = vunpack.c.h.bf16 %v2920
    %v2937 = vmul.f32 %v812, %v2921
    %v2938 = vmul.f32 %v812, %v2922
    %v2939 = vmul.f32 %v812, %v2923
    %v2940 = vmul.f32 %v812, %v2924
    %v2941 = vmul.f32 %v812, %v2925
    %v2942 = vmul.f32 %v812, %v2926
    %v2943 = vmul.f32 %v812, %v2927
    %v2944 = vmul.f32 %v812, %v2928
    %v2945 = vmul.f32 %v812, %v2929
    %v2946 = vmul.f32 %v812, %v2930
    %v2947 = vmul.f32 %v812, %v2931
    %v2948 = vmul.f32 %v812, %v2932
    %v2949 = vmul.f32 %v812, %v2933
    %v2950 = vmul.f32 %v812, %v2934
    %v2951 = vmul.f32 %v812, %v2935
    %v2952 = vmul.f32 %v812, %v2936
    %v2953 = vadd.f32 %v2784, %v2937
    %v2954 = vadd.f32 %v2785, %v2938
    %v2955 = vadd.f32 %v2786, %v2939
    %v2956 = vadd.f32 %v2787, %v2940
    %v2957 = vadd.f32 %v2788, %v2941
    %v2958 = vadd.f32 %v2789, %v2942
    %v2959 = vadd.f32 %v2790, %v2943
    %v2960 = vadd.f32 %v2791, %v2944
    %v2961 = vadd.f32 %v2792, %v2945
    %v2962 = vadd.f32 %v2793, %v2946
    %v2963 = vadd.f32 %v2794, %v2947
    %v2964 = vadd.f32 %v2795, %v2948
    %v2965 = vadd.f32 %v2796, %v2949
    %v2966 = vadd.f32 %v2797, %v2950
    %v2967 = vadd.f32 %v2798, %v2951
    %v2968 = vadd.f32 %v2799, %v2952
    %2969 = vst [vmem:[#allocation8 + $0x180] sm:$0xff] %v2953
    %2970 = vst [vmem:[#allocation8 + $0x188] sm:$0xff] %v2954
    %2971 = vst [vmem:[#allocation8 + $0x190] sm:$0xff] %v2955
    %2972 = vst [vmem:[#allocation8 + $0x198] sm:$0xff] %v2956
    %2973 = vst [vmem:[#allocation8 + $0x1a0] sm:$0xff] %v2957
    %2974 = vst [vmem:[#allocation8 + $0x1a8] sm:$0xff] %v2958
    %2975 = vst [vmem:[#allocation8 + $0x1b0] sm:$0xff] %v2959
    %2976 = vst [vmem:[#allocation8 + $0x1b8] sm:$0xff] %v2960
    %2977 = vst [vmem:[#allocation8 + $0x1c0] sm:$0xff] %v2961
    %2978 = vst [vmem:[#allocation8 + $0x1c8] sm:$0xff] %v2962
    %2979 = vst [vmem:[#allocation8 + $0x1d0] sm:$0xff] %v2963
    %2980 = vst [vmem:[#allocation8 + $0x1d8] sm:$0xff] %v2964
    %2981 = vst [vmem:[#allocation8 + $0x1e0] sm:$0xff] %v2965
    %2982 = vst [vmem:[#allocation8 + $0x1e8] sm:$0xff] %v2966
    %2983 = vst [vmem:[#allocation8 + $0x1f0] sm:$0xff] %v2967
    %2984 = vst [vmem:[#allocation8 + $0x1f8] sm:$0xff] %v2968
    // Predicated region
    $region26: #{tpu_custom_call.1} parent=1 // pred_check
      _
    $region27: #{tpu_custom_call.1} parent=1 // pred_check_branch
      %2986 = sbr.rel (0) target = $region29
    $region28: #{tpu_custom_call.1} parent=1 // pred_region
      %s2988 = ssub.s32 8192, 8192
      %2989 = vsyncadd [#allocation5], %s2988
      %s2990 = sshll.u32 [#allocation8], 4
      %s2991 = int_to_ptr.vmem [resolvable:$true] %s2990
      %2996 = dma.vmem_to_hbm [thread:$0]  %s2991, 8192, %s4, [#allocation5], 128, 128, 8
    $region29: #{tpu_custom_call.1} parent=1 // pred_fallthru
      _
    // Predicated region
    $region30: #{tpu_custom_call.1} parent=1 // pred_check
      _
    $region31: #{tpu_custom_call.1} parent=1 // pred_check_branch
      %2998 = sbr.rel (0) target = $region33
    $region32: #{tpu_custom_call.1} parent=1 // pred_region
      %2999 = dma.done [#allocation5], 8192
    $region33: #{tpu_custom_call.1} parent=1 // pred_fallthru
      _
    %3000 = vsyncpa [#allocation4], 1
    %3001 = vsyncpa [#allocation7], 1
    %3002 = vsyncpa [#allocation5], 1

</llo_original>
